<compile_context>
chip_gen: v7x
topology: tpu7x:2x2x1
jax: 0.10.0
libtpu: 0.0.40
codegen_flags: <defaults>
</compile_context>

<pallas_src>
import functools

import jax
import jax.numpy as jnp
import numpy as np
from jax.experimental import pallas as pl
from jax.experimental.pallas import tpu as pltpu


def _round_up(x, m):
    return (x + m - 1) // m * m


def _conv_bn_act_kernel(x_ref, w_ref, shift_ref, o_ref, *,
                        K, stride, tile_h, Wo, act):
    """One (batch, output-row-tile) grid step.

    x_ref:     (Hp, Wp, Cin)        bf16, whole padded image (resident per batch)
    w_ref:     (K*K, Cin, Cout_p)   bf16, BN-scale folded conv weight
    shift_ref: (1, Cout_p)          f32,  fused BN shift
    o_ref:     (tile_h, Wo, Cout_p) output tile (lane-dense Cout_p)
    """
    i = pl.program_id(1)
    row0 = i * (tile_h * stride)

    # Implicit im2col: accumulate K*K shifted matmuls into an f32 accumulator.
    acc = None
    for kh in range(K):
        for kw in range(K):
            if stride == 1:
                xs = x_ref[pl.ds(row0 + kh, tile_h), pl.ds(kw, Wo), :]
            else:
                xs = x_ref[pl.ds(row0 + kh, tile_h, stride),
                           pl.ds(kw, Wo, stride), :]
            xs = xs.reshape(tile_h * Wo, xs.shape[-1])            # (M, Cin)
            part = jnp.dot(xs, w_ref[kh * K + kw],                # (Cin, Cout_p)
                           preferred_element_type=jnp.float32)
            acc = part if acc is None else acc + part

    # f32 epilogue (BN shift + activation), cast only at the final store.
    y = acc + shift_ref[...]
    if act == "silu":
        y = y * jax.nn.sigmoid(y)
    elif act == "relu":
        y = jnp.maximum(y, 0.0)
    elif act == "lrelu":
        y = jnp.where(y > 0, y, 0.1 * y)
    else:
        raise ValueError("Unsupported act type: {}".format(act))
    o_ref[...] = y.reshape(tile_h, Wo, -1).astype(o_ref.dtype)


def base_conv_forward(x_nchw, conv_w, gamma, beta, run_mean, run_var,
                      *, stride=1, eps=1e-5, act="silu"):
    """BaseConv.forward: act(BN(Conv2d(x))); BN eval mode, no conv bias."""
    N, Cin, H, W = x_nchw.shape
    Cout, Cin_w, K, K2 = conv_w.shape
    assert Cin == Cin_w and K == K2, "grouped conv (groups>1) not supported"
    pad = (K - 1) // 2
    Ho = (H + 2 * pad - K) // stride + 1
    Wo = (W + 2 * pad - K) // stride + 1

    # Row tiling: aim for a few hundred matmul rows per grid step.
    tile_h = max(1, min(Ho, 512 // max(1, Wo)))
    n_row_tiles = pl.cdiv(Ho, tile_h)
    Ho_p = n_row_tiles * tile_h                     # padded output rows

    # Lane-dense output channels.
    Cout_p = _round_up(Cout, 128)

    # --- glue: NCHW -> NHWC, spatial zero-pad (rows padded up so the last
    # ragged row tile reads only in-bounds zeros), cast to bf16 ---------------
    x = jnp.transpose(x_nchw, (0, 2, 3, 1))                       # NHWC
    Hp = max((Ho_p - 1) * stride + K, H + pad)
    Wp = W + 2 * pad
    xp = jnp.pad(x, ((0, 0), (pad, Hp - H - pad), (pad, pad), (0, 0)))
    xp = xp.astype(jnp.bfloat16)

    # --- fuse BatchNorm (eval) into the weight (scale) and a shift ----------
    inv_std = gamma / jnp.sqrt(run_var + eps)                     # (Cout,)
    shift = (beta - run_mean * inv_std).astype(jnp.float32)       # (Cout,)
    # (Cout,Cin,K,K) -> (K,K,Cin,Cout) with BN scale folded into Cout columns.
    w = jnp.transpose(conv_w, (2, 3, 1, 0)) * inv_std             # (K,K,Cin,Cout)
    w = w.reshape(K * K, Cin, Cout)
    w = jnp.pad(w, ((0, 0), (0, 0), (0, Cout_p - Cout))).astype(jnp.bfloat16)
    shift = jnp.pad(shift, (0, Cout_p - Cout)).reshape(1, Cout_p)

    out_dtype = x_nchw.dtype

    # --- VMEM budget -> explicit (conservative) vmem limit -------------------
    in_block = Hp * Wp * Cin * 2                                  # bf16
    out_block = tile_h * Wo * Cout_p * jnp.dtype(out_dtype).itemsize
    w_bytes = K * K * Cin * Cout_p * 2 + Cout_p * 4
    need = 2 * in_block + 2 * out_block + 2 * w_bytes + (1 << 20)
    vmem_limit = int(min(max(2 * need, 32 * 1024 * 1024), 48 * 1024 * 1024))

    kernel = functools.partial(_conv_bn_act_kernel, K=K, stride=stride,
                               tile_h=tile_h, Wo=Wo, act=act)

    out = pl.pallas_call(
        kernel,
        out_shape=jax.ShapeDtypeStruct((N, Ho_p, Wo, Cout_p), out_dtype),
        grid_spec=pltpu.PrefetchScalarGridSpec(
            num_scalar_prefetch=0,
            grid=(N, n_row_tiles),
            in_specs=[
                # Whole padded image, resident across the row-tile axis
                # (re-fetched only when the batch index changes).
                pl.BlockSpec((None, Hp, Wp, Cin), lambda n, i: (n, 0, 0, 0)),
                pl.BlockSpec((K * K, Cin, Cout_p), lambda n, i: (0, 0, 0)),
                pl.BlockSpec((1, Cout_p), lambda n, i: (0, 0)),
            ],
            out_specs=pl.BlockSpec((None, tile_h, Wo, Cout_p),
                                   lambda n, i: (n, i, 0, 0)),
        ),
        compiler_params=pltpu.CompilerParams(
            dimension_semantics=("parallel", "parallel"),
            vmem_limit_bytes=vmem_limit),
    )(xp, w, shift)

    out = out[:, :Ho, :, :Cout]                                   # drop padding
    return jnp.transpose(out, (0, 3, 1, 2))                       # back to NCHW


def _reference_forward(x_nchw, conv_w, gamma, beta, run_mean, run_var,
                       *, stride=1, eps=1e-5):
    pad = (conv_w.shape[-1] - 1) // 2
    y = jax.lax.conv_general_dilated(
        x_nchw, conv_w, window_strides=(stride, stride),
        padding=[(pad, pad), (pad, pad)],
        dimension_numbers=("NCHW", "OIHW", "NCHW"))
    g = gamma.reshape(1, -1, 1, 1)
    b = beta.reshape(1, -1, 1, 1)
    m = run_mean.reshape(1, -1, 1, 1)
    v = run_var.reshape(1, -1, 1, 1)
    y = (y - m) / jnp.sqrt(v + eps) * g + b
    return y * jax.nn.sigmoid(y)


if __name__ == "__main__":
    # BaseConv(in_channels=4, out_channels=8, ksize=3, stride=1, act='silu')
    N, Cin, H, W = 2, 4, 16, 16
    Cout, K, stride = 8, 3, 1

    key = jax.random.PRNGKey(0)
    k_x, k_w, k_g, k_b, k_m, k_v = jax.random.split(key, 6)

    x = jax.random.normal(k_x, (N, Cin, H, W), dtype=jnp.float32)
    conv_w = 0.1 * jax.random.normal(k_w, (Cout, Cin, K, K), dtype=jnp.float32)
    gamma = 1.0 + 0.1 * jax.random.normal(k_g, (Cout,), dtype=jnp.float32)
    beta = 0.1 * jax.random.normal(k_b, (Cout,), dtype=jnp.float32)
    run_mean = 0.05 * jax.random.normal(k_m, (Cout,), dtype=jnp.float32)
    run_var = 1.0 + 0.1 * jax.nn.softplus(
        jax.random.normal(k_v, (Cout,), dtype=jnp.float32))

    fwd = jax.jit(functools.partial(base_conv_forward, stride=stride))
    out = jax.block_until_ready(fwd(x, conv_w, gamma, beta, run_mean, run_var))

    ref = _reference_forward(x, conv_w, gamma, beta, run_mean, run_var,
                             stride=stride)
    # bf16 MXU operands -> loosened tolerance vs the f32 reference.
    np.testing.assert_allclose(np.asarray(out), np.asarray(ref),
                               rtol=2e-2, atol=2e-2)
    print("KERNEL_OK")
</pallas_src>

<mosaic_0001>
module attributes {stable_mosaic.version = 11 : i64} {
  func.func @_conv_bn_act_kernel(%arg0: i32, %arg1: i32, %arg2: memref<1x18x18x4xbf16, #tpu.memory_space<vmem>>, %arg3: memref<9x4x128xbf16, #tpu.memory_space<vmem>>, %arg4: memref<1x128xf32, #tpu.memory_space<vmem>>, %arg5: memref<1x16x16x128xf32, #tpu.memory_space<vmem>>) attributes {dimension_semantics = [#tpu.dimension_semantics<parallel>, #tpu.dimension_semantics<parallel>], iteration_bounds = array<i64: 2, 1>, scalar_prefetch = 0 : i64, scratch_operands = 0 : i64, tpu.core_type = #tpu.core_type<tc>, window_params = [{transform_indices = @transform_0, window_bounds = array<i64: 1, 18, 18, 4>}, {pipeline_mode = #tpu.pipeline_mode<synchronous>, transform_indices = @transform_1, window_bounds = array<i64: 9, 4, 128>}, {pipeline_mode = #tpu.pipeline_mode<synchronous>, transform_indices = @transform_2, window_bounds = array<i64: 1, 128>}, {transform_indices = @transform_3, window_bounds = array<i64: 1, 16, 16, 128>}]} {
    %c16_i32 = arith.constant 16 : i32
    %0 = arith.muli %arg1, %c16_i32 : i32
    %c0_i32 = arith.constant 0 : i32
    %1 = arith.addi %0, %c0_i32 : i32
    %c0 = arith.constant 0 : index
    %2 = arith.index_cast %1 : i32 to index
    %c0_0 = arith.constant 0 : index
    %c0_1 = arith.constant 0 : index
    %3 = vector.load %arg2[%c0, %2, %c0_0, %c0_1] : memref<1x18x18x4xbf16, #tpu.memory_space<vmem>>, vector<1x16x16x4xbf16>
    %4 = vector.shape_cast %3 : vector<1x16x16x4xbf16> to vector<16x16x4xbf16>
    %5 = vector.shape_cast %4 : vector<16x16x4xbf16> to vector<256x4xbf16>
    %c0_2 = arith.constant 0 : index
    %c0_3 = arith.constant 0 : index
    %c0_4 = arith.constant 0 : index
    %6 = vector.load %arg3[%c0_2, %c0_3, %c0_4] : memref<9x4x128xbf16, #tpu.memory_space<vmem>>, vector<1x4x128xbf16>
    %7 = vector.shape_cast %6 : vector<1x4x128xbf16> to vector<4x128xbf16>
    %cst = arith.constant dense<0.000000e+00> : vector<256x128xf32>
    %8 = tpu.matmul %5, %7, %cst {dimension_numbers = #tpu.dot_dimension_numbers<[1], [0], [0], [1], [0, 0, 1, 1], [], []>} : vector<256x4xbf16>, vector<4x128xbf16>, vector<256x128xf32> -> vector<256x128xf32>
    %c0_i32_5 = arith.constant 0 : i32
    %9 = arith.addi %0, %c0_i32_5 : i32
    %c0_6 = arith.constant 0 : index
    %10 = arith.index_cast %9 : i32 to index
    %c1 = arith.constant 1 : index
    %c0_7 = arith.constant 0 : index
    %11 = vector.load %arg2[%c0_6, %10, %c1, %c0_7] : memref<1x18x18x4xbf16, #tpu.memory_space<vmem>>, vector<1x16x16x4xbf16>
    %12 = vector.shape_cast %11 : vector<1x16x16x4xbf16> to vector<16x16x4xbf16>
    %13 = vector.shape_cast %12 : vector<16x16x4xbf16> to vector<256x4xbf16>
    %c1_8 = arith.constant 1 : index
    %c0_9 = arith.constant 0 : index
    %c0_10 = arith.constant 0 : index
    %14 = vector.load %arg3[%c1_8, %c0_9, %c0_10] : memref<9x4x128xbf16, #tpu.memory_space<vmem>>, vector<1x4x128xbf16>
    %15 = vector.shape_cast %14 : vector<1x4x128xbf16> to vector<4x128xbf16>
    %cst_11 = arith.constant dense<0.000000e+00> : vector<256x128xf32>
    %16 = tpu.matmul %13, %15, %cst_11 {dimension_numbers = #tpu.dot_dimension_numbers<[1], [0], [0], [1], [0, 0, 1, 1], [], []>} : vector<256x4xbf16>, vector<4x128xbf16>, vector<256x128xf32> -> vector<256x128xf32>
    %17 = arith.addf %8, %16 : vector<256x128xf32>
    %c0_i32_12 = arith.constant 0 : i32
    %18 = arith.addi %0, %c0_i32_12 : i32
    %c0_13 = arith.constant 0 : index
    %19 = arith.index_cast %18 : i32 to index
    %c2 = arith.constant 2 : index
    %c0_14 = arith.constant 0 : index
    %20 = vector.load %arg2[%c0_13, %19, %c2, %c0_14] : memref<1x18x18x4xbf16, #tpu.memory_space<vmem>>, vector<1x16x16x4xbf16>
    %21 = vector.shape_cast %20 : vector<1x16x16x4xbf16> to vector<16x16x4xbf16>
    %22 = vector.shape_cast %21 : vector<16x16x4xbf16> to vector<256x4xbf16>
    %c2_15 = arith.constant 2 : index
    %c0_16 = arith.constant 0 : index
    %c0_17 = arith.constant 0 : index
    %23 = vector.load %arg3[%c2_15, %c0_16, %c0_17] : memref<9x4x128xbf16, #tpu.memory_space<vmem>>, vector<1x4x128xbf16>
    %24 = vector.shape_cast %23 : vector<1x4x128xbf16> to vector<4x128xbf16>
    %cst_18 = arith.constant dense<0.000000e+00> : vector<256x128xf32>
    %25 = tpu.matmul %22, %24, %cst_18 {dimension_numbers = #tpu.dot_dimension_numbers<[1], [0], [0], [1], [0, 0, 1, 1], [], []>} : vector<256x4xbf16>, vector<4x128xbf16>, vector<256x128xf32> -> vector<256x128xf32>
    %26 = arith.addf %17, %25 : vector<256x128xf32>
    %c1_i32 = arith.constant 1 : i32
    %27 = arith.addi %0, %c1_i32 : i32
    %c0_19 = arith.constant 0 : index
    %28 = arith.index_cast %27 : i32 to index
    %c0_20 = arith.constant 0 : index
    %c0_21 = arith.constant 0 : index
    %29 = vector.load %arg2[%c0_19, %28, %c0_20, %c0_21] : memref<1x18x18x4xbf16, #tpu.memory_space<vmem>>, vector<1x16x16x4xbf16>
    %30 = vector.shape_cast %29 : vector<1x16x16x4xbf16> to vector<16x16x4xbf16>
    %31 = vector.shape_cast %30 : vector<16x16x4xbf16> to vector<256x4xbf16>
    %c3 = arith.constant 3 : index
    %c0_22 = arith.constant 0 : index
    %c0_23 = arith.constant 0 : index
    %32 = vector.load %arg3[%c3, %c0_22, %c0_23] : memref<9x4x128xbf16, #tpu.memory_space<vmem>>, vector<1x4x128xbf16>
    %33 = vector.shape_cast %32 : vector<1x4x128xbf16> to vector<4x128xbf16>
    %cst_24 = arith.constant dense<0.000000e+00> : vector<256x128xf32>
    %34 = tpu.matmul %31, %33, %cst_24 {dimension_numbers = #tpu.dot_dimension_numbers<[1], [0], [0], [1], [0, 0, 1, 1], [], []>} : vector<256x4xbf16>, vector<4x128xbf16>, vector<256x128xf32> -> vector<256x128xf32>
    %35 = arith.addf %26, %34 : vector<256x128xf32>
    %c1_i32_25 = arith.constant 1 : i32
    %36 = arith.addi %0, %c1_i32_25 : i32
    %c0_26 = arith.constant 0 : index
    %37 = arith.index_cast %36 : i32 to index
    %c1_27 = arith.constant 1 : index
    %c0_28 = arith.constant 0 : index
    %38 = vector.load %arg2[%c0_26, %37, %c1_27, %c0_28] : memref<1x18x18x4xbf16, #tpu.memory_space<vmem>>, vector<1x16x16x4xbf16>
    %39 = vector.shape_cast %38 : vector<1x16x16x4xbf16> to vector<16x16x4xbf16>
    %40 = vector.shape_cast %39 : vector<16x16x4xbf16> to vector<256x4xbf16>
    %c4 = arith.constant 4 : index
    %c0_29 = arith.constant 0 : index
    %c0_30 = arith.constant 0 : index
    %41 = vector.load %arg3[%c4, %c0_29, %c0_30] : memref<9x4x128xbf16, #tpu.memory_space<vmem>>, vector<1x4x128xbf16>
    %42 = vector.shape_cast %41 : vector<1x4x128xbf16> to vector<4x128xbf16>
    %cst_31 = arith.constant dense<0.000000e+00> : vector<256x128xf32>
    %43 = tpu.matmul %40, %42, %cst_31 {dimension_numbers = #tpu.dot_dimension_numbers<[1], [0], [0], [1], [0, 0, 1, 1], [], []>} : vector<256x4xbf16>, vector<4x128xbf16>, vector<256x128xf32> -> vector<256x128xf32>
    %44 = arith.addf %35, %43 : vector<256x128xf32>
    %c1_i32_32 = arith.constant 1 : i32
    %45 = arith.addi %0, %c1_i32_32 : i32
    %c0_33 = arith.constant 0 : index
    %46 = arith.index_cast %45 : i32 to index
    %c2_34 = arith.constant 2 : index
    %c0_35 = arith.constant 0 : index
    %47 = vector.load %arg2[%c0_33, %46, %c2_34, %c0_35] : memref<1x18x18x4xbf16, #tpu.memory_space<vmem>>, vector<1x16x16x4xbf16>
    %48 = vector.shape_cast %47 : vector<1x16x16x4xbf16> to vector<16x16x4xbf16>
    %49 = vector.shape_cast %48 : vector<16x16x4xbf16> to vector<256x4xbf16>
    %c5 = arith.constant 5 : index
    %c0_36 = arith.constant 0 : index
    %c0_37 = arith.constant 0 : index
    %50 = vector.load %arg3[%c5, %c0_36, %c0_37] : memref<9x4x128xbf16, #tpu.memory_space<vmem>>, vector<1x4x128xbf16>
    %51 = vector.shape_cast %50 : vector<1x4x128xbf16> to vector<4x128xbf16>
    %cst_38 = arith.constant dense<0.000000e+00> : vector<256x128xf32>
    %52 = tpu.matmul %49, %51, %cst_38 {dimension_numbers = #tpu.dot_dimension_numbers<[1], [0], [0], [1], [0, 0, 1, 1], [], []>} : vector<256x4xbf16>, vector<4x128xbf16>, vector<256x128xf32> -> vector<256x128xf32>
    %53 = arith.addf %44, %52 : vector<256x128xf32>
    %c2_i32 = arith.constant 2 : i32
    %54 = arith.addi %0, %c2_i32 : i32
    %c0_39 = arith.constant 0 : index
    %55 = arith.index_cast %54 : i32 to index
    %c0_40 = arith.constant 0 : index
    %c0_41 = arith.constant 0 : index
    %56 = vector.load %arg2[%c0_39, %55, %c0_40, %c0_41] : memref<1x18x18x4xbf16, #tpu.memory_space<vmem>>, vector<1x16x16x4xbf16>
    %57 = vector.shape_cast %56 : vector<1x16x16x4xbf16> to vector<16x16x4xbf16>
    %58 = vector.shape_cast %57 : vector<16x16x4xbf16> to vector<256x4xbf16>
    %c6 = arith.constant 6 : index
    %c0_42 = arith.constant 0 : index
    %c0_43 = arith.constant 0 : index
    %59 = vector.load %arg3[%c6, %c0_42, %c0_43] : memref<9x4x128xbf16, #tpu.memory_space<vmem>>, vector<1x4x128xbf16>
    %60 = vector.shape_cast %59 : vector<1x4x128xbf16> to vector<4x128xbf16>
    %cst_44 = arith.constant dense<0.000000e+00> : vector<256x128xf32>
    %61 = tpu.matmul %58, %60, %cst_44 {dimension_numbers = #tpu.dot_dimension_numbers<[1], [0], [0], [1], [0, 0, 1, 1], [], []>} : vector<256x4xbf16>, vector<4x128xbf16>, vector<256x128xf32> -> vector<256x128xf32>
    %62 = arith.addf %53, %61 : vector<256x128xf32>
    %c2_i32_45 = arith.constant 2 : i32
    %63 = arith.addi %0, %c2_i32_45 : i32
    %c0_46 = arith.constant 0 : index
    %64 = arith.index_cast %63 : i32 to index
    %c1_47 = arith.constant 1 : index
    %c0_48 = arith.constant 0 : index
    %65 = vector.load %arg2[%c0_46, %64, %c1_47, %c0_48] : memref<1x18x18x4xbf16, #tpu.memory_space<vmem>>, vector<1x16x16x4xbf16>
    %66 = vector.shape_cast %65 : vector<1x16x16x4xbf16> to vector<16x16x4xbf16>
    %67 = vector.shape_cast %66 : vector<16x16x4xbf16> to vector<256x4xbf16>
    %c7 = arith.constant 7 : index
    %c0_49 = arith.constant 0 : index
    %c0_50 = arith.constant 0 : index
    %68 = vector.load %arg3[%c7, %c0_49, %c0_50] : memref<9x4x128xbf16, #tpu.memory_space<vmem>>, vector<1x4x128xbf16>
    %69 = vector.shape_cast %68 : vector<1x4x128xbf16> to vector<4x128xbf16>
    %cst_51 = arith.constant dense<0.000000e+00> : vector<256x128xf32>
    %70 = tpu.matmul %67, %69, %cst_51 {dimension_numbers = #tpu.dot_dimension_numbers<[1], [0], [0], [1], [0, 0, 1, 1], [], []>} : vector<256x4xbf16>, vector<4x128xbf16>, vector<256x128xf32> -> vector<256x128xf32>
    %71 = arith.addf %62, %70 : vector<256x128xf32>
    %c2_i32_52 = arith.constant 2 : i32
    %72 = arith.addi %0, %c2_i32_52 : i32
    %c0_53 = arith.constant 0 : index
    %73 = arith.index_cast %72 : i32 to index
    %c2_54 = arith.constant 2 : index
    %c0_55 = arith.constant 0 : index
    %74 = vector.load %arg2[%c0_53, %73, %c2_54, %c0_55] : memref<1x18x18x4xbf16, #tpu.memory_space<vmem>>, vector<1x16x16x4xbf16>
    %75 = vector.shape_cast %74 : vector<1x16x16x4xbf16> to vector<16x16x4xbf16>
    %76 = vector.shape_cast %75 : vector<16x16x4xbf16> to vector<256x4xbf16>
    %c8 = arith.constant 8 : index
    %c0_56 = arith.constant 0 : index
    %c0_57 = arith.constant 0 : index
    %77 = vector.load %arg3[%c8, %c0_56, %c0_57] : memref<9x4x128xbf16, #tpu.memory_space<vmem>>, vector<1x4x128xbf16>
    %78 = vector.shape_cast %77 : vector<1x4x128xbf16> to vector<4x128xbf16>
    %cst_58 = arith.constant dense<0.000000e+00> : vector<256x128xf32>
    %79 = tpu.matmul %76, %78, %cst_58 {dimension_numbers = #tpu.dot_dimension_numbers<[1], [0], [0], [1], [0, 0, 1, 1], [], []>} : vector<256x4xbf16>, vector<4x128xbf16>, vector<256x128xf32> -> vector<256x128xf32>
    %80 = arith.addf %71, %79 : vector<256x128xf32>
    %c0_59 = arith.constant 0 : index
    %c0_60 = arith.constant 0 : index
    %81 = vector.load %arg4[%c0_59, %c0_60] : memref<1x128xf32, #tpu.memory_space<vmem>>, vector<1x128xf32>
    %82 = vector.broadcast %81 : vector<1x128xf32> to vector<256x128xf32>
    %83 = arith.addf %80, %82 : vector<256x128xf32>
    %84 = arith.negf %83 : vector<256x128xf32>
    %85 = math.exp %84 : vector<256x128xf32>
    %cst_61 = arith.constant 1.000000e+00 : f32
    %86 = vector.broadcast %cst_61 : f32 to vector<256x128xf32>
    %87 = arith.addf %86, %85 : vector<256x128xf32>
    %88 = arith.divf %86, %87 : vector<256x128xf32>
    %89 = arith.mulf %83, %88 : vector<256x128xf32>
    %90 = vector.shape_cast %89 : vector<256x128xf32> to vector<16x16x128xf32>
    %c0_62 = arith.constant 0 : index
    %c0_63 = arith.constant 0 : index
    %c0_64 = arith.constant 0 : index
    %c0_65 = arith.constant 0 : index
    %91 = vector.load %arg5[%c0_62, %c0_63, %c0_64, %c0_65] : memref<1x16x16x128xf32, #tpu.memory_space<vmem>>, vector<1x16x16x128xf32>
    %92 = vector.shape_cast %91 : vector<1x16x16x128xf32> to vector<16x16x128xf32>
    %93 = vector.shape_cast %90 : vector<16x16x128xf32> to vector<1x16x16x128xf32>
    tpu.vector_store %arg5[%c0_62, %c0_63, %c0_64, %c0_65], %93 {strides = array<i32>} : memref<1x16x16x128xf32, #tpu.memory_space<vmem>>, vector<1x16x16x128xf32>,
    return
  }
  func.func @transform_0(%arg0: i32, %arg1: i32) -> (i32, i32, i32, i32) {
    %c0_i32 = arith.constant 0 : i32
    %c0_i32_0 = arith.constant 0 : i32
    %c0_i32_1 = arith.constant 0 : i32
    %c0_i32_2 = arith.constant 0 : i32
    return %arg0, %c0_i32, %c0_i32_0, %c0_i32_1 : i32, i32, i32, i32
  }
  func.func @transform_1(%arg0: i32, %arg1: i32) -> (i32, i32, i32) {
    %c0_i32 = arith.constant 0 : i32
    %c0_i32_0 = arith.constant 0 : i32
    %c0_i32_1 = arith.constant 0 : i32
    %c0_i32_2 = arith.constant 0 : i32
    return %c0_i32, %c0_i32_0, %c0_i32_1 : i32, i32, i32
  }
  func.func @transform_2(%arg0: i32, %arg1: i32) -> (i32, i32) {
    %c0_i32 = arith.constant 0 : i32
    %c0_i32_0 = arith.constant 0 : i32
    %c0_i32_1 = arith.constant 0 : i32
    return %c0_i32, %c0_i32_0 : i32, i32
  }
  func.func @transform_3(%arg0: i32, %arg1: i32) -> (i32, i32, i32, i32) {
    %c0_i32 = arith.constant 0 : i32
    %c0_i32_0 = arith.constant 0 : i32
    %c0_i32_1 = arith.constant 0 : i32
    return %arg0, %arg1, %c0_i32, %c0_i32_0 : i32, i32, i32, i32
  }
}

</mosaic_0001>

<llo_original>
// kernel: base_conv_forward.1
$region0: #{base_conv_forward.1}
  #allocation0 [shape = 'u32[]', space=smem, size = 0x4, offset = 0x4, fixed_abs, tag = 'smem constant byte address 0x4 - core index']
  #allocation1 [shape = 'u32[144,128]{1,0:T(1,128)}', space=vmem, size = 0x12000, scoped, tag = 'internal scratch']
  %s0 = inlined_call_operand.vmem [shape: bf16[2,18,18,4], index: 0, kind: input, shape index: {}]
  %s1 = inlined_call_operand.vmem [shape: bf16[9,4,128], index: 1, kind: input, shape index: {}]
  %s2 = inlined_call_operand.vmem [shape: f32[1,128], index: 2, kind: input, shape index: {}]
  %s3 = inlined_call_operand.vmem [shape: f32[2,16,16,128], index: 3, kind: output, shape index: {}]
  %s4 = sld [smem:[#allocation0]]
  $region45: #{base_conv_forward.1} parent=0
    _
  %s6 = ssub.s32 1, %s4
  %s7 = scalar_select 0, %s6, %s4
  loop: start=0, step=1, limit=4
  $region2: #{base_conv_forward.1} parent=0 // loop_pre_header
    _
  $region3: #{base_conv_forward.1} parent=0 // loop_header
    %s9 = sphi 0, %s13
    %p10 = scmp.ge.s32.totalorder %s9, 4
    %s16 = sphi 0, %s28
    %s17 = sphi 0, %s24
    %s18 = sphi 0, %s16
    %s19 = sphi 0, %s17
    %s20 = sphi 0, %s18
    %s21 = sphi 0, %s19
    %s31 = sphi 0, %s33
    %s34 = sphi 0, %s31
    %s35 = sphi 0, %s34
    %s51 = sphi 0, %s35
    %s55 = sphi 0, %s55
    %s57 = sphi 0, %s55
    %s58 = sphi 0, %s57
    %s72 = sphi 0, %s58
    %s76 = sphi 0, %s76
    %s78 = sphi 0, %s76
    %s79 = sphi 0, %s78
    %s93 = sphi 0, %s79
    %s101 = sphi 0, %s103
    %s104 = sphi 0, %s101
    %s105 = sphi 0, %s104
    %s121 = sphi 0, %s105
  $region4: #{base_conv_forward.1} parent=0 // loop_header_branch
    %12 = sbr.rel (%p10) target = $region8
  $region5: #{base_conv_forward.1} parent=0 // loop_body
    %s14 = ssub.s32 %s9, 1
    %s15 = ssub.s32 %s9, 2
    %s22 = sadd.s32 1, %s17
    %p23 = scmp.ge.s32.totalorder %s22, 1
    %s24 = scalar_select %p23, 0, %s22
    %s25 = sadd.s32 1, %s16
    %s26 = scalar_select %p23, %s25, %s16
    %p27 = scmp.ge.s32.totalorder %s26, 2
    %s28 = scalar_select %p27, 0, %s26
    %s29 = ssub.s32 %s16, %s28
    %p30 = scmp.eq.s32.totalorder %s29, 0
    %s32 = sadd.s32 %s31, 1
    %s33 = scalar_select %p30, %s31, %s32
    %p36 = pneg %p30
    %p37 = scmp.eq.s32.totalorder %s9, 1
    %p38 = por %p36, %p37
    %p39 = scmp.ne.s32.totalorder %s31, %s34
    %p40 = scmp.eq.s32.totalorder %s9, 0
    %p41 = por %p39, %p40
    %p42 = scmp.ne.s32.totalorder %s31, %s34
    %p43 = scmp.eq.s32.totalorder %s14, 1
    %p44 = por %p42, %p43
    %p45 = scmp.ne.s32.totalorder %s34, %s35
    %p46 = scmp.eq.s32.totalorder %s14, 0
    %p47 = por %p45, %p46
    %p48 = scmp.ne.s32.totalorder %s34, %s35
    %p49 = scmp.eq.s32.totalorder %s15, 1
    %p50 = por %p48, %p49
    %p52 = scmp.ne.s32.totalorder %s35, %s51
    %p53 = scmp.eq.s32.totalorder %s15, 0
    %p54 = por %p52, %p53
    %s56 = sadd.s32 %s55, 1
    %p59 = scmp.eq.s32.totalorder %s9, 1
    %p60 = scmp.ne.s32.totalorder %s55, %s57
    %p61 = scmp.eq.s32.totalorder %s9, 0
    %p62 = por %p60, %p61
    %p63 = scmp.ne.s32.totalorder %s55, %s57
    %p64 = scmp.eq.s32.totalorder %s14, 1
    %p65 = por %p63, %p64
    %p66 = scmp.ne.s32.totalorder %s57, %s58
    %p67 = scmp.eq.s32.totalorder %s14, 0
    %p68 = por %p66, %p67
    %p69 = scmp.ne.s32.totalorder %s57, %s58
    %p70 = scmp.eq.s32.totalorder %s15, 1
    %p71 = por %p69, %p70
    %p73 = scmp.ne.s32.totalorder %s58, %s72
    %p74 = scmp.eq.s32.totalorder %s15, 0
    %p75 = por %p73, %p74
    %s77 = sadd.s32 %s76, 1
    %p80 = scmp.eq.s32.totalorder %s9, 1
    %p81 = scmp.ne.s32.totalorder %s76, %s78
    %p82 = scmp.eq.s32.totalorder %s9, 0
    %p83 = por %p81, %p82
    %p84 = scmp.ne.s32.totalorder %s76, %s78
    %p85 = scmp.eq.s32.totalorder %s14, 1
    %p86 = por %p84, %p85
    %p87 = scmp.ne.s32.totalorder %s78, %s79
    %p88 = scmp.eq.s32.totalorder %s14, 0
    %p89 = por %p87, %p88
    %p90 = scmp.ne.s32.totalorder %s78, %s79
    %p91 = scmp.eq.s32.totalorder %s15, 1
    %p92 = por %p90, %p91
    %p94 = scmp.ne.s32.totalorder %s79, %s93
    %p95 = scmp.eq.s32.totalorder %s15, 0
    %p96 = por %p94, %p95
    %s97 = ssub.s32 %s16, %s28
    %s98 = ssub.s32 %s17, %s24
    %s99 = sor.u32 %s97, %s98
    %p100 = scmp.eq.s32.totalorder %s99, 0
    %s102 = sadd.s32 %s101, 1
    %s103 = scalar_select %p100, %s101, %s102
    %p106 = pneg %p100
    %p107 = scmp.eq.s32.totalorder %s9, 1
    %p108 = por %p106, %p107
    %p109 = scmp.ne.s32.totalorder %s101, %s104
    %p110 = scmp.eq.s32.totalorder %s9, 0
    %p111 = por %p109, %p110
    %p112 = scmp.ne.s32.totalorder %s101, %s104
    %p113 = scmp.eq.s32.totalorder %s14, 1
    %p114 = por %p112, %p113
    %p115 = scmp.ne.s32.totalorder %s104, %s105
    %p116 = scmp.eq.s32.totalorder %s14, 0
    %p117 = por %p115, %p116
    %p118 = scmp.ne.s32.totalorder %s104, %s105
    %p119 = scmp.eq.s32.totalorder %s15, 1
    %p120 = por %p118, %p119
    %p122 = scmp.ne.s32.totalorder %s105, %s121
    %p123 = scmp.eq.s32.totalorder %s15, 0
    %p124 = por %p122, %p123
    %p125 = scmp.le.s32.totalorder 1, %s9
    %p126 = scmp.lt.s32.totalorder %s9, 3
    %p127 = pnand %p125, %p126
    %p128 = pneg %p127
    // Predicated region
    $region9: #{base_conv_forward.1} parent=5 // pred_check
      _
    $region10: #{base_conv_forward.1} parent=5 // pred_check_branch
      %130 = sbr.rel (%p127) target = $region12
    $region11: #{base_conv_forward.1} parent=5 // pred_region
      %s131 = ssub.s32 %s9, 1
      // Predicated region
      $region13: #{base_conv_forward.1} parent=11 // pred_check
        %p132 = pneg %p68
      $region14: #{base_conv_forward.1} parent=11 // pred_check_branch
        %134 = sbr.rel (%p132) target = $region16
      $region15: #{base_conv_forward.1} parent=11 // pred_region
        _
      $region16: #{base_conv_forward.1} parent=11 // pred_fallthru
        _
      // Predicated region
      $region17: #{base_conv_forward.1} parent=11 // pred_check
        %p135 = pneg %p89
      $region18: #{base_conv_forward.1} parent=11 // pred_check_branch
        %137 = sbr.rel (%p135) target = $region20
      $region19: #{base_conv_forward.1} parent=11 // pred_region
        _
      $region20: #{base_conv_forward.1} parent=11 // pred_fallthru
        _
    $region12: #{base_conv_forward.1} parent=5 // pred_fallthru
      _
    %p138 = scmp.lt.s32.totalorder %s9, 2
    // Predicated region
    $region21: #{base_conv_forward.1} parent=5 // pred_check
      %p139 = pneg %p138
    $region22: #{base_conv_forward.1} parent=5 // pred_check_branch
      %141 = sbr.rel (%p139) target = $region24
    $region23: #{base_conv_forward.1} parent=5 // pred_region
      // Predicated region
      $region25: #{base_conv_forward.1} parent=23 // pred_check
        %p142 = pneg %p41
      $region26: #{base_conv_forward.1} parent=23 // pred_check_branch
        %144 = sbr.rel (%p142) target = $region28
      $region27: #{base_conv_forward.1} parent=23 // pred_region
        %p145 = scmp.lt.s32.totalorder %s16, 1
        %s146 = scalar_select %p145, %s16, 1
        %s147 = smul.addr %s146, 54
        %s148 = smul.addr %s147, 4
        %s149 = scalar_lea.vmem %s0, %s148
      $region28: #{base_conv_forward.1} parent=23 // pred_fallthru
        _
    $region24: #{base_conv_forward.1} parent=5 // pred_fallthru
      _
    %p150 = scmp.le.s32.totalorder 1, %s9
    %p151 = scmp.lt.s32.totalorder %s9, 3
    %p152 = pnand %p150, %p151
    %p153 = pneg %p152
    // Predicated region
    $region29: #{base_conv_forward.1} parent=5 // pred_check
      _
    $region30: #{base_conv_forward.1} parent=5 // pred_check_branch
      %155 = sbr.rel (%p152) target = $region32
    $region31: #{base_conv_forward.1} parent=5 // pred_region
      %s156 = ssub.s32 %s9, 1
      %p157 = scmp.lt.s32.totalorder %s18, 1
      %s158 = scalar_select %p157, %s18, 1
      %s159 = smul.addr %s158, 54
      %s160 = smul.addr %s159, 4
      %s161 = scalar_lea.vmem %s0, %s160
      %p162 = pneg %p47
      %p163 = pneg %p44
      %p164 = pneg %p68
      %p165 = pneg %p65
      %p166 = pneg %p89
      %p167 = pneg %p86
      %p168 = pneg %p117
      %p169 = pneg %p114
      %s170 = smul.u32 16, %s19
      %p171 = scmp.lt.s32.totalorder %s18, 1
      %s172 = scalar_select %p171, %s18, 1
      %p173 = scmp.lt.s32.totalorder %s170, 15
      %s174 = scalar_select %p173, %s170, 15
      %s175 = smul.addr %s174, 2
      %s176 = smul.addr %s172, 32
      %s177 = sadd.s32 %s175, %s176
      %s178 = smul.addr %s177, 8
      %s179 = scalar_lea.vmem %s3, %s178
      %p180 = scmp.lt.s32.totalorder %s18, 1
      %s181 = scalar_select %p180, %s18, 1
      %s182 = smul.addr %s181, 54
      %s183 = smul.addr %s182, 4
      %s184 = scalar_lea.vmem %s0, %s183
      %s185 = smul.u32 16, %s19
      %p186 = scmp.lt.s32.totalorder %s18, 1
      %s187 = scalar_select %p186, %s18, 1
      %p188 = scmp.lt.s32.totalorder %s185, 15
      %s189 = scalar_select %p188, %s185, 15
      %s190 = smul.addr %s189, 2
      %s191 = smul.addr %s187, 32
      %s192 = sadd.s32 %s190, %s191
      %s193 = smul.addr %s192, 8
      %s194 = scalar_lea.vmem %s3, %s193
      %s195 = smul.u32 16, %s19
      %s197 = smul.u32 %s19, 16
      %s198 = smul.u32 %s197, 3
      %s199 = smul.addr %s198, 4
      %s200 = scalar_lea.vmem %s184, %s199
      %v201 = vld [vmem:[%s200] sm:$0xf]
      %v202 = vld [vmem:[%s200 + $0x4] sm:$0xf]
      %v203 = vld [vmem:[%s200 + $0xc] sm:$0xf]
      %v204 = vld [vmem:[%s200 + $0x10] sm:$0xf]
      %v205 = vld [vmem:[%s200 + $0x18] sm:$0xf]
      %v206 = vld [vmem:[%s200 + $0x1c] sm:$0xf]
      %v207 = vld [vmem:[%s200 + $0x24] sm:$0xf]
      %v208 = vld [vmem:[%s200 + $0x28] sm:$0xf]
      %v209 = vld [vmem:[%s200 + $0x30] sm:$0xf]
      %v210 = vld [vmem:[%s200 + $0x34] sm:$0xf]
      %v211 = vld [vmem:[%s200 + $0x3c] sm:$0xf]
      %v212 = vld [vmem:[%s200 + $0x40] sm:$0xf]
      %v213 = vld [vmem:[%s200 + $0x48] sm:$0xf]
      %v214 = vld [vmem:[%s200 + $0x4c] sm:$0xf]
      %v215 = vld [vmem:[%s200 + $0x54] sm:$0xf]
      %v216 = vld [vmem:[%s200 + $0x58] sm:$0xf]
      %v217 = vld [vmem:[%s200 + $0x60] sm:$0xf]
      %v218 = vld [vmem:[%s200 + $0x64] sm:$0xf]
      %v219 = vld [vmem:[%s200 + $0x6c] sm:$0xf]
      %v220 = vld [vmem:[%s200 + $0x70] sm:$0xf]
      %v221 = vld [vmem:[%s200 + $0x78] sm:$0xf]
      %v222 = vld [vmem:[%s200 + $0x7c] sm:$0xf]
      %v223 = vld [vmem:[%s200 + $0x84] sm:$0xf]
      %v224 = vld [vmem:[%s200 + $0x88] sm:$0xf]
      %v225 = vld [vmem:[%s200 + $0x90] sm:$0xf]
      %v226 = vld [vmem:[%s200 + $0x94] sm:$0xf]
      %v227 = vld [vmem:[%s200 + $0x9c] sm:$0xf]
      %v228 = vld [vmem:[%s200 + $0xa0] sm:$0xf]
      %v229 = vld [vmem:[%s200 + $0xa8] sm:$0xf]
      %v230 = vld [vmem:[%s200 + $0xac] sm:$0xf]
      %v231 = vld [vmem:[%s200 + $0xb4] sm:$0xf]
      %v232 = vld [vmem:[%s200 + $0xb8] sm:$0xf]
      %v233 = vld [vmem:[%s1] sm:$0x3]
      %v234 = vld [vmem:[%s200 + $0x8] sm:$0x1]
      %v235 = vld [vmem:[%s200 + $0x14] sm:$0x1]
      %v236 = vld [vmem:[%s200 + $0x20] sm:$0x1]
      %v237 = vld [vmem:[%s200 + $0x2c] sm:$0x1]
      %v238 = vld [vmem:[%s200 + $0x38] sm:$0x1]
      %v239 = vld [vmem:[%s200 + $0x44] sm:$0x1]
      %v240 = vld [vmem:[%s200 + $0x50] sm:$0x1]
      %v241 = vld [vmem:[%s200 + $0x5c] sm:$0x1]
      %v242 = vld [vmem:[%s200 + $0x68] sm:$0x1]
      %v243 = vld [vmem:[%s200 + $0x74] sm:$0x1]
      %v244 = vld [vmem:[%s200 + $0x80] sm:$0x1]
      %v245 = vld [vmem:[%s200 + $0x8c] sm:$0x1]
      %v246 = vld [vmem:[%s200 + $0x98] sm:$0x1]
      %v247 = vld [vmem:[%s200 + $0xa4] sm:$0x1]
      %v248 = vld [vmem:[%s200 + $0xb0] sm:$0x1]
      %v249 = vld [vmem:[%s200 + $0xbc] sm:$0x1]
      %vm250 = vsmask.f32 3328
      %vm251 = vsmask.f32 7440
      %vm252 = vmor %vm250, %vm251
      %v254 = vshrl.u32 %v201, 16
      %v256 = vrot.slane %v254, 4
      %v257 = vshll.u32 %v201, 16
      %v259 = vrot.slane %v257, 5
      %v260 = vor.u32 %v256, %v259
      %v261 = vrot.slane %v260, 4
      %v263 = vshll.u32 %v202, 16
      %v265 = vrot.slane %v263, 5
      %v266 = vsel %vm252, %v261, %v265
      %v267 = vshrl.u32 %v202, 16
      %v269 = vrot.slane %v267, 4
      %v270 = vor.u32 %v269, %v265
      %v271 = vrot.slane %v270, 4
      %v273 = vshll.u32 %v234, 16
      %v275 = vrot.slane %v273, 5
      %v276 = vsel %vm252, %v271, %v275
      %v278 = vshrl.u32 %v203, 16
      %v280 = vrot.slane %v278, 4
      %v281 = vshll.u32 %v203, 16
      %v283 = vrot.slane %v281, 5
      %v284 = vor.u32 %v280, %v283
      %v285 = vrot.slane %v284, 4
      %v287 = vshll.u32 %v204, 16
      %v289 = vrot.slane %v287, 5
      %v290 = vsel %vm252, %v285, %v289
      %v291 = vshrl.u32 %v204, 16
      %v293 = vrot.slane %v291, 4
      %v294 = vor.u32 %v293, %v289
      %v295 = vrot.slane %v294, 4
      %v297 = vshll.u32 %v235, 16
      %v299 = vrot.slane %v297, 5
      %v300 = vsel %vm252, %v295, %v299
      %v302 = vshrl.u32 %v205, 16
      %v304 = vrot.slane %v302, 4
      %v305 = vshll.u32 %v205, 16
      %v307 = vrot.slane %v305, 5
      %v308 = vor.u32 %v304, %v307
      %v309 = vrot.slane %v308, 4
      %v311 = vshll.u32 %v206, 16
      %v313 = vrot.slane %v311, 5
      %v314 = vsel %vm252, %v309, %v313
      %v315 = vshrl.u32 %v206, 16
      %v317 = vrot.slane %v315, 4
      %v318 = vor.u32 %v317, %v313
      %v319 = vrot.slane %v318, 4
      %v321 = vshll.u32 %v236, 16
      %v323 = vrot.slane %v321, 5
      %v324 = vsel %vm252, %v319, %v323
      %v326 = vshrl.u32 %v207, 16
      %v328 = vrot.slane %v326, 4
      %v329 = vshll.u32 %v207, 16
      %v331 = vrot.slane %v329, 5
      %v332 = vor.u32 %v328, %v331
      %v333 = vrot.slane %v332, 4
      %v335 = vshll.u32 %v208, 16
      %v337 = vrot.slane %v335, 5
      %v338 = vsel %vm252, %v333, %v337
      %v339 = vshrl.u32 %v208, 16
      %v341 = vrot.slane %v339, 4
      %v342 = vor.u32 %v341, %v337
      %v343 = vrot.slane %v342, 4
      %v345 = vshll.u32 %v237, 16
      %v347 = vrot.slane %v345, 5
      %v348 = vsel %vm252, %v343, %v347
      %v350 = vshrl.u32 %v209, 16
      %v352 = vrot.slane %v350, 4
      %v353 = vshll.u32 %v209, 16
      %v355 = vrot.slane %v353, 5
      %v356 = vor.u32 %v352, %v355
      %v357 = vrot.slane %v356, 4
      %v359 = vshll.u32 %v210, 16
      %v361 = vrot.slane %v359, 5
      %v362 = vsel %vm252, %v357, %v361
      %v363 = vshrl.u32 %v210, 16
      %v365 = vrot.slane %v363, 4
      %v366 = vor.u32 %v365, %v361
      %v367 = vrot.slane %v366, 4
      %v369 = vshll.u32 %v238, 16
      %v371 = vrot.slane %v369, 5
      %v372 = vsel %vm252, %v367, %v371
      %v374 = vshrl.u32 %v211, 16
      %v376 = vrot.slane %v374, 4
      %v377 = vshll.u32 %v211, 16
      %v379 = vrot.slane %v377, 5
      %v380 = vor.u32 %v376, %v379
      %v381 = vrot.slane %v380, 4
      %v383 = vshll.u32 %v212, 16
      %v385 = vrot.slane %v383, 5
      %v386 = vsel %vm252, %v381, %v385
      %v387 = vshrl.u32 %v212, 16
      %v389 = vrot.slane %v387, 4
      %v390 = vor.u32 %v389, %v385
      %v391 = vrot.slane %v390, 4
      %v393 = vshll.u32 %v239, 16
      %v395 = vrot.slane %v393, 5
      %v396 = vsel %vm252, %v391, %v395
      %v398 = vshrl.u32 %v213, 16
      %v400 = vrot.slane %v398, 4
      %v401 = vshll.u32 %v213, 16
      %v403 = vrot.slane %v401, 5
      %v404 = vor.u32 %v400, %v403
      %v405 = vrot.slane %v404, 4
      %v407 = vshll.u32 %v214, 16
      %v409 = vrot.slane %v407, 5
      %v410 = vsel %vm252, %v405, %v409
      %v411 = vshrl.u32 %v214, 16
      %v413 = vrot.slane %v411, 4
      %v414 = vor.u32 %v413, %v409
      %v415 = vrot.slane %v414, 4
      %v417 = vshll.u32 %v240, 16
      %v419 = vrot.slane %v417, 5
      %v420 = vsel %vm252, %v415, %v419
      %v422 = vshrl.u32 %v215, 16
      %v424 = vrot.slane %v422, 4
      %v425 = vshll.u32 %v215, 16
      %v427 = vrot.slane %v425, 5
      %v428 = vor.u32 %v424, %v427
      %v429 = vrot.slane %v428, 4
      %v431 = vshll.u32 %v216, 16
      %v433 = vrot.slane %v431, 5
      %v434 = vsel %vm252, %v429, %v433
      %v435 = vshrl.u32 %v216, 16
      %v437 = vrot.slane %v435, 4
      %v438 = vor.u32 %v437, %v433
      %v439 = vrot.slane %v438, 4
      %v441 = vshll.u32 %v241, 16
      %v443 = vrot.slane %v441, 5
      %v444 = vsel %vm252, %v439, %v443
      %v446 = vshrl.u32 %v217, 16
      %v448 = vrot.slane %v446, 4
      %v449 = vshll.u32 %v217, 16
      %v451 = vrot.slane %v449, 5
      %v452 = vor.u32 %v448, %v451
      %v453 = vrot.slane %v452, 4
      %v455 = vshll.u32 %v218, 16
      %v457 = vrot.slane %v455, 5
      %v458 = vsel %vm252, %v453, %v457
      %v459 = vshrl.u32 %v218, 16
      %v461 = vrot.slane %v459, 4
      %v462 = vor.u32 %v461, %v457
      %v463 = vrot.slane %v462, 4
      %v465 = vshll.u32 %v242, 16
      %v467 = vrot.slane %v465, 5
      %v468 = vsel %vm252, %v463, %v467
      %v470 = vshrl.u32 %v219, 16
      %v472 = vrot.slane %v470, 4
      %v473 = vshll.u32 %v219, 16
      %v475 = vrot.slane %v473, 5
      %v476 = vor.u32 %v472, %v475
      %v477 = vrot.slane %v476, 4
      %v479 = vshll.u32 %v220, 16
      %v481 = vrot.slane %v479, 5
      %v482 = vsel %vm252, %v477, %v481
      %v483 = vshrl.u32 %v220, 16
      %v485 = vrot.slane %v483, 4
      %v486 = vor.u32 %v485, %v481
      %v487 = vrot.slane %v486, 4
      %v489 = vshll.u32 %v243, 16
      %v491 = vrot.slane %v489, 5
      %v492 = vsel %vm252, %v487, %v491
      %v494 = vshrl.u32 %v221, 16
      %v496 = vrot.slane %v494, 4
      %v497 = vshll.u32 %v221, 16
      %v499 = vrot.slane %v497, 5
      %v500 = vor.u32 %v496, %v499
      %v501 = vrot.slane %v500, 4
      %v503 = vshll.u32 %v222, 16
      %v505 = vrot.slane %v503, 5
      %v506 = vsel %vm252, %v501, %v505
      %v507 = vshrl.u32 %v222, 16
      %v509 = vrot.slane %v507, 4
      %v510 = vor.u32 %v509, %v505
      %v511 = vrot.slane %v510, 4
      %v513 = vshll.u32 %v244, 16
      %v515 = vrot.slane %v513, 5
      %v516 = vsel %vm252, %v511, %v515
      %v518 = vshrl.u32 %v223, 16
      %v520 = vrot.slane %v518, 4
      %v521 = vshll.u32 %v223, 16
      %v523 = vrot.slane %v521, 5
      %v524 = vor.u32 %v520, %v523
      %v525 = vrot.slane %v524, 4
      %v527 = vshll.u32 %v224, 16
      %v529 = vrot.slane %v527, 5
      %v530 = vsel %vm252, %v525, %v529
      %v531 = vshrl.u32 %v224, 16
      %v533 = vrot.slane %v531, 4
      %v534 = vor.u32 %v533, %v529
      %v535 = vrot.slane %v534, 4
      %v537 = vshll.u32 %v245, 16
      %v539 = vrot.slane %v537, 5
      %v540 = vsel %vm252, %v535, %v539
      %v542 = vshrl.u32 %v225, 16
      %v544 = vrot.slane %v542, 4
      %v545 = vshll.u32 %v225, 16
      %v547 = vrot.slane %v545, 5
      %v548 = vor.u32 %v544, %v547
      %v549 = vrot.slane %v548, 4
      %v551 = vshll.u32 %v226, 16
      %v553 = vrot.slane %v551, 5
      %v554 = vsel %vm252, %v549, %v553
      %v555 = vshrl.u32 %v226, 16
      %v557 = vrot.slane %v555, 4
      %v558 = vor.u32 %v557, %v553
      %v559 = vrot.slane %v558, 4
      %v561 = vshll.u32 %v246, 16
      %v563 = vrot.slane %v561, 5
      %v564 = vsel %vm252, %v559, %v563
      %v566 = vshrl.u32 %v227, 16
      %v568 = vrot.slane %v566, 4
      %v569 = vshll.u32 %v227, 16
      %v571 = vrot.slane %v569, 5
      %v572 = vor.u32 %v568, %v571
      %v573 = vrot.slane %v572, 4
      %v575 = vshll.u32 %v228, 16
      %v577 = vrot.slane %v575, 5
      %v578 = vsel %vm252, %v573, %v577
      %v579 = vshrl.u32 %v228, 16
      %v581 = vrot.slane %v579, 4
      %v582 = vor.u32 %v581, %v577
      %v583 = vrot.slane %v582, 4
      %v585 = vshll.u32 %v247, 16
      %v587 = vrot.slane %v585, 5
      %v588 = vsel %vm252, %v583, %v587
      %v590 = vshrl.u32 %v229, 16
      %v592 = vrot.slane %v590, 4
      %v593 = vshll.u32 %v229, 16
      %v595 = vrot.slane %v593, 5
      %v596 = vor.u32 %v592, %v595
      %v597 = vrot.slane %v596, 4
      %v599 = vshll.u32 %v230, 16
      %v601 = vrot.slane %v599, 5
      %v602 = vsel %vm252, %v597, %v601
      %v603 = vshrl.u32 %v230, 16
      %v605 = vrot.slane %v603, 4
      %v606 = vor.u32 %v605, %v601
      %v607 = vrot.slane %v606, 4
      %v609 = vshll.u32 %v248, 16
      %v611 = vrot.slane %v609, 5
      %v612 = vsel %vm252, %v607, %v611
      %v614 = vshrl.u32 %v231, 16
      %v616 = vrot.slane %v614, 4
      %v617 = vshll.u32 %v231, 16
      %v619 = vrot.slane %v617, 5
      %v620 = vor.u32 %v616, %v619
      %v621 = vrot.slane %v620, 4
      %v623 = vshll.u32 %v232, 16
      %v625 = vrot.slane %v623, 5
      %v626 = vsel %vm252, %v621, %v625
      %v627 = vshrl.u32 %v232, 16
      %v629 = vrot.slane %v627, 4
      %v630 = vor.u32 %v629, %v625
      %v631 = vrot.slane %v630, 4
      %v633 = vshll.u32 %v249, 16
      %v635 = vrot.slane %v633, 5
      %v636 = vsel %vm252, %v631, %v635
      %s637 = scalar_lea.vmem %s1, 2
      %v638 = vld [vmem:[%s637] sm:$0x3]
      %v639 = vunpack.c.l.b16 %v266
      %v640 = vunpack.c.l.b16 %v276
      %v641 = vunpack.c.l.b16 %v290
      %v642 = vunpack.c.l.b16 %v300
      %v643 = vunpack.c.l.b16 %v314
      %v644 = vunpack.c.l.b16 %v324
      %v645 = vunpack.c.l.b16 %v338
      %v646 = vunpack.c.l.b16 %v348
      %v647 = vunpack.c.l.b16 %v362
      %v648 = vunpack.c.l.b16 %v372
      %v649 = vunpack.c.l.b16 %v386
      %v650 = vunpack.c.l.b16 %v396
      %v651 = vunpack.c.l.b16 %v410
      %v652 = vunpack.c.l.b16 %v420
      %v653 = vunpack.c.l.b16 %v434
      %v654 = vunpack.c.l.b16 %v444
      %v655 = vunpack.c.l.b16 %v458
      %v656 = vunpack.c.l.b16 %v468
      %v657 = vunpack.c.l.b16 %v482
      %v658 = vunpack.c.l.b16 %v492
      %v659 = vunpack.c.l.b16 %v506
      %v660 = vunpack.c.l.b16 %v516
      %v661 = vunpack.c.l.b16 %v530
      %v662 = vunpack.c.l.b16 %v540
      %v663 = vunpack.c.l.b16 %v554
      %v664 = vunpack.c.l.b16 %v564
      %v665 = vunpack.c.l.b16 %v578
      %v666 = vunpack.c.l.b16 %v588
      %v667 = vunpack.c.l.b16 %v602
      %v668 = vunpack.c.l.b16 %v612
      %v669 = vunpack.c.l.b16 %v626
      %v670 = vunpack.c.l.b16 %v636
      %v671 = vpack.c.b16 %v640, %v639
      %v672 = vpack.c.b16 %v642, %v641
      %v673 = vpack.c.b16 %v644, %v643
      %v674 = vpack.c.b16 %v646, %v645
      %v675 = vpack.c.b16 %v648, %v647
      %v676 = vpack.c.b16 %v650, %v649
      %v677 = vpack.c.b16 %v652, %v651
      %v678 = vpack.c.b16 %v654, %v653
      %v679 = vpack.c.b16 %v656, %v655
      %v680 = vpack.c.b16 %v658, %v657
      %v681 = vpack.c.b16 %v660, %v659
      %v682 = vpack.c.b16 %v662, %v661
      %v683 = vpack.c.b16 %v664, %v663
      %v684 = vpack.c.b16 %v666, %v665
      %v685 = vpack.c.b16 %v668, %v667
      %v686 = vpack.c.b16 %v670, %v669
      %vm687 = vcmask 31744
      %v689 = vsel %vm687, %v671, 0
      %v692 = vsel %vm687, %v672, 0
      %v695 = vsel %vm687, %v673, 0
      %v698 = vsel %vm687, %v674, 0
      %v701 = vsel %vm687, %v675, 0
      %v704 = vsel %vm687, %v676, 0
      %v707 = vsel %vm687, %v677, 0
      %v710 = vsel %vm687, %v678, 0
      %v713 = vsel %vm687, %v679, 0
      %v716 = vsel %vm687, %v680, 0
      %v719 = vsel %vm687, %v681, 0
      %v722 = vsel %vm687, %v682, 0
      %v725 = vsel %vm687, %v683, 0
      %v728 = vsel %vm687, %v684, 0
      %v731 = vsel %vm687, %v685, 0
      %v734 = vsel %vm687, %v686, 0
      %vm736 = vcmask 1041408
      %v738 = vsel %vm736, %v638, 0
      %740 = vmatprep.subr.bf16.mxu0 0
      %741 = vmatpush1.bf16.msra.mxu0 %v738
      %742 = vmatprep.subr.bf16.mxu0 0
      %743 = vmatpush1.bf16.msra.mxu0 0
      %744 = vmatprep.subr.bf16.mxu0 0
      %745 = vmatpush1.bf16.msra.mxu0 0
      %746 = vmatprep.subr.bf16.mxu0 0
      %747 = vmatpush1.bf16.msra.mxu0 0
      %748 = vmatprep.subr.bf16.mxu0 0
      %749 = vmatpush1.bf16.msra.mxu0 0
      %750 = vmatprep.subr.bf16.mxu0 0
      %751 = vmatpush1.bf16.msra.mxu0 0
      %752 = vmatprep.subr.bf16.mxu0 0
      %753 = vmatpush1.bf16.msra.mxu0 0
      %754 = vmatprep.subr.bf16.mxu0 0
      %755 = vmatpush1.bf16.msra.mxu0 0
      %756 = vmatprep.subr.bf16.mxu0 0
      %757 = vmatpush1.bf16.msra.mxu0 0
      %758 = vmatprep.subr.bf16.mxu0 0
      %759 = vmatpush1.bf16.msra.mxu0 0
      %760 = vmatprep.subr.bf16.mxu0 0
      %761 = vmatpush1.bf16.msra.mxu0 0
      %762 = vmatprep.subr.bf16.mxu0 0
      %763 = vmatpush1.bf16.msra.mxu0 0
      %764 = vmatprep.subr.bf16.mxu0 0
      %765 = vmatpush1.bf16.msra.mxu0 0
      %766 = vmatprep.subr.bf16.mxu0 0
      %767 = vmatpush1.bf16.msra.mxu0 0
      %768 = vmatprep.subr.bf16.mxu0 0
      %769 = vmatpush1.bf16.msra.mxu0 0
      %770 = vmatprep.subr.bf16.mxu0 0
      %771 = vmatpush1.bf16.msra.mxu0 0
      %772 = vmatprep.mubr.bf16.mxu0 0
      %773 = vmatmul.mubr.bf16.gmra.mrb[0].mxu0 %v689
      %v774 = vpop.f32.mrb[0].mxu0
      %v775 = vadd.f32 0.0, %v774
      %v776 = vpop.f32.mrb[0].mxu0
      %v777 = vpop.f32.mrb[0].mxu0
      %v778 = vadd.f32 0.0, %v777
      %v779 = vpop.f32.mrb[0].mxu0
      %780 = vmatprep.mubr.bf16.mxu0 0
      %781 = vmatmul.mubr.bf16.gmra.mrb[0].mxu0 %v692
      %v782 = vpop.f32.mrb[0].mxu0
      %v783 = vadd.f32 0.0, %v782
      %v784 = vpop.f32.mrb[0].mxu0
      %v785 = vpop.f32.mrb[0].mxu0
      %v786 = vadd.f32 0.0, %v785
      %v787 = vpop.f32.mrb[0].mxu0
      %788 = vmatprep.mubr.bf16.mxu0 0
      %789 = vmatmul.mubr.bf16.gmra.mrb[0].mxu0 %v695
      %v790 = vpop.f32.mrb[0].mxu0
      %v791 = vadd.f32 0.0, %v790
      %v792 = vpop.f32.mrb[0].mxu0
      %v793 = vpop.f32.mrb[0].mxu0
      %v794 = vadd.f32 0.0, %v793
      %v795 = vpop.f32.mrb[0].mxu0
      %796 = vmatprep.mubr.bf16.mxu0 0
      %797 = vmatmul.mubr.bf16.gmra.mrb[0].mxu0 %v698
      %v798 = vpop.f32.mrb[0].mxu0
      %v799 = vadd.f32 0.0, %v798
      %v800 = vpop.f32.mrb[0].mxu0
      %v801 = vpop.f32.mrb[0].mxu0
      %v802 = vadd.f32 0.0, %v801
      %v803 = vpop.f32.mrb[0].mxu0
      %804 = vmatprep.mubr.bf16.mxu0 0
      %805 = vmatmul.mubr.bf16.gmra.mrb[0].mxu0 %v701
      %v806 = vpop.f32.mrb[0].mxu0
      %v807 = vadd.f32 0.0, %v806
      %v808 = vpop.f32.mrb[0].mxu0
      %v809 = vpop.f32.mrb[0].mxu0
      %v810 = vadd.f32 0.0, %v809
      %v811 = vpop.f32.mrb[0].mxu0
      %812 = vmatprep.mubr.bf16.mxu0 0
      %813 = vmatmul.mubr.bf16.gmra.mrb[0].mxu0 %v704
      %v814 = vpop.f32.mrb[0].mxu0
      %v815 = vadd.f32 0.0, %v814
      %v816 = vpop.f32.mrb[0].mxu0
      %v817 = vpop.f32.mrb[0].mxu0
      %v818 = vadd.f32 0.0, %v817
      %v819 = vpop.f32.mrb[0].mxu0
      %820 = vmatprep.mubr.bf16.mxu0 0
      %821 = vmatmul.mubr.bf16.gmra.mrb[0].mxu0 %v707
      %v822 = vpop.f32.mrb[0].mxu0
      %v823 = vadd.f32 0.0, %v822
      %v824 = vpop.f32.mrb[0].mxu0
      %v825 = vpop.f32.mrb[0].mxu0
      %v826 = vadd.f32 0.0, %v825
      %v827 = vpop.f32.mrb[0].mxu0
      %828 = vmatprep.mubr.bf16.mxu0 0
      %829 = vmatmul.mubr.bf16.gmra.mrb[0].mxu0 %v710
      %v830 = vpop.f32.mrb[0].mxu0
      %v831 = vadd.f32 0.0, %v830
      %v832 = vpop.f32.mrb[0].mxu0
      %v833 = vpop.f32.mrb[0].mxu0
      %v834 = vadd.f32 0.0, %v833
      %v835 = vpop.f32.mrb[0].mxu0
      %836 = vmatprep.mubr.bf16.mxu0 0
      %837 = vmatmul.mubr.bf16.gmra.mrb[0].mxu0 %v713
      %v838 = vpop.f32.mrb[0].mxu0
      %v839 = vadd.f32 0.0, %v838
      %v840 = vpop.f32.mrb[0].mxu0
      %v841 = vpop.f32.mrb[0].mxu0
      %v842 = vadd.f32 0.0, %v841
      %v843 = vpop.f32.mrb[0].mxu0
      %844 = vmatprep.mubr.bf16.mxu0 0
      %845 = vmatmul.mubr.bf16.gmra.mrb[0].mxu0 %v716
      %v846 = vpop.f32.mrb[0].mxu0
      %v847 = vadd.f32 0.0, %v846
      %v848 = vpop.f32.mrb[0].mxu0
      %v849 = vpop.f32.mrb[0].mxu0
      %v850 = vadd.f32 0.0, %v849
      %v851 = vpop.f32.mrb[0].mxu0
      %852 = vmatprep.mubr.bf16.mxu0 0
      %853 = vmatmul.mubr.bf16.gmra.mrb[0].mxu0 %v719
      %v854 = vpop.f32.mrb[0].mxu0
      %v855 = vadd.f32 0.0, %v854
      %v856 = vpop.f32.mrb[0].mxu0
      %v857 = vpop.f32.mrb[0].mxu0
      %v858 = vadd.f32 0.0, %v857
      %v859 = vpop.f32.mrb[0].mxu0
      %860 = vmatprep.mubr.bf16.mxu0 0
      %861 = vmatmul.mubr.bf16.gmra.mrb[0].mxu0 %v722
      %v862 = vpop.f32.mrb[0].mxu0
      %v863 = vadd.f32 0.0, %v862
      %v864 = vpop.f32.mrb[0].mxu0
      %v865 = vpop.f32.mrb[0].mxu0
      %v866 = vadd.f32 0.0, %v865
      %v867 = vpop.f32.mrb[0].mxu0
      %868 = vmatprep.mubr.bf16.mxu0 0
      %869 = vmatmul.mubr.bf16.gmra.mrb[0].mxu0 %v725
      %v870 = vpop.f32.mrb[0].mxu0
      %v871 = vadd.f32 0.0, %v870
      %v872 = vpop.f32.mrb[0].mxu0
      %v873 = vpop.f32.mrb[0].mxu0
      %v874 = vadd.f32 0.0, %v873
      %v875 = vpop.f32.mrb[0].mxu0
      %876 = vmatprep.mubr.bf16.mxu0 0
      %877 = vmatmul.mubr.bf16.gmra.mrb[0].mxu0 %v728
      %v878 = vpop.f32.mrb[0].mxu0
      %v879 = vadd.f32 0.0, %v878
      %v880 = vpop.f32.mrb[0].mxu0
      %v881 = vpop.f32.mrb[0].mxu0
      %v882 = vadd.f32 0.0, %v881
      %v883 = vpop.f32.mrb[0].mxu0
      %884 = vmatprep.mubr.bf16.mxu0 0
      %885 = vmatmul.mubr.bf16.gmra.mrb[0].mxu0 %v731
      %v886 = vpop.f32.mrb[0].mxu0
      %v887 = vadd.f32 0.0, %v886
      %v888 = vpop.f32.mrb[0].mxu0
      %v889 = vpop.f32.mrb[0].mxu0
      %v890 = vadd.f32 0.0, %v889
      %v891 = vpop.f32.mrb[0].mxu0
      %892 = vmatprep.mubr.bf16.mxu0 0
      %893 = vmatmul.mubr.bf16.gmra.mrb[0].mxu0 %v734
      %v894 = vpop.f32.mrb[0].mxu0
      %v895 = vadd.f32 0.0, %v894
      %v896 = vpop.f32.mrb[0].mxu0
      %v897 = vpop.f32.mrb[0].mxu0
      %v898 = vadd.f32 0.0, %v897
      %v899 = vpop.f32.mrb[0].mxu0
      %900 = vdwg.mxu0
      %v933 = vunpack.c.l.b16 %v201
      %v934 = vunpack.c.l.b16 %v202
      %v935 = vunpack.c.l.b16 %v203
      %v936 = vunpack.c.l.b16 %v204
      %v937 = vunpack.c.l.b16 %v205
      %v938 = vunpack.c.l.b16 %v206
      %v939 = vunpack.c.l.b16 %v207
      %v940 = vunpack.c.l.b16 %v208
      %v941 = vunpack.c.l.b16 %v209
      %v942 = vunpack.c.l.b16 %v210
      %v943 = vunpack.c.l.b16 %v211
      %v944 = vunpack.c.l.b16 %v212
      %v945 = vunpack.c.l.b16 %v213
      %v946 = vunpack.c.l.b16 %v214
      %v947 = vunpack.c.l.b16 %v215
      %v948 = vunpack.c.l.b16 %v216
      %v949 = vunpack.c.l.b16 %v217
      %v950 = vunpack.c.l.b16 %v218
      %v951 = vunpack.c.l.b16 %v219
      %v952 = vunpack.c.l.b16 %v220
      %v953 = vunpack.c.l.b16 %v221
      %v954 = vunpack.c.l.b16 %v222
      %v955 = vunpack.c.l.b16 %v223
      %v956 = vunpack.c.l.b16 %v224
      %v957 = vunpack.c.l.b16 %v225
      %v958 = vunpack.c.l.b16 %v226
      %v959 = vunpack.c.l.b16 %v227
      %v960 = vunpack.c.l.b16 %v228
      %v961 = vunpack.c.l.b16 %v229
      %v962 = vunpack.c.l.b16 %v230
      %v963 = vunpack.c.l.b16 %v231
      %v964 = vunpack.c.l.b16 %v232
      %v965 = vpack.c.b16 %v934, %v933
      %v966 = vpack.c.b16 %v936, %v935
      %v967 = vpack.c.b16 %v938, %v937
      %v968 = vpack.c.b16 %v940, %v939
      %v969 = vpack.c.b16 %v942, %v941
      %v970 = vpack.c.b16 %v944, %v943
      %v971 = vpack.c.b16 %v946, %v945
      %v972 = vpack.c.b16 %v948, %v947
      %v973 = vpack.c.b16 %v950, %v949
      %v974 = vpack.c.b16 %v952, %v951
      %v975 = vpack.c.b16 %v954, %v953
      %v976 = vpack.c.b16 %v956, %v955
      %v977 = vpack.c.b16 %v958, %v957
      %v978 = vpack.c.b16 %v960, %v959
      %v979 = vpack.c.b16 %v962, %v961
      %v980 = vpack.c.b16 %v964, %v963
      %v982 = vsel %vm687, %v965, 0
      %v985 = vsel %vm687, %v966, 0
      %v988 = vsel %vm687, %v967, 0
      %v991 = vsel %vm687, %v968, 0
      %v994 = vsel %vm687, %v969, 0
      %v997 = vsel %vm687, %v970, 0
      %v1000 = vsel %vm687, %v971, 0
      %v1003 = vsel %vm687, %v972, 0
      %v1006 = vsel %vm687, %v973, 0
      %v1009 = vsel %vm687, %v974, 0
      %v1012 = vsel %vm687, %v975, 0
      %v1015 = vsel %vm687, %v976, 0
      %v1018 = vsel %vm687, %v977, 0
      %v1021 = vsel %vm687, %v978, 0
      %v1024 = vsel %vm687, %v979, 0
      %v1027 = vsel %vm687, %v980, 0
      %v1030 = vsel %vm736, %v233, 0
      %1032 = vmatprep.subr.bf16.mxu0 0
      %1033 = vmatpush1.bf16.msra.mxu0 %v1030
      %1034 = vmatprep.subr.bf16.mxu0 0
      %1035 = vmatpush1.bf16.msra.mxu0 0
      %1036 = vmatprep.subr.bf16.mxu0 0
      %1037 = vmatpush1.bf16.msra.mxu0 0
      %1038 = vmatprep.subr.bf16.mxu0 0
      %1039 = vmatpush1.bf16.msra.mxu0 0
      %1040 = vmatprep.subr.bf16.mxu0 0
      %1041 = vmatpush1.bf16.msra.mxu0 0
      %1042 = vmatprep.subr.bf16.mxu0 0
      %1043 = vmatpush1.bf16.msra.mxu0 0
      %1044 = vmatprep.subr.bf16.mxu0 0
      %1045 = vmatpush1.bf16.msra.mxu0 0
      %1046 = vmatprep.subr.bf16.mxu0 0
      %1047 = vmatpush1.bf16.msra.mxu0 0
      %1048 = vmatprep.subr.bf16.mxu0 0
      %1049 = vmatpush1.bf16.msra.mxu0 0
      %1050 = vmatprep.subr.bf16.mxu0 0
      %1051 = vmatpush1.bf16.msra.mxu0 0
      %1052 = vmatprep.subr.bf16.mxu0 0
      %1053 = vmatpush1.bf16.msra.mxu0 0
      %1054 = vmatprep.subr.bf16.mxu0 0
      %1055 = vmatpush1.bf16.msra.mxu0 0
      %1056 = vmatprep.subr.bf16.mxu0 0
      %1057 = vmatpush1.bf16.msra.mxu0 0
      %1058 = vmatprep.subr.bf16.mxu0 0
      %1059 = vmatpush1.bf16.msra.mxu0 0
      %1060 = vmatprep.subr.bf16.mxu0 0
      %1061 = vmatpush1.bf16.msra.mxu0 0
      %1062 = vmatprep.subr.bf16.mxu0 0
      %1063 = vmatpush1.bf16.msra.mxu0 0
      %1064 = vmatprep.mubr.bf16.mxu0 0
      %1065 = vmatmul.mubr.bf16.gmra.mrb[0].mxu0 %v982
      %v1066 = vpop.f32.mrb[0].mxu0
      %v1067 = vadd.f32 %v775, %v1066
      %v1068 = vpop.f32.mrb[0].mxu0
      %v1069 = vpop.f32.mrb[0].mxu0
      %v1070 = vadd.f32 %v778, %v1069
      %v1071 = vpop.f32.mrb[0].mxu0
      %1072 = vmatprep.mubr.bf16.mxu0 0
      %1073 = vmatmul.mubr.bf16.gmra.mrb[0].mxu0 %v985
      %v1074 = vpop.f32.mrb[0].mxu0
      %v1075 = vadd.f32 %v783, %v1074
      %v1076 = vpop.f32.mrb[0].mxu0
      %v1077 = vpop.f32.mrb[0].mxu0
      %v1078 = vadd.f32 %v786, %v1077
      %v1079 = vpop.f32.mrb[0].mxu0
      %1080 = vmatprep.mubr.bf16.mxu0 0
      %1081 = vmatmul.mubr.bf16.gmra.mrb[0].mxu0 %v988
      %v1082 = vpop.f32.mrb[0].mxu0
      %v1083 = vadd.f32 %v791, %v1082
      %v1084 = vpop.f32.mrb[0].mxu0
      %v1085 = vpop.f32.mrb[0].mxu0
      %v1086 = vadd.f32 %v794, %v1085
      %v1087 = vpop.f32.mrb[0].mxu0
      %1088 = vmatprep.mubr.bf16.mxu0 0
      %1089 = vmatmul.mubr.bf16.gmra.mrb[0].mxu0 %v991
      %v1090 = vpop.f32.mrb[0].mxu0
      %v1091 = vadd.f32 %v799, %v1090
      %v1092 = vpop.f32.mrb[0].mxu0
      %v1093 = vpop.f32.mrb[0].mxu0
      %v1094 = vadd.f32 %v802, %v1093
      %v1095 = vpop.f32.mrb[0].mxu0
      %1096 = vmatprep.mubr.bf16.mxu0 0
      %1097 = vmatmul.mubr.bf16.gmra.mrb[0].mxu0 %v994
      %v1098 = vpop.f32.mrb[0].mxu0
      %v1099 = vadd.f32 %v807, %v1098
      %v1100 = vpop.f32.mrb[0].mxu0
      %v1101 = vpop.f32.mrb[0].mxu0
      %v1102 = vadd.f32 %v810, %v1101
      %v1103 = vpop.f32.mrb[0].mxu0
      %1104 = vmatprep.mubr.bf16.mxu0 0
      %1105 = vmatmul.mubr.bf16.gmra.mrb[0].mxu0 %v997
      %v1106 = vpop.f32.mrb[0].mxu0
      %v1107 = vadd.f32 %v815, %v1106
      %v1108 = vpop.f32.mrb[0].mxu0
      %v1109 = vpop.f32.mrb[0].mxu0
      %v1110 = vadd.f32 %v818, %v1109
      %v1111 = vpop.f32.mrb[0].mxu0
      %1112 = vmatprep.mubr.bf16.mxu0 0
      %1113 = vmatmul.mubr.bf16.gmra.mrb[0].mxu0 %v1000
      %v1114 = vpop.f32.mrb[0].mxu0
      %v1115 = vadd.f32 %v823, %v1114
      %v1116 = vpop.f32.mrb[0].mxu0
      %v1117 = vpop.f32.mrb[0].mxu0
      %v1118 = vadd.f32 %v826, %v1117
      %v1119 = vpop.f32.mrb[0].mxu0
      %1120 = vmatprep.mubr.bf16.mxu0 0
      %1121 = vmatmul.mubr.bf16.gmra.mrb[0].mxu0 %v1003
      %v1122 = vpop.f32.mrb[0].mxu0
      %v1123 = vadd.f32 %v831, %v1122
      %v1124 = vpop.f32.mrb[0].mxu0
      %v1125 = vpop.f32.mrb[0].mxu0
      %v1126 = vadd.f32 %v834, %v1125
      %v1127 = vpop.f32.mrb[0].mxu0
      %1128 = vmatprep.mubr.bf16.mxu0 0
      %1129 = vmatmul.mubr.bf16.gmra.mrb[0].mxu0 %v1006
      %v1130 = vpop.f32.mrb[0].mxu0
      %v1131 = vadd.f32 %v839, %v1130
      %v1132 = vpop.f32.mrb[0].mxu0
      %v1133 = vpop.f32.mrb[0].mxu0
      %v1134 = vadd.f32 %v842, %v1133
      %v1135 = vpop.f32.mrb[0].mxu0
      %1136 = vmatprep.mubr.bf16.mxu0 0
      %1137 = vmatmul.mubr.bf16.gmra.mrb[0].mxu0 %v1009
      %v1138 = vpop.f32.mrb[0].mxu0
      %v1139 = vadd.f32 %v847, %v1138
      %v1140 = vpop.f32.mrb[0].mxu0
      %v1141 = vpop.f32.mrb[0].mxu0
      %v1142 = vadd.f32 %v850, %v1141
      %v1143 = vpop.f32.mrb[0].mxu0
      %1144 = vmatprep.mubr.bf16.mxu0 0
      %1145 = vmatmul.mubr.bf16.gmra.mrb[0].mxu0 %v1012
      %v1146 = vpop.f32.mrb[0].mxu0
      %v1147 = vadd.f32 %v855, %v1146
      %v1148 = vpop.f32.mrb[0].mxu0
      %v1149 = vpop.f32.mrb[0].mxu0
      %v1150 = vadd.f32 %v858, %v1149
      %v1151 = vpop.f32.mrb[0].mxu0
      %1152 = vmatprep.mubr.bf16.mxu0 0
      %1153 = vmatmul.mubr.bf16.gmra.mrb[0].mxu0 %v1015
      %v1154 = vpop.f32.mrb[0].mxu0
      %v1155 = vadd.f32 %v863, %v1154
      %v1156 = vpop.f32.mrb[0].mxu0
      %v1157 = vpop.f32.mrb[0].mxu0
      %v1158 = vadd.f32 %v866, %v1157
      %v1159 = vpop.f32.mrb[0].mxu0
      %1160 = vmatprep.mubr.bf16.mxu0 0
      %1161 = vmatmul.mubr.bf16.gmra.mrb[0].mxu0 %v1018
      %v1162 = vpop.f32.mrb[0].mxu0
      %v1163 = vadd.f32 %v871, %v1162
      %v1164 = vpop.f32.mrb[0].mxu0
      %v1165 = vpop.f32.mrb[0].mxu0
      %v1166 = vadd.f32 %v874, %v1165
      %v1167 = vpop.f32.mrb[0].mxu0
      %1168 = vmatprep.mubr.bf16.mxu0 0
      %1169 = vmatmul.mubr.bf16.gmra.mrb[0].mxu0 %v1021
      %v1170 = vpop.f32.mrb[0].mxu0
      %v1171 = vadd.f32 %v879, %v1170
      %v1172 = vpop.f32.mrb[0].mxu0
      %v1173 = vpop.f32.mrb[0].mxu0
      %v1174 = vadd.f32 %v882, %v1173
      %v1175 = vpop.f32.mrb[0].mxu0
      %1176 = vmatprep.mubr.bf16.mxu0 0
      %1177 = vmatmul.mubr.bf16.gmra.mrb[0].mxu0 %v1024
      %v1178 = vpop.f32.mrb[0].mxu0
      %v1179 = vadd.f32 %v887, %v1178
      %v1180 = vpop.f32.mrb[0].mxu0
      %v1181 = vpop.f32.mrb[0].mxu0
      %v1182 = vadd.f32 %v890, %v1181
      %v1183 = vpop.f32.mrb[0].mxu0
      %1184 = vmatprep.mubr.bf16.mxu0 0
      %1185 = vmatmul.mubr.bf16.gmra.mrb[0].mxu0 %v1027
      %v1186 = vpop.f32.mrb[0].mxu0
      %v1187 = vadd.f32 %v895, %v1186
      %v1188 = vpop.f32.mrb[0].mxu0
      %v1189 = vpop.f32.mrb[0].mxu0
      %v1190 = vadd.f32 %v898, %v1189
      %v1191 = vpop.f32.mrb[0].mxu0
      %1192 = vdwg.mxu0
      %v1193 = vld [vmem:[%s200] sm:$0xe]
      %v1194 = vld [vmem:[%s200 + $0xc] sm:$0xe]
      %v1195 = vld [vmem:[%s200 + $0x18] sm:$0xe]
      %v1196 = vld [vmem:[%s200 + $0x24] sm:$0xe]
      %v1197 = vld [vmem:[%s200 + $0x30] sm:$0xe]
      %v1198 = vld [vmem:[%s200 + $0x3c] sm:$0xe]
      %v1199 = vld [vmem:[%s200 + $0x48] sm:$0xe]
      %v1200 = vld [vmem:[%s200 + $0x54] sm:$0xe]
      %v1201 = vld [vmem:[%s200 + $0x60] sm:$0xe]
      %v1202 = vld [vmem:[%s200 + $0x6c] sm:$0xe]
      %v1203 = vld [vmem:[%s200 + $0x78] sm:$0xe]
      %v1204 = vld [vmem:[%s200 + $0x84] sm:$0xe]
      %v1205 = vld [vmem:[%s200 + $0x90] sm:$0xe]
      %v1206 = vld [vmem:[%s200 + $0x9c] sm:$0xe]
      %v1207 = vld [vmem:[%s200 + $0xa8] sm:$0xe]
      %v1208 = vld [vmem:[%s200 + $0xb4] sm:$0xe]
      %vm1241 = vcmask 1042432
      %vm1242 = vcmask 1046532
      %vm1243 = vmor %vm1241, %vm1242
      %v1244 = vrot.slane %v1193, 5
      %v1245 = vrot.slane %v1244, 4
      %v1246 = vrot.slane %v202, 5
      %v1247 = vsel %vm1243, %v1245, %v1246
      %v1248 = vrot.slane %v1246, 4
      %v1249 = vrot.slane %v234, 5
      %v1250 = vsel %vm1243, %v1248, %v1249
      %v1251 = vrot.slane %v1194, 5
      %v1252 = vrot.slane %v1251, 4
      %v1253 = vrot.slane %v204, 5
      %v1254 = vsel %vm1243, %v1252, %v1253
      %v1255 = vrot.slane %v1253, 4
      %v1256 = vrot.slane %v235, 5
      %v1257 = vsel %vm1243, %v1255, %v1256
      %v1258 = vrot.slane %v1195, 5
      %v1259 = vrot.slane %v1258, 4
      %v1260 = vrot.slane %v206, 5
      %v1261 = vsel %vm1243, %v1259, %v1260
      %v1262 = vrot.slane %v1260, 4
      %v1263 = vrot.slane %v236, 5
      %v1264 = vsel %vm1243, %v1262, %v1263
      %v1265 = vrot.slane %v1196, 5
      %v1266 = vrot.slane %v1265, 4
      %v1267 = vrot.slane %v208, 5
      %v1268 = vsel %vm1243, %v1266, %v1267
      %v1269 = vrot.slane %v1267, 4
      %v1270 = vrot.slane %v237, 5
      %v1271 = vsel %vm1243, %v1269, %v1270
      %v1272 = vrot.slane %v1197, 5
      %v1273 = vrot.slane %v1272, 4
      %v1274 = vrot.slane %v210, 5
      %v1275 = vsel %vm1243, %v1273, %v1274
      %v1276 = vrot.slane %v1274, 4
      %v1277 = vrot.slane %v238, 5
      %v1278 = vsel %vm1243, %v1276, %v1277
      %v1279 = vrot.slane %v1198, 5
      %v1280 = vrot.slane %v1279, 4
      %v1281 = vrot.slane %v212, 5
      %v1282 = vsel %vm1243, %v1280, %v1281
      %v1283 = vrot.slane %v1281, 4
      %v1284 = vrot.slane %v239, 5
      %v1285 = vsel %vm1243, %v1283, %v1284
      %v1286 = vrot.slane %v1199, 5
      %v1287 = vrot.slane %v1286, 4
      %v1288 = vrot.slane %v214, 5
      %v1289 = vsel %vm1243, %v1287, %v1288
      %v1290 = vrot.slane %v1288, 4
      %v1291 = vrot.slane %v240, 5
      %v1292 = vsel %vm1243, %v1290, %v1291
      %v1293 = vrot.slane %v1200, 5
      %v1294 = vrot.slane %v1293, 4
      %v1295 = vrot.slane %v216, 5
      %v1296 = vsel %vm1243, %v1294, %v1295
      %v1297 = vrot.slane %v1295, 4
      %v1298 = vrot.slane %v241, 5
      %v1299 = vsel %vm1243, %v1297, %v1298
      %v1300 = vrot.slane %v1201, 5
      %v1301 = vrot.slane %v1300, 4
      %v1302 = vrot.slane %v218, 5
      %v1303 = vsel %vm1243, %v1301, %v1302
      %v1304 = vrot.slane %v1302, 4
      %v1305 = vrot.slane %v242, 5
      %v1306 = vsel %vm1243, %v1304, %v1305
      %v1307 = vrot.slane %v1202, 5
      %v1308 = vrot.slane %v1307, 4
      %v1309 = vrot.slane %v220, 5
      %v1310 = vsel %vm1243, %v1308, %v1309
      %v1311 = vrot.slane %v1309, 4
      %v1312 = vrot.slane %v243, 5
      %v1313 = vsel %vm1243, %v1311, %v1312
      %v1314 = vrot.slane %v1203, 5
      %v1315 = vrot.slane %v1314, 4
      %v1316 = vrot.slane %v222, 5
      %v1317 = vsel %vm1243, %v1315, %v1316
      %v1318 = vrot.slane %v1316, 4
      %v1319 = vrot.slane %v244, 5
      %v1320 = vsel %vm1243, %v1318, %v1319
      %v1321 = vrot.slane %v1204, 5
      %v1322 = vrot.slane %v1321, 4
      %v1323 = vrot.slane %v224, 5
      %v1324 = vsel %vm1243, %v1322, %v1323
      %v1325 = vrot.slane %v1323, 4
      %v1326 = vrot.slane %v245, 5
      %v1327 = vsel %vm1243, %v1325, %v1326
      %v1328 = vrot.slane %v1205, 5
      %v1329 = vrot.slane %v1328, 4
      %v1330 = vrot.slane %v226, 5
      %v1331 = vsel %vm1243, %v1329, %v1330
      %v1332 = vrot.slane %v1330, 4
      %v1333 = vrot.slane %v246, 5
      %v1334 = vsel %vm1243, %v1332, %v1333
      %v1335 = vrot.slane %v1206, 5
      %v1336 = vrot.slane %v1335, 4
      %v1337 = vrot.slane %v228, 5
      %v1338 = vsel %vm1243, %v1336, %v1337
      %v1339 = vrot.slane %v1337, 4
      %v1340 = vrot.slane %v247, 5
      %v1341 = vsel %vm1243, %v1339, %v1340
      %v1342 = vrot.slane %v1207, 5
      %v1343 = vrot.slane %v1342, 4
      %v1344 = vrot.slane %v230, 5
      %v1345 = vsel %vm1243, %v1343, %v1344
      %v1346 = vrot.slane %v1344, 4
      %v1347 = vrot.slane %v248, 5
      %v1348 = vsel %vm1243, %v1346, %v1347
      %v1349 = vrot.slane %v1208, 5
      %v1350 = vrot.slane %v1349, 4
      %v1351 = vrot.slane %v232, 5
      %v1352 = vsel %vm1243, %v1350, %v1351
      %v1353 = vrot.slane %v1351, 4
      %v1354 = vrot.slane %v249, 5
      %v1355 = vsel %vm1243, %v1353, %v1354
      %s1356 = scalar_lea.vmem %s1, 4
      %v1357 = vld [vmem:[%s1356] sm:$0x3]
      %v1358 = vunpack.c.l.b16 %v1247
      %v1359 = vunpack.c.l.b16 %v1250
      %v1360 = vunpack.c.l.b16 %v1254
      %v1361 = vunpack.c.l.b16 %v1257
      %v1362 = vunpack.c.l.b16 %v1261
      %v1363 = vunpack.c.l.b16 %v1264
      %v1364 = vunpack.c.l.b16 %v1268
      %v1365 = vunpack.c.l.b16 %v1271
      %v1366 = vunpack.c.l.b16 %v1275
      %v1367 = vunpack.c.l.b16 %v1278
      %v1368 = vunpack.c.l.b16 %v1282
      %v1369 = vunpack.c.l.b16 %v1285
      %v1370 = vunpack.c.l.b16 %v1289
      %v1371 = vunpack.c.l.b16 %v1292
      %v1372 = vunpack.c.l.b16 %v1296
      %v1373 = vunpack.c.l.b16 %v1299
      %v1374 = vunpack.c.l.b16 %v1303
      %v1375 = vunpack.c.l.b16 %v1306
      %v1376 = vunpack.c.l.b16 %v1310
      %v1377 = vunpack.c.l.b16 %v1313
      %v1378 = vunpack.c.l.b16 %v1317
      %v1379 = vunpack.c.l.b16 %v1320
      %v1380 = vunpack.c.l.b16 %v1324
      %v1381 = vunpack.c.l.b16 %v1327
      %v1382 = vunpack.c.l.b16 %v1331
      %v1383 = vunpack.c.l.b16 %v1334
      %v1384 = vunpack.c.l.b16 %v1338
      %v1385 = vunpack.c.l.b16 %v1341
      %v1386 = vunpack.c.l.b16 %v1345
      %v1387 = vunpack.c.l.b16 %v1348
      %v1388 = vunpack.c.l.b16 %v1352
      %v1389 = vunpack.c.l.b16 %v1355
      %v1390 = vpack.c.b16 %v1359, %v1358
      %v1391 = vpack.c.b16 %v1361, %v1360
      %v1392 = vpack.c.b16 %v1363, %v1362
      %v1393 = vpack.c.b16 %v1365, %v1364
      %v1394 = vpack.c.b16 %v1367, %v1366
      %v1395 = vpack.c.b16 %v1369, %v1368
      %v1396 = vpack.c.b16 %v1371, %v1370
      %v1397 = vpack.c.b16 %v1373, %v1372
      %v1398 = vpack.c.b16 %v1375, %v1374
      %v1399 = vpack.c.b16 %v1377, %v1376
      %v1400 = vpack.c.b16 %v1379, %v1378
      %v1401 = vpack.c.b16 %v1381, %v1380
      %v1402 = vpack.c.b16 %v1383, %v1382
      %v1403 = vpack.c.b16 %v1385, %v1384
      %v1404 = vpack.c.b16 %v1387, %v1386
      %v1405 = vpack.c.b16 %v1389, %v1388
      %v1407 = vsel %vm687, %v1390, 0
      %v1410 = vsel %vm687, %v1391, 0
      %v1413 = vsel %vm687, %v1392, 0
      %v1416 = vsel %vm687, %v1393, 0
      %v1419 = vsel %vm687, %v1394, 0
      %v1422 = vsel %vm687, %v1395, 0
      %v1425 = vsel %vm687, %v1396, 0
      %v1428 = vsel %vm687, %v1397, 0
      %v1431 = vsel %vm687, %v1398, 0
      %v1434 = vsel %vm687, %v1399, 0
      %v1437 = vsel %vm687, %v1400, 0
      %v1440 = vsel %vm687, %v1401, 0
      %v1443 = vsel %vm687, %v1402, 0
      %v1446 = vsel %vm687, %v1403, 0
      %v1449 = vsel %vm687, %v1404, 0
      %v1452 = vsel %vm687, %v1405, 0
      %v1455 = vsel %vm736, %v1357, 0
      %1457 = vmatprep.subr.bf16.mxu0 0
      %1458 = vmatpush1.bf16.msra.mxu0 %v1455
      %1459 = vmatprep.subr.bf16.mxu0 0
      %1460 = vmatpush1.bf16.msra.mxu0 0
      %1461 = vmatprep.subr.bf16.mxu0 0
      %1462 = vmatpush1.bf16.msra.mxu0 0
      %1463 = vmatprep.subr.bf16.mxu0 0
      %1464 = vmatpush1.bf16.msra.mxu0 0
      %1465 = vmatprep.subr.bf16.mxu0 0
      %1466 = vmatpush1.bf16.msra.mxu0 0
      %1467 = vmatprep.subr.bf16.mxu0 0
      %1468 = vmatpush1.bf16.msra.mxu0 0
      %1469 = vmatprep.subr.bf16.mxu0 0
      %1470 = vmatpush1.bf16.msra.mxu0 0
      %1471 = vmatprep.subr.bf16.mxu0 0
      %1472 = vmatpush1.bf16.msra.mxu0 0
      %1473 = vmatprep.subr.bf16.mxu0 0
      %1474 = vmatpush1.bf16.msra.mxu0 0
      %1475 = vmatprep.subr.bf16.mxu0 0
      %1476 = vmatpush1.bf16.msra.mxu0 0
      %1477 = vmatprep.subr.bf16.mxu0 0
      %1478 = vmatpush1.bf16.msra.mxu0 0
      %1479 = vmatprep.subr.bf16.mxu0 0
      %1480 = vmatpush1.bf16.msra.mxu0 0
      %1481 = vmatprep.subr.bf16.mxu0 0
      %1482 = vmatpush1.bf16.msra.mxu0 0
      %1483 = vmatprep.subr.bf16.mxu0 0
      %1484 = vmatpush1.bf16.msra.mxu0 0
      %1485 = vmatprep.subr.bf16.mxu0 0
      %1486 = vmatpush1.bf16.msra.mxu0 0
      %1487 = vmatprep.subr.bf16.mxu0 0
      %1488 = vmatpush1.bf16.msra.mxu0 0
      %1489 = vmatprep.mubr.bf16.mxu0 0
      %1490 = vmatmul.mubr.bf16.gmra.mrb[0].mxu0 %v1407
      %v1491 = vpop.f32.mrb[0].mxu0
      %v1492 = vadd.f32 0.0, %v1491
      %v1493 = vpop.f32.mrb[0].mxu0
      %v1494 = vpop.f32.mrb[0].mxu0
      %v1495 = vadd.f32 0.0, %v1494
      %v1496 = vpop.f32.mrb[0].mxu0
      %1497 = vmatprep.mubr.bf16.mxu0 0
      %1498 = vmatmul.mubr.bf16.gmra.mrb[0].mxu0 %v1410
      %v1499 = vpop.f32.mrb[0].mxu0
      %v1500 = vadd.f32 0.0, %v1499
      %v1501 = vpop.f32.mrb[0].mxu0
      %v1502 = vpop.f32.mrb[0].mxu0
      %v1503 = vadd.f32 0.0, %v1502
      %v1504 = vpop.f32.mrb[0].mxu0
      %1505 = vmatprep.mubr.bf16.mxu0 0
      %1506 = vmatmul.mubr.bf16.gmra.mrb[0].mxu0 %v1413
      %v1507 = vpop.f32.mrb[0].mxu0
      %v1508 = vadd.f32 0.0, %v1507
      %v1509 = vpop.f32.mrb[0].mxu0
      %v1510 = vpop.f32.mrb[0].mxu0
      %v1511 = vadd.f32 0.0, %v1510
      %v1512 = vpop.f32.mrb[0].mxu0
      %1513 = vmatprep.mubr.bf16.mxu0 0
      %1514 = vmatmul.mubr.bf16.gmra.mrb[0].mxu0 %v1416
      %v1515 = vpop.f32.mrb[0].mxu0
      %v1516 = vadd.f32 0.0, %v1515
      %v1517 = vpop.f32.mrb[0].mxu0
      %v1518 = vpop.f32.mrb[0].mxu0
      %v1519 = vadd.f32 0.0, %v1518
      %v1520 = vpop.f32.mrb[0].mxu0
      %1521 = vmatprep.mubr.bf16.mxu0 0
      %1522 = vmatmul.mubr.bf16.gmra.mrb[0].mxu0 %v1419
      %v1523 = vpop.f32.mrb[0].mxu0
      %v1524 = vadd.f32 0.0, %v1523
      %v1525 = vpop.f32.mrb[0].mxu0
      %v1526 = vpop.f32.mrb[0].mxu0
      %v1527 = vadd.f32 0.0, %v1526
      %v1528 = vpop.f32.mrb[0].mxu0
      %1529 = vmatprep.mubr.bf16.mxu0 0
      %1530 = vmatmul.mubr.bf16.gmra.mrb[0].mxu0 %v1422
      %v1531 = vpop.f32.mrb[0].mxu0
      %v1532 = vadd.f32 0.0, %v1531
      %v1533 = vpop.f32.mrb[0].mxu0
      %v1534 = vpop.f32.mrb[0].mxu0
      %v1535 = vadd.f32 0.0, %v1534
      %v1536 = vpop.f32.mrb[0].mxu0
      %1537 = vmatprep.mubr.bf16.mxu0 0
      %1538 = vmatmul.mubr.bf16.gmra.mrb[0].mxu0 %v1425
      %v1539 = vpop.f32.mrb[0].mxu0
      %v1540 = vadd.f32 0.0, %v1539
      %v1541 = vpop.f32.mrb[0].mxu0
      %v1542 = vpop.f32.mrb[0].mxu0
      %v1543 = vadd.f32 0.0, %v1542
      %v1544 = vpop.f32.mrb[0].mxu0
      %1545 = vmatprep.mubr.bf16.mxu0 0
      %1546 = vmatmul.mubr.bf16.gmra.mrb[0].mxu0 %v1428
      %v1547 = vpop.f32.mrb[0].mxu0
      %v1548 = vadd.f32 0.0, %v1547
      %v1549 = vpop.f32.mrb[0].mxu0
      %v1550 = vpop.f32.mrb[0].mxu0
      %v1551 = vadd.f32 0.0, %v1550
      %v1552 = vpop.f32.mrb[0].mxu0
      %1553 = vmatprep.mubr.bf16.mxu0 0
      %1554 = vmatmul.mubr.bf16.gmra.mrb[0].mxu0 %v1431
      %v1555 = vpop.f32.mrb[0].mxu0
      %v1556 = vadd.f32 0.0, %v1555
      %v1557 = vpop.f32.mrb[0].mxu0
      %v1558 = vpop.f32.mrb[0].mxu0
      %v1559 = vadd.f32 0.0, %v1558
      %v1560 = vpop.f32.mrb[0].mxu0
      %1561 = vmatprep.mubr.bf16.mxu0 0
      %1562 = vmatmul.mubr.bf16.gmra.mrb[0].mxu0 %v1434
      %v1563 = vpop.f32.mrb[0].mxu0
      %v1564 = vadd.f32 0.0, %v1563
      %v1565 = vpop.f32.mrb[0].mxu0
      %v1566 = vpop.f32.mrb[0].mxu0
      %v1567 = vadd.f32 0.0, %v1566
      %v1568 = vpop.f32.mrb[0].mxu0
      %1569 = vmatprep.mubr.bf16.mxu0 0
      %1570 = vmatmul.mubr.bf16.gmra.mrb[0].mxu0 %v1437
      %v1571 = vpop.f32.mrb[0].mxu0
      %v1572 = vadd.f32 0.0, %v1571
      %v1573 = vpop.f32.mrb[0].mxu0
      %v1574 = vpop.f32.mrb[0].mxu0
      %v1575 = vadd.f32 0.0, %v1574
      %v1576 = vpop.f32.mrb[0].mxu0
      %1577 = vmatprep.mubr.bf16.mxu0 0
      %1578 = vmatmul.mubr.bf16.gmra.mrb[0].mxu0 %v1440
      %v1579 = vpop.f32.mrb[0].mxu0
      %v1580 = vadd.f32 0.0, %v1579
      %v1581 = vpop.f32.mrb[0].mxu0
      %v1582 = vpop.f32.mrb[0].mxu0
      %v1583 = vadd.f32 0.0, %v1582
      %v1584 = vpop.f32.mrb[0].mxu0
      %1585 = vmatprep.mubr.bf16.mxu0 0
      %1586 = vmatmul.mubr.bf16.gmra.mrb[0].mxu0 %v1443
      %v1587 = vpop.f32.mrb[0].mxu0
      %v1588 = vadd.f32 0.0, %v1587
      %v1589 = vpop.f32.mrb[0].mxu0
      %v1590 = vpop.f32.mrb[0].mxu0
      %v1591 = vadd.f32 0.0, %v1590
      %v1592 = vpop.f32.mrb[0].mxu0
      %1593 = vmatprep.mubr.bf16.mxu0 0
      %1594 = vmatmul.mubr.bf16.gmra.mrb[0].mxu0 %v1446
      %v1595 = vpop.f32.mrb[0].mxu0
      %v1596 = vadd.f32 0.0, %v1595
      %v1597 = vpop.f32.mrb[0].mxu0
      %v1598 = vpop.f32.mrb[0].mxu0
      %v1599 = vadd.f32 0.0, %v1598
      %v1600 = vpop.f32.mrb[0].mxu0
      %1601 = vmatprep.mubr.bf16.mxu0 0
      %1602 = vmatmul.mubr.bf16.gmra.mrb[0].mxu0 %v1449
      %v1603 = vpop.f32.mrb[0].mxu0
      %v1604 = vadd.f32 0.0, %v1603
      %v1605 = vpop.f32.mrb[0].mxu0
      %v1606 = vpop.f32.mrb[0].mxu0
      %v1607 = vadd.f32 0.0, %v1606
      %v1608 = vpop.f32.mrb[0].mxu0
      %1609 = vmatprep.mubr.bf16.mxu0 0
      %1610 = vmatmul.mubr.bf16.gmra.mrb[0].mxu0 %v1452
      %v1611 = vpop.f32.mrb[0].mxu0
      %v1612 = vadd.f32 0.0, %v1611
      %v1613 = vpop.f32.mrb[0].mxu0
      %v1614 = vpop.f32.mrb[0].mxu0
      %v1615 = vadd.f32 0.0, %v1614
      %v1616 = vpop.f32.mrb[0].mxu0
      %1617 = vdwg.mxu0
      %v1618 = vadd.f32 %v1067, %v1492
      %v1619 = vadd.f32 %v1070, %v1495
      %v1620 = vadd.f32 %v1075, %v1500
      %v1621 = vadd.f32 %v1078, %v1503
      %v1622 = vadd.f32 %v1083, %v1508
      %v1623 = vadd.f32 %v1086, %v1511
      %v1624 = vadd.f32 %v1091, %v1516
      %v1625 = vadd.f32 %v1094, %v1519
      %v1626 = vadd.f32 %v1099, %v1524
      %v1627 = vadd.f32 %v1102, %v1527
      %v1628 = vadd.f32 %v1107, %v1532
      %v1629 = vadd.f32 %v1110, %v1535
      %v1630 = vadd.f32 %v1115, %v1540
      %v1631 = vadd.f32 %v1118, %v1543
      %v1632 = vadd.f32 %v1123, %v1548
      %v1633 = vadd.f32 %v1126, %v1551
      %v1634 = vadd.f32 %v1131, %v1556
      %v1635 = vadd.f32 %v1134, %v1559
      %v1636 = vadd.f32 %v1139, %v1564
      %v1637 = vadd.f32 %v1142, %v1567
      %v1638 = vadd.f32 %v1147, %v1572
      %v1639 = vadd.f32 %v1150, %v1575
      %v1640 = vadd.f32 %v1155, %v1580
      %v1641 = vadd.f32 %v1158, %v1583
      %v1642 = vadd.f32 %v1163, %v1588
      %v1643 = vadd.f32 %v1166, %v1591
      %v1644 = vadd.f32 %v1171, %v1596
      %v1645 = vadd.f32 %v1174, %v1599
      %v1646 = vadd.f32 %v1179, %v1604
      %v1647 = vadd.f32 %v1182, %v1607
      %v1648 = vadd.f32 %v1187, %v1612
      %v1649 = vadd.f32 %v1190, %v1615
      %s1650 = sadd.s32 %s197, 1
      %s1651 = smul.u32 %s1650, 3
      %s1652 = smul.addr %s1651, 4
      %s1653 = scalar_lea.vmem %s184, %s1652
      %v1654 = vld [vmem:[%s1653] sm:$0xf]
      %v1655 = vld [vmem:[%s1653 + $0x4] sm:$0xf]
      %v1656 = vld [vmem:[%s1653 + $0xc] sm:$0xf]
      %v1657 = vld [vmem:[%s1653 + $0x10] sm:$0xf]
      %v1658 = vld [vmem:[%s1653 + $0x18] sm:$0xf]
      %v1659 = vld [vmem:[%s1653 + $0x1c] sm:$0xf]
      %v1660 = vld [vmem:[%s1653 + $0x24] sm:$0xf]
      %v1661 = vld [vmem:[%s1653 + $0x28] sm:$0xf]
      %v1662 = vld [vmem:[%s1653 + $0x30] sm:$0xf]
      %v1663 = vld [vmem:[%s1653 + $0x34] sm:$0xf]
      %v1664 = vld [vmem:[%s1653 + $0x3c] sm:$0xf]
      %v1665 = vld [vmem:[%s1653 + $0x40] sm:$0xf]
      %v1666 = vld [vmem:[%s1653 + $0x48] sm:$0xf]
      %v1667 = vld [vmem:[%s1653 + $0x4c] sm:$0xf]
      %v1668 = vld [vmem:[%s1653 + $0x54] sm:$0xf]
      %v1669 = vld [vmem:[%s1653 + $0x58] sm:$0xf]
      %v1670 = vld [vmem:[%s1653 + $0x60] sm:$0xf]
      %v1671 = vld [vmem:[%s1653 + $0x64] sm:$0xf]
      %v1672 = vld [vmem:[%s1653 + $0x6c] sm:$0xf]
      %v1673 = vld [vmem:[%s1653 + $0x70] sm:$0xf]
      %v1674 = vld [vmem:[%s1653 + $0x78] sm:$0xf]
      %v1675 = vld [vmem:[%s1653 + $0x7c] sm:$0xf]
      %v1676 = vld [vmem:[%s1653 + $0x84] sm:$0xf]
      %v1677 = vld [vmem:[%s1653 + $0x88] sm:$0xf]
      %v1678 = vld [vmem:[%s1653 + $0x90] sm:$0xf]
      %v1679 = vld [vmem:[%s1653 + $0x94] sm:$0xf]
      %v1680 = vld [vmem:[%s1653 + $0x9c] sm:$0xf]
      %v1681 = vld [vmem:[%s1653 + $0xa0] sm:$0xf]
      %v1682 = vld [vmem:[%s1653 + $0xa8] sm:$0xf]
      %v1683 = vld [vmem:[%s1653 + $0xac] sm:$0xf]
      %v1684 = vld [vmem:[%s1653 + $0xb4] sm:$0xf]
      %v1685 = vld [vmem:[%s1653 + $0xb8] sm:$0xf]
      %s1686 = scalar_lea.vmem %s1, 6
      %v1687 = vld [vmem:[%s1686] sm:$0x3]
      %v1720 = vunpack.c.l.b16 %v1654
      %v1721 = vunpack.c.l.b16 %v1655
      %v1722 = vunpack.c.l.b16 %v1656
      %v1723 = vunpack.c.l.b16 %v1657
      %v1724 = vunpack.c.l.b16 %v1658
      %v1725 = vunpack.c.l.b16 %v1659
      %v1726 = vunpack.c.l.b16 %v1660
      %v1727 = vunpack.c.l.b16 %v1661
      %v1728 = vunpack.c.l.b16 %v1662
      %v1729 = vunpack.c.l.b16 %v1663
      %v1730 = vunpack.c.l.b16 %v1664
      %v1731 = vunpack.c.l.b16 %v1665
      %v1732 = vunpack.c.l.b16 %v1666
      %v1733 = vunpack.c.l.b16 %v1667
      %v1734 = vunpack.c.l.b16 %v1668
      %v1735 = vunpack.c.l.b16 %v1669
      %v1736 = vunpack.c.l.b16 %v1670
      %v1737 = vunpack.c.l.b16 %v1671
      %v1738 = vunpack.c.l.b16 %v1672
      %v1739 = vunpack.c.l.b16 %v1673
      %v1740 = vunpack.c.l.b16 %v1674
      %v1741 = vunpack.c.l.b16 %v1675
      %v1742 = vunpack.c.l.b16 %v1676
      %v1743 = vunpack.c.l.b16 %v1677
      %v1744 = vunpack.c.l.b16 %v1678
      %v1745 = vunpack.c.l.b16 %v1679
      %v1746 = vunpack.c.l.b16 %v1680
      %v1747 = vunpack.c.l.b16 %v1681
      %v1748 = vunpack.c.l.b16 %v1682
      %v1749 = vunpack.c.l.b16 %v1683
      %v1750 = vunpack.c.l.b16 %v1684
      %v1751 = vunpack.c.l.b16 %v1685
      %v1752 = vpack.c.b16 %v1721, %v1720
      %v1753 = vpack.c.b16 %v1723, %v1722
      %v1754 = vpack.c.b16 %v1725, %v1724
      %v1755 = vpack.c.b16 %v1727, %v1726
      %v1756 = vpack.c.b16 %v1729, %v1728
      %v1757 = vpack.c.b16 %v1731, %v1730
      %v1758 = vpack.c.b16 %v1733, %v1732
      %v1759 = vpack.c.b16 %v1735, %v1734
      %v1760 = vpack.c.b16 %v1737, %v1736
      %v1761 = vpack.c.b16 %v1739, %v1738
      %v1762 = vpack.c.b16 %v1741, %v1740
      %v1763 = vpack.c.b16 %v1743, %v1742
      %v1764 = vpack.c.b16 %v1745, %v1744
      %v1765 = vpack.c.b16 %v1747, %v1746
      %v1766 = vpack.c.b16 %v1749, %v1748
      %v1767 = vpack.c.b16 %v1751, %v1750
      %v1769 = vsel %vm687, %v1752, 0
      %v1772 = vsel %vm687, %v1753, 0
      %v1775 = vsel %vm687, %v1754, 0
      %v1778 = vsel %vm687, %v1755, 0
      %v1781 = vsel %vm687, %v1756, 0
      %v1784 = vsel %vm687, %v1757, 0
      %v1787 = vsel %vm687, %v1758, 0
      %v1790 = vsel %vm687, %v1759, 0
      %v1793 = vsel %vm687, %v1760, 0
      %v1796 = vsel %vm687, %v1761, 0
      %v1799 = vsel %vm687, %v1762, 0
      %v1802 = vsel %vm687, %v1763, 0
      %v1805 = vsel %vm687, %v1764, 0
      %v1808 = vsel %vm687, %v1765, 0
      %v1811 = vsel %vm687, %v1766, 0
      %v1814 = vsel %vm687, %v1767, 0
      %v1817 = vsel %vm736, %v1687, 0
      %1819 = vmatprep.subr.bf16.mxu0 0
      %1820 = vmatpush1.bf16.msra.mxu0 %v1817
      %1821 = vmatprep.subr.bf16.mxu0 0
      %1822 = vmatpush1.bf16.msra.mxu0 0
      %1823 = vmatprep.subr.bf16.mxu0 0
      %1824 = vmatpush1.bf16.msra.mxu0 0
      %1825 = vmatprep.subr.bf16.mxu0 0
      %1826 = vmatpush1.bf16.msra.mxu0 0
      %1827 = vmatprep.subr.bf16.mxu0 0
      %1828 = vmatpush1.bf16.msra.mxu0 0
      %1829 = vmatprep.subr.bf16.mxu0 0
      %1830 = vmatpush1.bf16.msra.mxu0 0
      %1831 = vmatprep.subr.bf16.mxu0 0
      %1832 = vmatpush1.bf16.msra.mxu0 0
      %1833 = vmatprep.subr.bf16.mxu0 0
      %1834 = vmatpush1.bf16.msra.mxu0 0
      %1835 = vmatprep.subr.bf16.mxu0 0
      %1836 = vmatpush1.bf16.msra.mxu0 0
      %1837 = vmatprep.subr.bf16.mxu0 0
      %1838 = vmatpush1.bf16.msra.mxu0 0
      %1839 = vmatprep.subr.bf16.mxu0 0
      %1840 = vmatpush1.bf16.msra.mxu0 0
      %1841 = vmatprep.subr.bf16.mxu0 0
      %1842 = vmatpush1.bf16.msra.mxu0 0
      %1843 = vmatprep.subr.bf16.mxu0 0
      %1844 = vmatpush1.bf16.msra.mxu0 0
      %1845 = vmatprep.subr.bf16.mxu0 0
      %1846 = vmatpush1.bf16.msra.mxu0 0
      %1847 = vmatprep.subr.bf16.mxu0 0
      %1848 = vmatpush1.bf16.msra.mxu0 0
      %1849 = vmatprep.subr.bf16.mxu0 0
      %1850 = vmatpush1.bf16.msra.mxu0 0
      %1851 = vmatprep.mubr.bf16.mxu0 0
      %1852 = vmatmul.mubr.bf16.gmra.mrb[0].mxu0 %v1769
      %v1853 = vpop.f32.mrb[0].mxu0
      %v1854 = vadd.f32 0.0, %v1853
      %v1855 = vpop.f32.mrb[0].mxu0
      %v1856 = vpop.f32.mrb[0].mxu0
      %v1857 = vadd.f32 0.0, %v1856
      %v1858 = vpop.f32.mrb[0].mxu0
      %1859 = vmatprep.mubr.bf16.mxu0 0
      %1860 = vmatmul.mubr.bf16.gmra.mrb[0].mxu0 %v1772
      %v1861 = vpop.f32.mrb[0].mxu0
      %v1862 = vadd.f32 0.0, %v1861
      %v1863 = vpop.f32.mrb[0].mxu0
      %v1864 = vpop.f32.mrb[0].mxu0
      %v1865 = vadd.f32 0.0, %v1864
      %v1866 = vpop.f32.mrb[0].mxu0
      %1867 = vmatprep.mubr.bf16.mxu0 0
      %1868 = vmatmul.mubr.bf16.gmra.mrb[0].mxu0 %v1775
      %v1869 = vpop.f32.mrb[0].mxu0
      %v1870 = vadd.f32 0.0, %v1869
      %v1871 = vpop.f32.mrb[0].mxu0
      %v1872 = vpop.f32.mrb[0].mxu0
      %v1873 = vadd.f32 0.0, %v1872
      %v1874 = vpop.f32.mrb[0].mxu0
      %1875 = vmatprep.mubr.bf16.mxu0 0
      %1876 = vmatmul.mubr.bf16.gmra.mrb[0].mxu0 %v1778
      %v1877 = vpop.f32.mrb[0].mxu0
      %v1878 = vadd.f32 0.0, %v1877
      %v1879 = vpop.f32.mrb[0].mxu0
      %v1880 = vpop.f32.mrb[0].mxu0
      %v1881 = vadd.f32 0.0, %v1880
      %v1882 = vpop.f32.mrb[0].mxu0
      %1883 = vmatprep.mubr.bf16.mxu0 0
      %1884 = vmatmul.mubr.bf16.gmra.mrb[0].mxu0 %v1781
      %v1885 = vpop.f32.mrb[0].mxu0
      %v1886 = vadd.f32 0.0, %v1885
      %v1887 = vpop.f32.mrb[0].mxu0
      %v1888 = vpop.f32.mrb[0].mxu0
      %v1889 = vadd.f32 0.0, %v1888
      %v1890 = vpop.f32.mrb[0].mxu0
      %1891 = vmatprep.mubr.bf16.mxu0 0
      %1892 = vmatmul.mubr.bf16.gmra.mrb[0].mxu0 %v1784
      %v1893 = vpop.f32.mrb[0].mxu0
      %v1894 = vadd.f32 0.0, %v1893
      %v1895 = vpop.f32.mrb[0].mxu0
      %v1896 = vpop.f32.mrb[0].mxu0
      %v1897 = vadd.f32 0.0, %v1896
      %v1898 = vpop.f32.mrb[0].mxu0
      %1899 = vmatprep.mubr.bf16.mxu0 0
      %1900 = vmatmul.mubr.bf16.gmra.mrb[0].mxu0 %v1787
      %v1901 = vpop.f32.mrb[0].mxu0
      %v1902 = vadd.f32 0.0, %v1901
      %v1903 = vpop.f32.mrb[0].mxu0
      %v1904 = vpop.f32.mrb[0].mxu0
      %v1905 = vadd.f32 0.0, %v1904
      %v1906 = vpop.f32.mrb[0].mxu0
      %1907 = vmatprep.mubr.bf16.mxu0 0
      %1908 = vmatmul.mubr.bf16.gmra.mrb[0].mxu0 %v1790
      %v1909 = vpop.f32.mrb[0].mxu0
      %v1910 = vadd.f32 0.0, %v1909
      %v1911 = vpop.f32.mrb[0].mxu0
      %v1912 = vpop.f32.mrb[0].mxu0
      %v1913 = vadd.f32 0.0, %v1912
      %v1914 = vpop.f32.mrb[0].mxu0
      %1915 = vmatprep.mubr.bf16.mxu0 0
      %1916 = vmatmul.mubr.bf16.gmra.mrb[0].mxu0 %v1793
      %v1917 = vpop.f32.mrb[0].mxu0
      %v1918 = vadd.f32 0.0, %v1917
      %v1919 = vpop.f32.mrb[0].mxu0
      %v1920 = vpop.f32.mrb[0].mxu0
      %v1921 = vadd.f32 0.0, %v1920
      %v1922 = vpop.f32.mrb[0].mxu0
      %1923 = vmatprep.mubr.bf16.mxu0 0
      %1924 = vmatmul.mubr.bf16.gmra.mrb[0].mxu0 %v1796
      %v1925 = vpop.f32.mrb[0].mxu0
      %v1926 = vadd.f32 0.0, %v1925
      %v1927 = vpop.f32.mrb[0].mxu0
      %v1928 = vpop.f32.mrb[0].mxu0
      %v1929 = vadd.f32 0.0, %v1928
      %v1930 = vpop.f32.mrb[0].mxu0
      %1931 = vmatprep.mubr.bf16.mxu0 0
      %1932 = vmatmul.mubr.bf16.gmra.mrb[0].mxu0 %v1799
      %v1933 = vpop.f32.mrb[0].mxu0
      %v1934 = vadd.f32 0.0, %v1933
      %v1935 = vpop.f32.mrb[0].mxu0
      %v1936 = vpop.f32.mrb[0].mxu0
      %v1937 = vadd.f32 0.0, %v1936
      %v1938 = vpop.f32.mrb[0].mxu0
      %1939 = vmatprep.mubr.bf16.mxu0 0
      %1940 = vmatmul.mubr.bf16.gmra.mrb[0].mxu0 %v1802
      %v1941 = vpop.f32.mrb[0].mxu0
      %v1942 = vadd.f32 0.0, %v1941
      %v1943 = vpop.f32.mrb[0].mxu0
      %v1944 = vpop.f32.mrb[0].mxu0
      %v1945 = vadd.f32 0.0, %v1944
      %v1946 = vpop.f32.mrb[0].mxu0
      %1947 = vmatprep.mubr.bf16.mxu0 0
      %1948 = vmatmul.mubr.bf16.gmra.mrb[0].mxu0 %v1805
      %v1949 = vpop.f32.mrb[0].mxu0
      %v1950 = vadd.f32 0.0, %v1949
      %v1951 = vpop.f32.mrb[0].mxu0
      %v1952 = vpop.f32.mrb[0].mxu0
      %v1953 = vadd.f32 0.0, %v1952
      %v1954 = vpop.f32.mrb[0].mxu0
      %1955 = vmatprep.mubr.bf16.mxu0 0
      %1956 = vmatmul.mubr.bf16.gmra.mrb[0].mxu0 %v1808
      %v1957 = vpop.f32.mrb[0].mxu0
      %v1958 = vadd.f32 0.0, %v1957
      %v1959 = vpop.f32.mrb[0].mxu0
      %v1960 = vpop.f32.mrb[0].mxu0
      %v1961 = vadd.f32 0.0, %v1960
      %v1962 = vpop.f32.mrb[0].mxu0
      %1963 = vmatprep.mubr.bf16.mxu0 0
      %1964 = vmatmul.mubr.bf16.gmra.mrb[0].mxu0 %v1811
      %v1965 = vpop.f32.mrb[0].mxu0
      %v1966 = vadd.f32 0.0, %v1965
      %v1967 = vpop.f32.mrb[0].mxu0
      %v1968 = vpop.f32.mrb[0].mxu0
      %v1969 = vadd.f32 0.0, %v1968
      %v1970 = vpop.f32.mrb[0].mxu0
      %1971 = vmatprep.mubr.bf16.mxu0 0
      %1972 = vmatmul.mubr.bf16.gmra.mrb[0].mxu0 %v1814
      %v1973 = vpop.f32.mrb[0].mxu0
      %v1974 = vadd.f32 0.0, %v1973
      %v1975 = vpop.f32.mrb[0].mxu0
      %v1976 = vpop.f32.mrb[0].mxu0
      %v1977 = vadd.f32 0.0, %v1976
      %v1978 = vpop.f32.mrb[0].mxu0
      %1979 = vdwg.mxu0
      %v1980 = vadd.f32 %v1618, %v1854
      %v1981 = vadd.f32 %v1619, %v1857
      %v1982 = vadd.f32 %v1620, %v1862
      %v1983 = vadd.f32 %v1621, %v1865
      %v1984 = vadd.f32 %v1622, %v1870
      %v1985 = vadd.f32 %v1623, %v1873
      %v1986 = vadd.f32 %v1624, %v1878
      %v1987 = vadd.f32 %v1625, %v1881
      %v1988 = vadd.f32 %v1626, %v1886
      %v1989 = vadd.f32 %v1627, %v1889
      %v1990 = vadd.f32 %v1628, %v1894
      %v1991 = vadd.f32 %v1629, %v1897
      %v1992 = vadd.f32 %v1630, %v1902
      %v1993 = vadd.f32 %v1631, %v1905
      %v1994 = vadd.f32 %v1632, %v1910
      %v1995 = vadd.f32 %v1633, %v1913
      %v1996 = vadd.f32 %v1634, %v1918
      %v1997 = vadd.f32 %v1635, %v1921
      %v1998 = vadd.f32 %v1636, %v1926
      %v1999 = vadd.f32 %v1637, %v1929
      %v2000 = vadd.f32 %v1638, %v1934
      %v2001 = vadd.f32 %v1639, %v1937
      %v2002 = vadd.f32 %v1640, %v1942
      %v2003 = vadd.f32 %v1641, %v1945
      %v2004 = vadd.f32 %v1642, %v1950
      %v2005 = vadd.f32 %v1643, %v1953
      %v2006 = vadd.f32 %v1644, %v1958
      %v2007 = vadd.f32 %v1645, %v1961
      %v2008 = vadd.f32 %v1646, %v1966
      %v2009 = vadd.f32 %v1647, %v1969
      %v2010 = vadd.f32 %v1648, %v1974
      %v2011 = vadd.f32 %v1649, %v1977
      %v2012 = vld [vmem:[%s1653] sm:$0xf]
      %v2013 = vld [vmem:[%s1653 + $0x4] sm:$0xf]
      %v2014 = vld [vmem:[%s1653 + $0x8] sm:$0x1]
      %v2015 = vld [vmem:[%s1653 + $0xc] sm:$0xf]
      %v2016 = vld [vmem:[%s1653 + $0x10] sm:$0xf]
      %v2017 = vld [vmem:[%s1653 + $0x14] sm:$0x1]
      %v2018 = vld [vmem:[%s1653 + $0x18] sm:$0xf]
      %v2019 = vld [vmem:[%s1653 + $0x1c] sm:$0xf]
      %v2020 = vld [vmem:[%s1653 + $0x20] sm:$0x1]
      %v2021 = vld [vmem:[%s1653 + $0x24] sm:$0xf]
      %v2022 = vld [vmem:[%s1653 + $0x28] sm:$0xf]
      %v2023 = vld [vmem:[%s1653 + $0x2c] sm:$0x1]
      %v2024 = vld [vmem:[%s1653 + $0x30] sm:$0xf]
      %v2025 = vld [vmem:[%s1653 + $0x34] sm:$0xf]
      %v2026 = vld [vmem:[%s1653 + $0x38] sm:$0x1]
      %v2027 = vld [vmem:[%s1653 + $0x3c] sm:$0xf]
      %v2028 = vld [vmem:[%s1653 + $0x40] sm:$0xf]
      %v2029 = vld [vmem:[%s1653 + $0x44] sm:$0x1]
      %v2030 = vld [vmem:[%s1653 + $0x48] sm:$0xf]
      %v2031 = vld [vmem:[%s1653 + $0x4c] sm:$0xf]
      %v2032 = vld [vmem:[%s1653 + $0x50] sm:$0x1]
      %v2033 = vld [vmem:[%s1653 + $0x54] sm:$0xf]
      %v2034 = vld [vmem:[%s1653 + $0x58] sm:$0xf]
      %v2035 = vld [vmem:[%s1653 + $0x5c] sm:$0x1]
      %v2036 = vld [vmem:[%s1653 + $0x60] sm:$0xf]
      %v2037 = vld [vmem:[%s1653 + $0x64] sm:$0xf]
      %v2038 = vld [vmem:[%s1653 + $0x68] sm:$0x1]
      %v2039 = vld [vmem:[%s1653 + $0x6c] sm:$0xf]
      %v2040 = vld [vmem:[%s1653 + $0x70] sm:$0xf]
      %v2041 = vld [vmem:[%s1653 + $0x74] sm:$0x1]
      %v2042 = vld [vmem:[%s1653 + $0x78] sm:$0xf]
      %v2043 = vld [vmem:[%s1653 + $0x7c] sm:$0xf]
      %v2044 = vld [vmem:[%s1653 + $0x80] sm:$0x1]
      %v2045 = vld [vmem:[%s1653 + $0x84] sm:$0xf]
      %v2046 = vld [vmem:[%s1653 + $0x88] sm:$0xf]
      %v2047 = vld [vmem:[%s1653 + $0x8c] sm:$0x1]
      %v2048 = vld [vmem:[%s1653 + $0x90] sm:$0xf]
      %v2049 = vld [vmem:[%s1653 + $0x94] sm:$0xf]
      %v2050 = vld [vmem:[%s1653 + $0x98] sm:$0x1]
      %v2051 = vld [vmem:[%s1653 + $0x9c] sm:$0xf]
      %v2052 = vld [vmem:[%s1653 + $0xa0] sm:$0xf]
      %v2053 = vld [vmem:[%s1653 + $0xa4] sm:$0x1]
      %v2054 = vld [vmem:[%s1653 + $0xa8] sm:$0xf]
      %v2055 = vld [vmem:[%s1653 + $0xac] sm:$0xf]
      %v2056 = vld [vmem:[%s1653 + $0xb0] sm:$0x1]
      %v2057 = vld [vmem:[%s1653 + $0xb4] sm:$0xf]
      %v2058 = vld [vmem:[%s1653 + $0xb8] sm:$0xf]
      %v2059 = vld [vmem:[%s1653 + $0xbc] sm:$0x1]
      %v2061 = vshrl.u32 %v2012, 16
      %v2063 = vrot.slane %v2061, 4
      %v2064 = vshll.u32 %v2012, 16
      %v2066 = vrot.slane %v2064, 5
      %v2067 = vor.u32 %v2063, %v2066
      %v2068 = vrot.slane %v2067, 4
      %v2070 = vshll.u32 %v2013, 16
      %v2072 = vrot.slane %v2070, 5
      %v2073 = vsel %vm252, %v2068, %v2072
      %v2074 = vshrl.u32 %v2013, 16
      %v2076 = vrot.slane %v2074, 4
      %v2077 = vor.u32 %v2076, %v2072
      %v2078 = vrot.slane %v2077, 4
      %v2080 = vshll.u32 %v2014, 16
      %v2082 = vrot.slane %v2080, 5
      %v2083 = vsel %vm252, %v2078, %v2082
      %v2085 = vshrl.u32 %v2015, 16
      %v2087 = vrot.slane %v2085, 4
      %v2088 = vshll.u32 %v2015, 16
      %v2090 = vrot.slane %v2088, 5
      %v2091 = vor.u32 %v2087, %v2090
      %v2092 = vrot.slane %v2091, 4
      %v2094 = vshll.u32 %v2016, 16
      %v2096 = vrot.slane %v2094, 5
      %v2097 = vsel %vm252, %v2092, %v2096
      %v2098 = vshrl.u32 %v2016, 16
      %v2100 = vrot.slane %v2098, 4
      %v2101 = vor.u32 %v2100, %v2096
      %v2102 = vrot.slane %v2101, 4
      %v2104 = vshll.u32 %v2017, 16
      %v2106 = vrot.slane %v2104, 5
      %v2107 = vsel %vm252, %v2102, %v2106
      %v2109 = vshrl.u32 %v2018, 16
      %v2111 = vrot.slane %v2109, 4
      %v2112 = vshll.u32 %v2018, 16
      %v2114 = vrot.slane %v2112, 5
      %v2115 = vor.u32 %v2111, %v2114
      %v2116 = vrot.slane %v2115, 4
      %v2118 = vshll.u32 %v2019, 16
      %v2120 = vrot.slane %v2118, 5
      %v2121 = vsel %vm252, %v2116, %v2120
      %v2122 = vshrl.u32 %v2019, 16
      %v2124 = vrot.slane %v2122, 4
      %v2125 = vor.u32 %v2124, %v2120
      %v2126 = vrot.slane %v2125, 4
      %v2128 = vshll.u32 %v2020, 16
      %v2130 = vrot.slane %v2128, 5
      %v2131 = vsel %vm252, %v2126, %v2130
      %v2133 = vshrl.u32 %v2021, 16
      %v2135 = vrot.slane %v2133, 4
      %v2136 = vshll.u32 %v2021, 16
      %v2138 = vrot.slane %v2136, 5
      %v2139 = vor.u32 %v2135, %v2138
      %v2140 = vrot.slane %v2139, 4
      %v2142 = vshll.u32 %v2022, 16
      %v2144 = vrot.slane %v2142, 5
      %v2145 = vsel %vm252, %v2140, %v2144
      %v2146 = vshrl.u32 %v2022, 16
      %v2148 = vrot.slane %v2146, 4
      %v2149 = vor.u32 %v2148, %v2144
      %v2150 = vrot.slane %v2149, 4
      %v2152 = vshll.u32 %v2023, 16
      %v2154 = vrot.slane %v2152, 5
      %v2155 = vsel %vm252, %v2150, %v2154
      %v2157 = vshrl.u32 %v2024, 16
      %v2159 = vrot.slane %v2157, 4
      %v2160 = vshll.u32 %v2024, 16
      %v2162 = vrot.slane %v2160, 5
      %v2163 = vor.u32 %v2159, %v2162
      %v2164 = vrot.slane %v2163, 4
      %v2166 = vshll.u32 %v2025, 16
      %v2168 = vrot.slane %v2166, 5
      %v2169 = vsel %vm252, %v2164, %v2168
      %v2170 = vshrl.u32 %v2025, 16
      %v2172 = vrot.slane %v2170, 4
      %v2173 = vor.u32 %v2172, %v2168
      %v2174 = vrot.slane %v2173, 4
      %v2176 = vshll.u32 %v2026, 16
      %v2178 = vrot.slane %v2176, 5
      %v2179 = vsel %vm252, %v2174, %v2178
      %v2181 = vshrl.u32 %v2027, 16
      %v2183 = vrot.slane %v2181, 4
      %v2184 = vshll.u32 %v2027, 16
      %v2186 = vrot.slane %v2184, 5
      %v2187 = vor.u32 %v2183, %v2186
      %v2188 = vrot.slane %v2187, 4
      %v2190 = vshll.u32 %v2028, 16
      %v2192 = vrot.slane %v2190, 5
      %v2193 = vsel %vm252, %v2188, %v2192
      %v2194 = vshrl.u32 %v2028, 16
      %v2196 = vrot.slane %v2194, 4
      %v2197 = vor.u32 %v2196, %v2192
      %v2198 = vrot.slane %v2197, 4
      %v2200 = vshll.u32 %v2029, 16
      %v2202 = vrot.slane %v2200, 5
      %v2203 = vsel %vm252, %v2198, %v2202
      %v2205 = vshrl.u32 %v2030, 16
      %v2207 = vrot.slane %v2205, 4
      %v2208 = vshll.u32 %v2030, 16
      %v2210 = vrot.slane %v2208, 5
      %v2211 = vor.u32 %v2207, %v2210
      %v2212 = vrot.slane %v2211, 4
      %v2214 = vshll.u32 %v2031, 16
      %v2216 = vrot.slane %v2214, 5
      %v2217 = vsel %vm252, %v2212, %v2216
      %v2218 = vshrl.u32 %v2031, 16
      %v2220 = vrot.slane %v2218, 4
      %v2221 = vor.u32 %v2220, %v2216
      %v2222 = vrot.slane %v2221, 4
      %v2224 = vshll.u32 %v2032, 16
      %v2226 = vrot.slane %v2224, 5
      %v2227 = vsel %vm252, %v2222, %v2226
      %v2229 = vshrl.u32 %v2033, 16
      %v2231 = vrot.slane %v2229, 4
      %v2232 = vshll.u32 %v2033, 16
      %v2234 = vrot.slane %v2232, 5
      %v2235 = vor.u32 %v2231, %v2234
      %v2236 = vrot.slane %v2235, 4
      %v2238 = vshll.u32 %v2034, 16
      %v2240 = vrot.slane %v2238, 5
      %v2241 = vsel %vm252, %v2236, %v2240
      %v2242 = vshrl.u32 %v2034, 16
      %v2244 = vrot.slane %v2242, 4
      %v2245 = vor.u32 %v2244, %v2240
      %v2246 = vrot.slane %v2245, 4
      %v2248 = vshll.u32 %v2035, 16
      %v2250 = vrot.slane %v2248, 5
      %v2251 = vsel %vm252, %v2246, %v2250
      %v2253 = vshrl.u32 %v2036, 16
      %v2255 = vrot.slane %v2253, 4
      %v2256 = vshll.u32 %v2036, 16
      %v2258 = vrot.slane %v2256, 5
      %v2259 = vor.u32 %v2255, %v2258
      %v2260 = vrot.slane %v2259, 4
      %v2262 = vshll.u32 %v2037, 16
      %v2264 = vrot.slane %v2262, 5
      %v2265 = vsel %vm252, %v2260, %v2264
      %v2266 = vshrl.u32 %v2037, 16
      %v2268 = vrot.slane %v2266, 4
      %v2269 = vor.u32 %v2268, %v2264
      %v2270 = vrot.slane %v2269, 4
      %v2272 = vshll.u32 %v2038, 16
      %v2274 = vrot.slane %v2272, 5
      %v2275 = vsel %vm252, %v2270, %v2274
      %v2277 = vshrl.u32 %v2039, 16
      %v2279 = vrot.slane %v2277, 4
      %v2280 = vshll.u32 %v2039, 16
      %v2282 = vrot.slane %v2280, 5
      %v2283 = vor.u32 %v2279, %v2282
      %v2284 = vrot.slane %v2283, 4
      %v2286 = vshll.u32 %v2040, 16
      %v2288 = vrot.slane %v2286, 5
      %v2289 = vsel %vm252, %v2284, %v2288
      %v2290 = vshrl.u32 %v2040, 16
      %v2292 = vrot.slane %v2290, 4
      %v2293 = vor.u32 %v2292, %v2288
      %v2294 = vrot.slane %v2293, 4
      %v2296 = vshll.u32 %v2041, 16
      %v2298 = vrot.slane %v2296, 5
      %v2299 = vsel %vm252, %v2294, %v2298
      %v2301 = vshrl.u32 %v2042, 16
      %v2303 = vrot.slane %v2301, 4
      %v2304 = vshll.u32 %v2042, 16
      %v2306 = vrot.slane %v2304, 5
      %v2307 = vor.u32 %v2303, %v2306
      %v2308 = vrot.slane %v2307, 4
      %v2310 = vshll.u32 %v2043, 16
      %v2312 = vrot.slane %v2310, 5
      %v2313 = vsel %vm252, %v2308, %v2312
      %v2314 = vshrl.u32 %v2043, 16
      %v2316 = vrot.slane %v2314, 4
      %v2317 = vor.u32 %v2316, %v2312
      %v2318 = vrot.slane %v2317, 4
      %v2320 = vshll.u32 %v2044, 16
      %v2322 = vrot.slane %v2320, 5
      %v2323 = vsel %vm252, %v2318, %v2322
      %v2325 = vshrl.u32 %v2045, 16
      %v2327 = vrot.slane %v2325, 4
      %v2328 = vshll.u32 %v2045, 16
      %v2330 = vrot.slane %v2328, 5
      %v2331 = vor.u32 %v2327, %v2330
      %v2332 = vrot.slane %v2331, 4
      %v2334 = vshll.u32 %v2046, 16
      %v2336 = vrot.slane %v2334, 5
      %v2337 = vsel %vm252, %v2332, %v2336
      %v2338 = vshrl.u32 %v2046, 16
      %v2340 = vrot.slane %v2338, 4
      %v2341 = vor.u32 %v2340, %v2336
      %v2342 = vrot.slane %v2341, 4
      %v2344 = vshll.u32 %v2047, 16
      %v2346 = vrot.slane %v2344, 5
      %v2347 = vsel %vm252, %v2342, %v2346
      %v2349 = vshrl.u32 %v2048, 16
      %v2351 = vrot.slane %v2349, 4
      %v2352 = vshll.u32 %v2048, 16
      %v2354 = vrot.slane %v2352, 5
      %v2355 = vor.u32 %v2351, %v2354
      %v2356 = vrot.slane %v2355, 4
      %v2358 = vshll.u32 %v2049, 16
      %v2360 = vrot.slane %v2358, 5
      %v2361 = vsel %vm252, %v2356, %v2360
      %v2362 = vshrl.u32 %v2049, 16
      %v2364 = vrot.slane %v2362, 4
      %v2365 = vor.u32 %v2364, %v2360
      %v2366 = vrot.slane %v2365, 4
      %v2368 = vshll.u32 %v2050, 16
      %v2370 = vrot.slane %v2368, 5
      %v2371 = vsel %vm252, %v2366, %v2370
      %v2373 = vshrl.u32 %v2051, 16
      %v2375 = vrot.slane %v2373, 4
      %v2376 = vshll.u32 %v2051, 16
      %v2378 = vrot.slane %v2376, 5
      %v2379 = vor.u32 %v2375, %v2378
      %v2380 = vrot.slane %v2379, 4
      %v2382 = vshll.u32 %v2052, 16
      %v2384 = vrot.slane %v2382, 5
      %v2385 = vsel %vm252, %v2380, %v2384
      %v2386 = vshrl.u32 %v2052, 16
      %v2388 = vrot.slane %v2386, 4
      %v2389 = vor.u32 %v2388, %v2384
      %v2390 = vrot.slane %v2389, 4
      %v2392 = vshll.u32 %v2053, 16
      %v2394 = vrot.slane %v2392, 5
      %v2395 = vsel %vm252, %v2390, %v2394
      %v2397 = vshrl.u32 %v2054, 16
      %v2399 = vrot.slane %v2397, 4
      %v2400 = vshll.u32 %v2054, 16
      %v2402 = vrot.slane %v2400, 5
      %v2403 = vor.u32 %v2399, %v2402
      %v2404 = vrot.slane %v2403, 4
      %v2406 = vshll.u32 %v2055, 16
      %v2408 = vrot.slane %v2406, 5
      %v2409 = vsel %vm252, %v2404, %v2408
      %v2410 = vshrl.u32 %v2055, 16
      %v2412 = vrot.slane %v2410, 4
      %v2413 = vor.u32 %v2412, %v2408
      %v2414 = vrot.slane %v2413, 4
      %v2416 = vshll.u32 %v2056, 16
      %v2418 = vrot.slane %v2416, 5
      %v2419 = vsel %vm252, %v2414, %v2418
      %v2421 = vshrl.u32 %v2057, 16
      %v2423 = vrot.slane %v2421, 4
      %v2424 = vshll.u32 %v2057, 16
      %v2426 = vrot.slane %v2424, 5
      %v2427 = vor.u32 %v2423, %v2426
      %v2428 = vrot.slane %v2427, 4
      %v2430 = vshll.u32 %v2058, 16
      %v2432 = vrot.slane %v2430, 5
      %v2433 = vsel %vm252, %v2428, %v2432
      %v2434 = vshrl.u32 %v2058, 16
      %v2436 = vrot.slane %v2434, 4
      %v2437 = vor.u32 %v2436, %v2432
      %v2438 = vrot.slane %v2437, 4
      %v2440 = vshll.u32 %v2059, 16
      %v2442 = vrot.slane %v2440, 5
      %v2443 = vsel %vm252, %v2438, %v2442
      %s2444 = scalar_lea.vmem %s1, 8
      %v2445 = vld [vmem:[%s2444] sm:$0x3]
      %v2446 = vunpack.c.l.b16 %v2073
      %v2447 = vunpack.c.l.b16 %v2083
      %v2448 = vunpack.c.l.b16 %v2097
      %v2449 = vunpack.c.l.b16 %v2107
      %v2450 = vunpack.c.l.b16 %v2121
      %v2451 = vunpack.c.l.b16 %v2131
      %v2452 = vunpack.c.l.b16 %v2145
      %v2453 = vunpack.c.l.b16 %v2155
      %v2454 = vunpack.c.l.b16 %v2169
      %v2455 = vunpack.c.l.b16 %v2179
      %v2456 = vunpack.c.l.b16 %v2193
      %v2457 = vunpack.c.l.b16 %v2203
      %v2458 = vunpack.c.l.b16 %v2217
      %v2459 = vunpack.c.l.b16 %v2227
      %v2460 = vunpack.c.l.b16 %v2241
      %v2461 = vunpack.c.l.b16 %v2251
      %v2462 = vunpack.c.l.b16 %v2265
      %v2463 = vunpack.c.l.b16 %v2275
      %v2464 = vunpack.c.l.b16 %v2289
      %v2465 = vunpack.c.l.b16 %v2299
      %v2466 = vunpack.c.l.b16 %v2313
      %v2467 = vunpack.c.l.b16 %v2323
      %v2468 = vunpack.c.l.b16 %v2337
      %v2469 = vunpack.c.l.b16 %v2347
      %v2470 = vunpack.c.l.b16 %v2361
      %v2471 = vunpack.c.l.b16 %v2371
      %v2472 = vunpack.c.l.b16 %v2385
      %v2473 = vunpack.c.l.b16 %v2395
      %v2474 = vunpack.c.l.b16 %v2409
      %v2475 = vunpack.c.l.b16 %v2419
      %v2476 = vunpack.c.l.b16 %v2433
      %v2477 = vunpack.c.l.b16 %v2443
      %v2478 = vpack.c.b16 %v2447, %v2446
      %v2479 = vpack.c.b16 %v2449, %v2448
      %v2480 = vpack.c.b16 %v2451, %v2450
      %v2481 = vpack.c.b16 %v2453, %v2452
      %v2482 = vpack.c.b16 %v2455, %v2454
      %v2483 = vpack.c.b16 %v2457, %v2456
      %v2484 = vpack.c.b16 %v2459, %v2458
      %v2485 = vpack.c.b16 %v2461, %v2460
      %v2486 = vpack.c.b16 %v2463, %v2462
      %v2487 = vpack.c.b16 %v2465, %v2464
      %v2488 = vpack.c.b16 %v2467, %v2466
      %v2489 = vpack.c.b16 %v2469, %v2468
      %v2490 = vpack.c.b16 %v2471, %v2470
      %v2491 = vpack.c.b16 %v2473, %v2472
      %v2492 = vpack.c.b16 %v2475, %v2474
      %v2493 = vpack.c.b16 %v2477, %v2476
      %v2495 = vsel %vm687, %v2478, 0
      %v2498 = vsel %vm687, %v2479, 0
      %v2501 = vsel %vm687, %v2480, 0
      %v2504 = vsel %vm687, %v2481, 0
      %v2507 = vsel %vm687, %v2482, 0
      %v2510 = vsel %vm687, %v2483, 0
      %v2513 = vsel %vm687, %v2484, 0
      %v2516 = vsel %vm687, %v2485, 0
      %v2519 = vsel %vm687, %v2486, 0
      %v2522 = vsel %vm687, %v2487, 0
      %v2525 = vsel %vm687, %v2488, 0
      %v2528 = vsel %vm687, %v2489, 0
      %v2531 = vsel %vm687, %v2490, 0
      %v2534 = vsel %vm687, %v2491, 0
      %v2537 = vsel %vm687, %v2492, 0
      %v2540 = vsel %vm687, %v2493, 0
      %v2543 = vsel %vm736, %v2445, 0
      %2545 = vmatprep.subr.bf16.mxu0 0
      %2546 = vmatpush1.bf16.msra.mxu0 %v2543
      %2547 = vmatprep.subr.bf16.mxu0 0
      %2548 = vmatpush1.bf16.msra.mxu0 0
      %2549 = vmatprep.subr.bf16.mxu0 0
      %2550 = vmatpush1.bf16.msra.mxu0 0
      %2551 = vmatprep.subr.bf16.mxu0 0
      %2552 = vmatpush1.bf16.msra.mxu0 0
      %2553 = vmatprep.subr.bf16.mxu0 0
      %2554 = vmatpush1.bf16.msra.mxu0 0
      %2555 = vmatprep.subr.bf16.mxu0 0
      %2556 = vmatpush1.bf16.msra.mxu0 0
      %2557 = vmatprep.subr.bf16.mxu0 0
      %2558 = vmatpush1.bf16.msra.mxu0 0
      %2559 = vmatprep.subr.bf16.mxu0 0
      %2560 = vmatpush1.bf16.msra.mxu0 0
      %2561 = vmatprep.subr.bf16.mxu0 0
      %2562 = vmatpush1.bf16.msra.mxu0 0
      %2563 = vmatprep.subr.bf16.mxu0 0
      %2564 = vmatpush1.bf16.msra.mxu0 0
      %2565 = vmatprep.subr.bf16.mxu0 0
      %2566 = vmatpush1.bf16.msra.mxu0 0
      %2567 = vmatprep.subr.bf16.mxu0 0
      %2568 = vmatpush1.bf16.msra.mxu0 0
      %2569 = vmatprep.subr.bf16.mxu0 0
      %2570 = vmatpush1.bf16.msra.mxu0 0
      %2571 = vmatprep.subr.bf16.mxu0 0
      %2572 = vmatpush1.bf16.msra.mxu0 0
      %2573 = vmatprep.subr.bf16.mxu0 0
      %2574 = vmatpush1.bf16.msra.mxu0 0
      %2575 = vmatprep.subr.bf16.mxu0 0
      %2576 = vmatpush1.bf16.msra.mxu0 0
      %2577 = vmatprep.mubr.bf16.mxu0 0
      %2578 = vmatmul.mubr.bf16.gmra.mrb[0].mxu0 %v2495
      %v2579 = vpop.f32.mrb[0].mxu0
      %v2580 = vadd.f32 0.0, %v2579
      %v2581 = vpop.f32.mrb[0].mxu0
      %v2582 = vpop.f32.mrb[0].mxu0
      %v2583 = vadd.f32 0.0, %v2582
      %v2584 = vpop.f32.mrb[0].mxu0
      %2585 = vmatprep.mubr.bf16.mxu0 0
      %2586 = vmatmul.mubr.bf16.gmra.mrb[0].mxu0 %v2498
      %v2587 = vpop.f32.mrb[0].mxu0
      %v2588 = vadd.f32 0.0, %v2587
      %v2589 = vpop.f32.mrb[0].mxu0
      %v2590 = vpop.f32.mrb[0].mxu0
      %v2591 = vadd.f32 0.0, %v2590
      %v2592 = vpop.f32.mrb[0].mxu0
      %2593 = vmatprep.mubr.bf16.mxu0 0
      %2594 = vmatmul.mubr.bf16.gmra.mrb[0].mxu0 %v2501
      %v2595 = vpop.f32.mrb[0].mxu0
      %v2596 = vadd.f32 0.0, %v2595
      %v2597 = vpop.f32.mrb[0].mxu0
      %v2598 = vpop.f32.mrb[0].mxu0
      %v2599 = vadd.f32 0.0, %v2598
      %v2600 = vpop.f32.mrb[0].mxu0
      %2601 = vmatprep.mubr.bf16.mxu0 0
      %2602 = vmatmul.mubr.bf16.gmra.mrb[0].mxu0 %v2504
      %v2603 = vpop.f32.mrb[0].mxu0
      %v2604 = vadd.f32 0.0, %v2603
      %v2605 = vpop.f32.mrb[0].mxu0
      %v2606 = vpop.f32.mrb[0].mxu0
      %v2607 = vadd.f32 0.0, %v2606
      %v2608 = vpop.f32.mrb[0].mxu0
      %2609 = vmatprep.mubr.bf16.mxu0 0
      %2610 = vmatmul.mubr.bf16.gmra.mrb[0].mxu0 %v2507
      %v2611 = vpop.f32.mrb[0].mxu0
      %v2612 = vadd.f32 0.0, %v2611
      %v2613 = vpop.f32.mrb[0].mxu0
      %v2614 = vpop.f32.mrb[0].mxu0
      %v2615 = vadd.f32 0.0, %v2614
      %v2616 = vpop.f32.mrb[0].mxu0
      %2617 = vmatprep.mubr.bf16.mxu0 0
      %2618 = vmatmul.mubr.bf16.gmra.mrb[0].mxu0 %v2510
      %v2619 = vpop.f32.mrb[0].mxu0
      %v2620 = vadd.f32 0.0, %v2619
      %v2621 = vpop.f32.mrb[0].mxu0
      %v2622 = vpop.f32.mrb[0].mxu0
      %v2623 = vadd.f32 0.0, %v2622
      %v2624 = vpop.f32.mrb[0].mxu0
      %2625 = vmatprep.mubr.bf16.mxu0 0
      %2626 = vmatmul.mubr.bf16.gmra.mrb[0].mxu0 %v2513
      %v2627 = vpop.f32.mrb[0].mxu0
      %v2628 = vadd.f32 0.0, %v2627
      %v2629 = vpop.f32.mrb[0].mxu0
      %v2630 = vpop.f32.mrb[0].mxu0
      %v2631 = vadd.f32 0.0, %v2630
      %v2632 = vpop.f32.mrb[0].mxu0
      %2633 = vmatprep.mubr.bf16.mxu0 0
      %2634 = vmatmul.mubr.bf16.gmra.mrb[0].mxu0 %v2516
      %v2635 = vpop.f32.mrb[0].mxu0
      %v2636 = vadd.f32 0.0, %v2635
      %v2637 = vpop.f32.mrb[0].mxu0
      %v2638 = vpop.f32.mrb[0].mxu0
      %v2639 = vadd.f32 0.0, %v2638
      %v2640 = vpop.f32.mrb[0].mxu0
      %2641 = vmatprep.mubr.bf16.mxu0 0
      %2642 = vmatmul.mubr.bf16.gmra.mrb[0].mxu0 %v2519
      %v2643 = vpop.f32.mrb[0].mxu0
      %v2644 = vadd.f32 0.0, %v2643
      %v2645 = vpop.f32.mrb[0].mxu0
      %v2646 = vpop.f32.mrb[0].mxu0
      %v2647 = vadd.f32 0.0, %v2646
      %v2648 = vpop.f32.mrb[0].mxu0
      %2649 = vmatprep.mubr.bf16.mxu0 0
      %2650 = vmatmul.mubr.bf16.gmra.mrb[0].mxu0 %v2522
      %v2651 = vpop.f32.mrb[0].mxu0
      %v2652 = vadd.f32 0.0, %v2651
      %v2653 = vpop.f32.mrb[0].mxu0
      %v2654 = vpop.f32.mrb[0].mxu0
      %v2655 = vadd.f32 0.0, %v2654
      %v2656 = vpop.f32.mrb[0].mxu0
      %2657 = vmatprep.mubr.bf16.mxu0 0
      %2658 = vmatmul.mubr.bf16.gmra.mrb[0].mxu0 %v2525
      %v2659 = vpop.f32.mrb[0].mxu0
      %v2660 = vadd.f32 0.0, %v2659
      %v2661 = vpop.f32.mrb[0].mxu0
      %v2662 = vpop.f32.mrb[0].mxu0
      %v2663 = vadd.f32 0.0, %v2662
      %v2664 = vpop.f32.mrb[0].mxu0
      %2665 = vmatprep.mubr.bf16.mxu0 0
      %2666 = vmatmul.mubr.bf16.gmra.mrb[0].mxu0 %v2528
      %v2667 = vpop.f32.mrb[0].mxu0
      %v2668 = vadd.f32 0.0, %v2667
      %v2669 = vpop.f32.mrb[0].mxu0
      %v2670 = vpop.f32.mrb[0].mxu0
      %v2671 = vadd.f32 0.0, %v2670
      %v2672 = vpop.f32.mrb[0].mxu0
      %2673 = vmatprep.mubr.bf16.mxu0 0
      %2674 = vmatmul.mubr.bf16.gmra.mrb[0].mxu0 %v2531
      %v2675 = vpop.f32.mrb[0].mxu0
      %v2676 = vadd.f32 0.0, %v2675
      %v2677 = vpop.f32.mrb[0].mxu0
      %v2678 = vpop.f32.mrb[0].mxu0
      %v2679 = vadd.f32 0.0, %v2678
      %v2680 = vpop.f32.mrb[0].mxu0
      %2681 = vmatprep.mubr.bf16.mxu0 0
      %2682 = vmatmul.mubr.bf16.gmra.mrb[0].mxu0 %v2534
      %v2683 = vpop.f32.mrb[0].mxu0
      %v2684 = vadd.f32 0.0, %v2683
      %v2685 = vpop.f32.mrb[0].mxu0
      %v2686 = vpop.f32.mrb[0].mxu0
      %v2687 = vadd.f32 0.0, %v2686
      %v2688 = vpop.f32.mrb[0].mxu0
      %2689 = vmatprep.mubr.bf16.mxu0 0
      %2690 = vmatmul.mubr.bf16.gmra.mrb[0].mxu0 %v2537
      %v2691 = vpop.f32.mrb[0].mxu0
      %v2692 = vadd.f32 0.0, %v2691
      %v2693 = vpop.f32.mrb[0].mxu0
      %v2694 = vpop.f32.mrb[0].mxu0
      %v2695 = vadd.f32 0.0, %v2694
      %v2696 = vpop.f32.mrb[0].mxu0
      %2697 = vmatprep.mubr.bf16.mxu0 0
      %2698 = vmatmul.mubr.bf16.gmra.mrb[0].mxu0 %v2540
      %v2699 = vpop.f32.mrb[0].mxu0
      %v2700 = vadd.f32 0.0, %v2699
      %v2701 = vpop.f32.mrb[0].mxu0
      %v2702 = vpop.f32.mrb[0].mxu0
      %v2703 = vadd.f32 0.0, %v2702
      %v2704 = vpop.f32.mrb[0].mxu0
      %2705 = vdwg.mxu0
      %v2706 = vadd.f32 %v1980, %v2580
      %v2707 = vadd.f32 %v1981, %v2583
      %v2708 = vadd.f32 %v1982, %v2588
      %v2709 = vadd.f32 %v1983, %v2591
      %v2710 = vadd.f32 %v1984, %v2596
      %v2711 = vadd.f32 %v1985, %v2599
      %v2712 = vadd.f32 %v1986, %v2604
      %v2713 = vadd.f32 %v1987, %v2607
      %v2714 = vadd.f32 %v1988, %v2612
      %v2715 = vadd.f32 %v1989, %v2615
      %v2716 = vadd.f32 %v1990, %v2620
      %v2717 = vadd.f32 %v1991, %v2623
      %v2718 = vadd.f32 %v1992, %v2628
      %v2719 = vadd.f32 %v1993, %v2631
      %v2720 = vadd.f32 %v1994, %v2636
      %v2721 = vadd.f32 %v1995, %v2639
      %v2722 = vadd.f32 %v1996, %v2644
      %v2723 = vadd.f32 %v1997, %v2647
      %v2724 = vadd.f32 %v1998, %v2652
      %v2725 = vadd.f32 %v1999, %v2655
      %v2726 = vadd.f32 %v2000, %v2660
      %v2727 = vadd.f32 %v2001, %v2663
      %v2728 = vadd.f32 %v2002, %v2668
      %v2729 = vadd.f32 %v2003, %v2671
      %v2730 = vadd.f32 %v2004, %v2676
      %v2731 = vadd.f32 %v2005, %v2679
      %v2732 = vadd.f32 %v2006, %v2684
      %v2733 = vadd.f32 %v2007, %v2687
      %v2734 = vadd.f32 %v2008, %v2692
      %v2735 = vadd.f32 %v2009, %v2695
      %v2736 = vadd.f32 %v2010, %v2700
      %v2737 = vadd.f32 %v2011, %v2703
      %v2738 = vld [vmem:[%s1653] sm:$0xe]
      %v2739 = vld [vmem:[%s1653 + $0xc] sm:$0xe]
      %v2740 = vld [vmem:[%s1653 + $0x18] sm:$0xe]
      %v2741 = vld [vmem:[%s1653 + $0x24] sm:$0xe]
      %v2742 = vld [vmem:[%s1653 + $0x30] sm:$0xe]
      %v2743 = vld [vmem:[%s1653 + $0x3c] sm:$0xe]
      %v2744 = vld [vmem:[%s1653 + $0x48] sm:$0xe]
      %v2745 = vld [vmem:[%s1653 + $0x54] sm:$0xe]
      %v2746 = vld [vmem:[%s1653 + $0x60] sm:$0xe]
      %v2747 = vld [vmem:[%s1653 + $0x6c] sm:$0xe]
      %v2748 = vld [vmem:[%s1653 + $0x78] sm:$0xe]
      %v2749 = vld [vmem:[%s1653 + $0x84] sm:$0xe]
      %v2750 = vld [vmem:[%s1653 + $0x90] sm:$0xe]
      %v2751 = vld [vmem:[%s1653 + $0x9c] sm:$0xe]
      %v2752 = vld [vmem:[%s1653 + $0xa8] sm:$0xe]
      %v2753 = vld [vmem:[%s1653 + $0xb4] sm:$0xe]
      %v2802 = vrot.slane %v2738, 5
      %v2803 = vrot.slane %v2802, 4
      %v2804 = vrot.slane %v2013, 5
      %v2805 = vsel %vm1243, %v2803, %v2804
      %v2806 = vrot.slane %v2804, 4
      %v2807 = vrot.slane %v2014, 5
      %v2808 = vsel %vm1243, %v2806, %v2807
      %v2809 = vrot.slane %v2739, 5
      %v2810 = vrot.slane %v2809, 4
      %v2811 = vrot.slane %v2016, 5
      %v2812 = vsel %vm1243, %v2810, %v2811
      %v2813 = vrot.slane %v2811, 4
      %v2814 = vrot.slane %v2017, 5
      %v2815 = vsel %vm1243, %v2813, %v2814
      %v2816 = vrot.slane %v2740, 5
      %v2817 = vrot.slane %v2816, 4
      %v2818 = vrot.slane %v2019, 5
      %v2819 = vsel %vm1243, %v2817, %v2818
      %v2820 = vrot.slane %v2818, 4
      %v2821 = vrot.slane %v2020, 5
      %v2822 = vsel %vm1243, %v2820, %v2821
      %v2823 = vrot.slane %v2741, 5
      %v2824 = vrot.slane %v2823, 4
      %v2825 = vrot.slane %v2022, 5
      %v2826 = vsel %vm1243, %v2824, %v2825
      %v2827 = vrot.slane %v2825, 4
      %v2828 = vrot.slane %v2023, 5
      %v2829 = vsel %vm1243, %v2827, %v2828
      %v2830 = vrot.slane %v2742, 5
      %v2831 = vrot.slane %v2830, 4
      %v2832 = vrot.slane %v2025, 5
      %v2833 = vsel %vm1243, %v2831, %v2832
      %v2834 = vrot.slane %v2832, 4
      %v2835 = vrot.slane %v2026, 5
      %v2836 = vsel %vm1243, %v2834, %v2835
      %v2837 = vrot.slane %v2743, 5
      %v2838 = vrot.slane %v2837, 4
      %v2839 = vrot.slane %v2028, 5
      %v2840 = vsel %vm1243, %v2838, %v2839
      %v2841 = vrot.slane %v2839, 4
      %v2842 = vrot.slane %v2029, 5
      %v2843 = vsel %vm1243, %v2841, %v2842
      %v2844 = vrot.slane %v2744, 5
      %v2845 = vrot.slane %v2844, 4
      %v2846 = vrot.slane %v2031, 5
      %v2847 = vsel %vm1243, %v2845, %v2846
      %v2848 = vrot.slane %v2846, 4
      %v2849 = vrot.slane %v2032, 5
      %v2850 = vsel %vm1243, %v2848, %v2849
      %v2851 = vrot.slane %v2745, 5
      %v2852 = vrot.slane %v2851, 4
      %v2853 = vrot.slane %v2034, 5
      %v2854 = vsel %vm1243, %v2852, %v2853
      %v2855 = vrot.slane %v2853, 4
      %v2856 = vrot.slane %v2035, 5
      %v2857 = vsel %vm1243, %v2855, %v2856
      %v2858 = vrot.slane %v2746, 5
      %v2859 = vrot.slane %v2858, 4
      %v2860 = vrot.slane %v2037, 5
      %v2861 = vsel %vm1243, %v2859, %v2860
      %v2862 = vrot.slane %v2860, 4
      %v2863 = vrot.slane %v2038, 5
      %v2864 = vsel %vm1243, %v2862, %v2863
      %v2865 = vrot.slane %v2747, 5
      %v2866 = vrot.slane %v2865, 4
      %v2867 = vrot.slane %v2040, 5
      %v2868 = vsel %vm1243, %v2866, %v2867
      %v2869 = vrot.slane %v2867, 4
      %v2870 = vrot.slane %v2041, 5
      %v2871 = vsel %vm1243, %v2869, %v2870
      %v2872 = vrot.slane %v2748, 5
      %v2873 = vrot.slane %v2872, 4
      %v2874 = vrot.slane %v2043, 5
      %v2875 = vsel %vm1243, %v2873, %v2874
      %v2876 = vrot.slane %v2874, 4
      %v2877 = vrot.slane %v2044, 5
      %v2878 = vsel %vm1243, %v2876, %v2877
      %v2879 = vrot.slane %v2749, 5
      %v2880 = vrot.slane %v2879, 4
      %v2881 = vrot.slane %v2046, 5
      %v2882 = vsel %vm1243, %v2880, %v2881
      %v2883 = vrot.slane %v2881, 4
      %v2884 = vrot.slane %v2047, 5
      %v2885 = vsel %vm1243, %v2883, %v2884
      %v2886 = vrot.slane %v2750, 5
      %v2887 = vrot.slane %v2886, 4
      %v2888 = vrot.slane %v2049, 5
      %v2889 = vsel %vm1243, %v2887, %v2888
      %v2890 = vrot.slane %v2888, 4
      %v2891 = vrot.slane %v2050, 5
      %v2892 = vsel %vm1243, %v2890, %v2891
      %v2893 = vrot.slane %v2751, 5
      %v2894 = vrot.slane %v2893, 4
      %v2895 = vrot.slane %v2052, 5
      %v2896 = vsel %vm1243, %v2894, %v2895
      %v2897 = vrot.slane %v2895, 4
      %v2898 = vrot.slane %v2053, 5
      %v2899 = vsel %vm1243, %v2897, %v2898
      %v2900 = vrot.slane %v2752, 5
      %v2901 = vrot.slane %v2900, 4
      %v2902 = vrot.slane %v2055, 5
      %v2903 = vsel %vm1243, %v2901, %v2902
      %v2904 = vrot.slane %v2902, 4
      %v2905 = vrot.slane %v2056, 5
      %v2906 = vsel %vm1243, %v2904, %v2905
      %v2907 = vrot.slane %v2753, 5
      %v2908 = vrot.slane %v2907, 4
      %v2909 = vrot.slane %v2058, 5
      %v2910 = vsel %vm1243, %v2908, %v2909
      %v2911 = vrot.slane %v2909, 4
      %v2912 = vrot.slane %v2059, 5
      %v2913 = vsel %vm1243, %v2911, %v2912
      %s2914 = scalar_lea.vmem %s1, 10
      %v2915 = vld [vmem:[%s2914] sm:$0x3]
      %v2916 = vunpack.c.l.b16 %v2805
      %v2917 = vunpack.c.l.b16 %v2808
      %v2918 = vunpack.c.l.b16 %v2812
      %v2919 = vunpack.c.l.b16 %v2815
      %v2920 = vunpack.c.l.b16 %v2819
      %v2921 = vunpack.c.l.b16 %v2822
      %v2922 = vunpack.c.l.b16 %v2826
      %v2923 = vunpack.c.l.b16 %v2829
      %v2924 = vunpack.c.l.b16 %v2833
      %v2925 = vunpack.c.l.b16 %v2836
      %v2926 = vunpack.c.l.b16 %v2840
      %v2927 = vunpack.c.l.b16 %v2843
      %v2928 = vunpack.c.l.b16 %v2847
      %v2929 = vunpack.c.l.b16 %v2850
      %v2930 = vunpack.c.l.b16 %v2854
      %v2931 = vunpack.c.l.b16 %v2857
      %v2932 = vunpack.c.l.b16 %v2861
      %v2933 = vunpack.c.l.b16 %v2864
      %v2934 = vunpack.c.l.b16 %v2868
      %v2935 = vunpack.c.l.b16 %v2871
      %v2936 = vunpack.c.l.b16 %v2875
      %v2937 = vunpack.c.l.b16 %v2878
      %v2938 = vunpack.c.l.b16 %v2882
      %v2939 = vunpack.c.l.b16 %v2885
      %v2940 = vunpack.c.l.b16 %v2889
      %v2941 = vunpack.c.l.b16 %v2892
      %v2942 = vunpack.c.l.b16 %v2896
      %v2943 = vunpack.c.l.b16 %v2899
      %v2944 = vunpack.c.l.b16 %v2903
      %v2945 = vunpack.c.l.b16 %v2906
      %v2946 = vunpack.c.l.b16 %v2910
      %v2947 = vunpack.c.l.b16 %v2913
      %v2948 = vpack.c.b16 %v2917, %v2916
      %v2949 = vpack.c.b16 %v2919, %v2918
      %v2950 = vpack.c.b16 %v2921, %v2920
      %v2951 = vpack.c.b16 %v2923, %v2922
      %v2952 = vpack.c.b16 %v2925, %v2924
      %v2953 = vpack.c.b16 %v2927, %v2926
      %v2954 = vpack.c.b16 %v2929, %v2928
      %v2955 = vpack.c.b16 %v2931, %v2930
      %v2956 = vpack.c.b16 %v2933, %v2932
      %v2957 = vpack.c.b16 %v2935, %v2934
      %v2958 = vpack.c.b16 %v2937, %v2936
      %v2959 = vpack.c.b16 %v2939, %v2938
      %v2960 = vpack.c.b16 %v2941, %v2940
      %v2961 = vpack.c.b16 %v2943, %v2942
      %v2962 = vpack.c.b16 %v2945, %v2944
      %v2963 = vpack.c.b16 %v2947, %v2946
      %v2965 = vsel %vm687, %v2948, 0
      %v2968 = vsel %vm687, %v2949, 0
      %v2971 = vsel %vm687, %v2950, 0
      %v2974 = vsel %vm687, %v2951, 0
      %v2977 = vsel %vm687, %v2952, 0
      %v2980 = vsel %vm687, %v2953, 0
      %v2983 = vsel %vm687, %v2954, 0
      %v2986 = vsel %vm687, %v2955, 0
      %v2989 = vsel %vm687, %v2956, 0
      %v2992 = vsel %vm687, %v2957, 0
      %v2995 = vsel %vm687, %v2958, 0
      %v2998 = vsel %vm687, %v2959, 0
      %v3001 = vsel %vm687, %v2960, 0
      %v3004 = vsel %vm687, %v2961, 0
      %v3007 = vsel %vm687, %v2962, 0
      %v3010 = vsel %vm687, %v2963, 0
      %v3013 = vsel %vm736, %v2915, 0
      %3015 = vmatprep.subr.bf16.mxu0 0
      %3016 = vmatpush1.bf16.msra.mxu0 %v3013
      %3017 = vmatprep.subr.bf16.mxu0 0
      %3018 = vmatpush1.bf16.msra.mxu0 0
      %3019 = vmatprep.subr.bf16.mxu0 0
      %3020 = vmatpush1.bf16.msra.mxu0 0
      %3021 = vmatprep.subr.bf16.mxu0 0
      %3022 = vmatpush1.bf16.msra.mxu0 0
      %3023 = vmatprep.subr.bf16.mxu0 0
      %3024 = vmatpush1.bf16.msra.mxu0 0
      %3025 = vmatprep.subr.bf16.mxu0 0
      %3026 = vmatpush1.bf16.msra.mxu0 0
      %3027 = vmatprep.subr.bf16.mxu0 0
      %3028 = vmatpush1.bf16.msra.mxu0 0
      %3029 = vmatprep.subr.bf16.mxu0 0
      %3030 = vmatpush1.bf16.msra.mxu0 0
      %3031 = vmatprep.subr.bf16.mxu0 0
      %3032 = vmatpush1.bf16.msra.mxu0 0
      %3033 = vmatprep.subr.bf16.mxu0 0
      %3034 = vmatpush1.bf16.msra.mxu0 0
      %3035 = vmatprep.subr.bf16.mxu0 0
      %3036 = vmatpush1.bf16.msra.mxu0 0
      %3037 = vmatprep.subr.bf16.mxu0 0
      %3038 = vmatpush1.bf16.msra.mxu0 0
      %3039 = vmatprep.subr.bf16.mxu0 0
      %3040 = vmatpush1.bf16.msra.mxu0 0
      %3041 = vmatprep.subr.bf16.mxu0 0
      %3042 = vmatpush1.bf16.msra.mxu0 0
      %3043 = vmatprep.subr.bf16.mxu0 0
      %3044 = vmatpush1.bf16.msra.mxu0 0
      %3045 = vmatprep.subr.bf16.mxu0 0
      %3046 = vmatpush1.bf16.msra.mxu0 0
      %3047 = vmatprep.mubr.bf16.mxu0 0
      %3048 = vmatmul.mubr.bf16.gmra.mrb[0].mxu0 %v2965
      %v3049 = vpop.f32.mrb[0].mxu0
      %v3050 = vadd.f32 0.0, %v3049
      %v3051 = vpop.f32.mrb[0].mxu0
      %v3052 = vpop.f32.mrb[0].mxu0
      %v3053 = vadd.f32 0.0, %v3052
      %v3054 = vpop.f32.mrb[0].mxu0
      %3055 = vmatprep.mubr.bf16.mxu0 0
      %3056 = vmatmul.mubr.bf16.gmra.mrb[0].mxu0 %v2968
      %v3057 = vpop.f32.mrb[0].mxu0
      %v3058 = vadd.f32 0.0, %v3057
      %v3059 = vpop.f32.mrb[0].mxu0
      %v3060 = vpop.f32.mrb[0].mxu0
      %v3061 = vadd.f32 0.0, %v3060
      %v3062 = vpop.f32.mrb[0].mxu0
      %3063 = vmatprep.mubr.bf16.mxu0 0
      %3064 = vmatmul.mubr.bf16.gmra.mrb[0].mxu0 %v2971
      %v3065 = vpop.f32.mrb[0].mxu0
      %v3066 = vadd.f32 0.0, %v3065
      %v3067 = vpop.f32.mrb[0].mxu0
      %v3068 = vpop.f32.mrb[0].mxu0
      %v3069 = vadd.f32 0.0, %v3068
      %v3070 = vpop.f32.mrb[0].mxu0
      %3071 = vmatprep.mubr.bf16.mxu0 0
      %3072 = vmatmul.mubr.bf16.gmra.mrb[0].mxu0 %v2974
      %v3073 = vpop.f32.mrb[0].mxu0
      %v3074 = vadd.f32 0.0, %v3073
      %v3075 = vpop.f32.mrb[0].mxu0
      %v3076 = vpop.f32.mrb[0].mxu0
      %v3077 = vadd.f32 0.0, %v3076
      %v3078 = vpop.f32.mrb[0].mxu0
      %3079 = vmatprep.mubr.bf16.mxu0 0
      %3080 = vmatmul.mubr.bf16.gmra.mrb[0].mxu0 %v2977
      %v3081 = vpop.f32.mrb[0].mxu0
      %v3082 = vadd.f32 0.0, %v3081
      %v3083 = vpop.f32.mrb[0].mxu0
      %v3084 = vpop.f32.mrb[0].mxu0
      %v3085 = vadd.f32 0.0, %v3084
      %v3086 = vpop.f32.mrb[0].mxu0
      %3087 = vmatprep.mubr.bf16.mxu0 0
      %3088 = vmatmul.mubr.bf16.gmra.mrb[0].mxu0 %v2980
      %v3089 = vpop.f32.mrb[0].mxu0
      %v3090 = vadd.f32 0.0, %v3089
      %v3091 = vpop.f32.mrb[0].mxu0
      %v3092 = vpop.f32.mrb[0].mxu0
      %v3093 = vadd.f32 0.0, %v3092
      %v3094 = vpop.f32.mrb[0].mxu0
      %3095 = vmatprep.mubr.bf16.mxu0 0
      %3096 = vmatmul.mubr.bf16.gmra.mrb[0].mxu0 %v2983
      %v3097 = vpop.f32.mrb[0].mxu0
      %v3098 = vadd.f32 0.0, %v3097
      %v3099 = vpop.f32.mrb[0].mxu0
      %v3100 = vpop.f32.mrb[0].mxu0
      %v3101 = vadd.f32 0.0, %v3100
      %v3102 = vpop.f32.mrb[0].mxu0
      %3103 = vmatprep.mubr.bf16.mxu0 0
      %3104 = vmatmul.mubr.bf16.gmra.mrb[0].mxu0 %v2986
      %v3105 = vpop.f32.mrb[0].mxu0
      %v3106 = vadd.f32 0.0, %v3105
      %v3107 = vpop.f32.mrb[0].mxu0
      %v3108 = vpop.f32.mrb[0].mxu0
      %v3109 = vadd.f32 0.0, %v3108
      %v3110 = vpop.f32.mrb[0].mxu0
      %3111 = vmatprep.mubr.bf16.mxu0 0
      %3112 = vmatmul.mubr.bf16.gmra.mrb[0].mxu0 %v2989
      %v3113 = vpop.f32.mrb[0].mxu0
      %v3114 = vadd.f32 0.0, %v3113
      %v3115 = vpop.f32.mrb[0].mxu0
      %v3116 = vpop.f32.mrb[0].mxu0
      %v3117 = vadd.f32 0.0, %v3116
      %v3118 = vpop.f32.mrb[0].mxu0
      %3119 = vmatprep.mubr.bf16.mxu0 0
      %3120 = vmatmul.mubr.bf16.gmra.mrb[0].mxu0 %v2992
      %v3121 = vpop.f32.mrb[0].mxu0
      %v3122 = vadd.f32 0.0, %v3121
      %v3123 = vpop.f32.mrb[0].mxu0
      %v3124 = vpop.f32.mrb[0].mxu0
      %v3125 = vadd.f32 0.0, %v3124
      %v3126 = vpop.f32.mrb[0].mxu0
      %3127 = vmatprep.mubr.bf16.mxu0 0
      %3128 = vmatmul.mubr.bf16.gmra.mrb[0].mxu0 %v2995
      %v3129 = vpop.f32.mrb[0].mxu0
      %v3130 = vadd.f32 0.0, %v3129
      %v3131 = vpop.f32.mrb[0].mxu0
      %v3132 = vpop.f32.mrb[0].mxu0
      %v3133 = vadd.f32 0.0, %v3132
      %v3134 = vpop.f32.mrb[0].mxu0
      %3135 = vmatprep.mubr.bf16.mxu0 0
      %3136 = vmatmul.mubr.bf16.gmra.mrb[0].mxu0 %v2998
      %v3137 = vpop.f32.mrb[0].mxu0
      %v3138 = vadd.f32 0.0, %v3137
      %v3139 = vpop.f32.mrb[0].mxu0
      %v3140 = vpop.f32.mrb[0].mxu0
      %v3141 = vadd.f32 0.0, %v3140
      %v3142 = vpop.f32.mrb[0].mxu0
      %3143 = vmatprep.mubr.bf16.mxu0 0
      %3144 = vmatmul.mubr.bf16.gmra.mrb[0].mxu0 %v3001
      %v3145 = vpop.f32.mrb[0].mxu0
      %v3146 = vadd.f32 0.0, %v3145
      %v3147 = vpop.f32.mrb[0].mxu0
      %v3148 = vpop.f32.mrb[0].mxu0
      %v3149 = vadd.f32 0.0, %v3148
      %v3150 = vpop.f32.mrb[0].mxu0
      %3151 = vmatprep.mubr.bf16.mxu0 0
      %3152 = vmatmul.mubr.bf16.gmra.mrb[0].mxu0 %v3004
      %v3153 = vpop.f32.mrb[0].mxu0
      %v3154 = vadd.f32 0.0, %v3153
      %v3155 = vpop.f32.mrb[0].mxu0
      %v3156 = vpop.f32.mrb[0].mxu0
      %v3157 = vadd.f32 0.0, %v3156
      %v3158 = vpop.f32.mrb[0].mxu0
      %3159 = vmatprep.mubr.bf16.mxu0 0
      %3160 = vmatmul.mubr.bf16.gmra.mrb[0].mxu0 %v3007
      %v3161 = vpop.f32.mrb[0].mxu0
      %v3162 = vadd.f32 0.0, %v3161
      %v3163 = vpop.f32.mrb[0].mxu0
      %v3164 = vpop.f32.mrb[0].mxu0
      %v3165 = vadd.f32 0.0, %v3164
      %v3166 = vpop.f32.mrb[0].mxu0
      %3167 = vmatprep.mubr.bf16.mxu0 0
      %3168 = vmatmul.mubr.bf16.gmra.mrb[0].mxu0 %v3010
      %v3169 = vpop.f32.mrb[0].mxu0
      %v3170 = vadd.f32 0.0, %v3169
      %v3171 = vpop.f32.mrb[0].mxu0
      %v3172 = vpop.f32.mrb[0].mxu0
      %v3173 = vadd.f32 0.0, %v3172
      %v3174 = vpop.f32.mrb[0].mxu0
      %3175 = vdwg.mxu0
      %v3176 = vadd.f32 %v2706, %v3050
      %v3177 = vadd.f32 %v2707, %v3053
      %v3178 = vadd.f32 %v2708, %v3058
      %v3179 = vadd.f32 %v2709, %v3061
      %v3180 = vadd.f32 %v2710, %v3066
      %v3181 = vadd.f32 %v2711, %v3069
      %v3182 = vadd.f32 %v2712, %v3074
      %v3183 = vadd.f32 %v2713, %v3077
      %v3184 = vadd.f32 %v2714, %v3082
      %v3185 = vadd.f32 %v2715, %v3085
      %v3186 = vadd.f32 %v2716, %v3090
      %v3187 = vadd.f32 %v2717, %v3093
      %v3188 = vadd.f32 %v2718, %v3098
      %v3189 = vadd.f32 %v2719, %v3101
      %v3190 = vadd.f32 %v2720, %v3106
      %v3191 = vadd.f32 %v2721, %v3109
      %v3192 = vadd.f32 %v2722, %v3114
      %v3193 = vadd.f32 %v2723, %v3117
      %v3194 = vadd.f32 %v2724, %v3122
      %v3195 = vadd.f32 %v2725, %v3125
      %v3196 = vadd.f32 %v2726, %v3130
      %v3197 = vadd.f32 %v2727, %v3133
      %v3198 = vadd.f32 %v2728, %v3138
      %v3199 = vadd.f32 %v2729, %v3141
      %v3200 = vadd.f32 %v2730, %v3146
      %v3201 = vadd.f32 %v2731, %v3149
      %v3202 = vadd.f32 %v2732, %v3154
      %v3203 = vadd.f32 %v2733, %v3157
      %v3204 = vadd.f32 %v2734, %v3162
      %v3205 = vadd.f32 %v2735, %v3165
      %v3206 = vadd.f32 %v2736, %v3170
      %v3207 = vadd.f32 %v2737, %v3173
      %s3208 = sadd.s32 %s197, 2
      %s3209 = smul.u32 %s3208, 3
      %s3210 = smul.addr %s3209, 4
      %s3211 = scalar_lea.vmem %s184, %s3210
      %v3212 = vld [vmem:[%s3211] sm:$0xf]
      %v3213 = vld [vmem:[%s3211 + $0x4] sm:$0xf]
      %v3214 = vld [vmem:[%s3211 + $0xc] sm:$0xf]
      %v3215 = vld [vmem:[%s3211 + $0x10] sm:$0xf]
      %v3216 = vld [vmem:[%s3211 + $0x18] sm:$0xf]
      %v3217 = vld [vmem:[%s3211 + $0x1c] sm:$0xf]
      %v3218 = vld [vmem:[%s3211 + $0x24] sm:$0xf]
      %v3219 = vld [vmem:[%s3211 + $0x28] sm:$0xf]
      %v3220 = vld [vmem:[%s3211 + $0x30] sm:$0xf]
      %v3221 = vld [vmem:[%s3211 + $0x34] sm:$0xf]
      %v3222 = vld [vmem:[%s3211 + $0x3c] sm:$0xf]
      %v3223 = vld [vmem:[%s3211 + $0x40] sm:$0xf]
      %v3224 = vld [vmem:[%s3211 + $0x48] sm:$0xf]
      %v3225 = vld [vmem:[%s3211 + $0x4c] sm:$0xf]
      %v3226 = vld [vmem:[%s3211 + $0x54] sm:$0xf]
      %v3227 = vld [vmem:[%s3211 + $0x58] sm:$0xf]
      %v3228 = vld [vmem:[%s3211 + $0x60] sm:$0xf]
      %v3229 = vld [vmem:[%s3211 + $0x64] sm:$0xf]
      %v3230 = vld [vmem:[%s3211 + $0x6c] sm:$0xf]
      %v3231 = vld [vmem:[%s3211 + $0x70] sm:$0xf]
      %v3232 = vld [vmem:[%s3211 + $0x78] sm:$0xf]
      %v3233 = vld [vmem:[%s3211 + $0x7c] sm:$0xf]
      %v3234 = vld [vmem:[%s3211 + $0x84] sm:$0xf]
      %v3235 = vld [vmem:[%s3211 + $0x88] sm:$0xf]
      %v3236 = vld [vmem:[%s3211 + $0x90] sm:$0xf]
      %v3237 = vld [vmem:[%s3211 + $0x94] sm:$0xf]
      %v3238 = vld [vmem:[%s3211 + $0x9c] sm:$0xf]
      %v3239 = vld [vmem:[%s3211 + $0xa0] sm:$0xf]
      %v3240 = vld [vmem:[%s3211 + $0xa8] sm:$0xf]
      %v3241 = vld [vmem:[%s3211 + $0xac] sm:$0xf]
      %v3242 = vld [vmem:[%s3211 + $0xb4] sm:$0xf]
      %v3243 = vld [vmem:[%s3211 + $0xb8] sm:$0xf]
      %s3244 = scalar_lea.vmem %s1, 12
      %v3245 = vld [vmem:[%s3244] sm:$0x3]
      %v3278 = vunpack.c.l.b16 %v3212
      %v3279 = vunpack.c.l.b16 %v3213
      %v3280 = vunpack.c.l.b16 %v3214
      %v3281 = vunpack.c.l.b16 %v3215
      %v3282 = vunpack.c.l.b16 %v3216
      %v3283 = vunpack.c.l.b16 %v3217
      %v3284 = vunpack.c.l.b16 %v3218
      %v3285 = vunpack.c.l.b16 %v3219
      %v3286 = vunpack.c.l.b16 %v3220
      %v3287 = vunpack.c.l.b16 %v3221
      %v3288 = vunpack.c.l.b16 %v3222
      %v3289 = vunpack.c.l.b16 %v3223
      %v3290 = vunpack.c.l.b16 %v3224
      %v3291 = vunpack.c.l.b16 %v3225
      %v3292 = vunpack.c.l.b16 %v3226
      %v3293 = vunpack.c.l.b16 %v3227
      %v3294 = vunpack.c.l.b16 %v3228
      %v3295 = vunpack.c.l.b16 %v3229
      %v3296 = vunpack.c.l.b16 %v3230
      %v3297 = vunpack.c.l.b16 %v3231
      %v3298 = vunpack.c.l.b16 %v3232
      %v3299 = vunpack.c.l.b16 %v3233
      %v3300 = vunpack.c.l.b16 %v3234
      %v3301 = vunpack.c.l.b16 %v3235
      %v3302 = vunpack.c.l.b16 %v3236
      %v3303 = vunpack.c.l.b16 %v3237
      %v3304 = vunpack.c.l.b16 %v3238
      %v3305 = vunpack.c.l.b16 %v3239
      %v3306 = vunpack.c.l.b16 %v3240
      %v3307 = vunpack.c.l.b16 %v3241
      %v3308 = vunpack.c.l.b16 %v3242
      %v3309 = vunpack.c.l.b16 %v3243
      %v3310 = vpack.c.b16 %v3279, %v3278
      %v3311 = vpack.c.b16 %v3281, %v3280
      %v3312 = vpack.c.b16 %v3283, %v3282
      %v3313 = vpack.c.b16 %v3285, %v3284
      %v3314 = vpack.c.b16 %v3287, %v3286
      %v3315 = vpack.c.b16 %v3289, %v3288
      %v3316 = vpack.c.b16 %v3291, %v3290
      %v3317 = vpack.c.b16 %v3293, %v3292
      %v3318 = vpack.c.b16 %v3295, %v3294
      %v3319 = vpack.c.b16 %v3297, %v3296
      %v3320 = vpack.c.b16 %v3299, %v3298
      %v3321 = vpack.c.b16 %v3301, %v3300
      %v3322 = vpack.c.b16 %v3303, %v3302
      %v3323 = vpack.c.b16 %v3305, %v3304
      %v3324 = vpack.c.b16 %v3307, %v3306
      %v3325 = vpack.c.b16 %v3309, %v3308
      %v3327 = vsel %vm687, %v3310, 0
      %v3330 = vsel %vm687, %v3311, 0
      %v3333 = vsel %vm687, %v3312, 0
      %v3336 = vsel %vm687, %v3313, 0
      %v3339 = vsel %vm687, %v3314, 0
      %v3342 = vsel %vm687, %v3315, 0
      %v3345 = vsel %vm687, %v3316, 0
      %v3348 = vsel %vm687, %v3317, 0
      %v3351 = vsel %vm687, %v3318, 0
      %v3354 = vsel %vm687, %v3319, 0
      %v3357 = vsel %vm687, %v3320, 0
      %v3360 = vsel %vm687, %v3321, 0
      %v3363 = vsel %vm687, %v3322, 0
      %v3366 = vsel %vm687, %v3323, 0
      %v3369 = vsel %vm687, %v3324, 0
      %v3372 = vsel %vm687, %v3325, 0
      %v3375 = vsel %vm736, %v3245, 0
      %3377 = vmatprep.subr.bf16.mxu0 0
      %3378 = vmatpush1.bf16.msra.mxu0 %v3375
      %3379 = vmatprep.subr.bf16.mxu0 0
      %3380 = vmatpush1.bf16.msra.mxu0 0
      %3381 = vmatprep.subr.bf16.mxu0 0
      %3382 = vmatpush1.bf16.msra.mxu0 0
      %3383 = vmatprep.subr.bf16.mxu0 0
      %3384 = vmatpush1.bf16.msra.mxu0 0
      %3385 = vmatprep.subr.bf16.mxu0 0
      %3386 = vmatpush1.bf16.msra.mxu0 0
      %3387 = vmatprep.subr.bf16.mxu0 0
      %3388 = vmatpush1.bf16.msra.mxu0 0
      %3389 = vmatprep.subr.bf16.mxu0 0
      %3390 = vmatpush1.bf16.msra.mxu0 0
      %3391 = vmatprep.subr.bf16.mxu0 0
      %3392 = vmatpush1.bf16.msra.mxu0 0
      %3393 = vmatprep.subr.bf16.mxu0 0
      %3394 = vmatpush1.bf16.msra.mxu0 0
      %3395 = vmatprep.subr.bf16.mxu0 0
      %3396 = vmatpush1.bf16.msra.mxu0 0
      %3397 = vmatprep.subr.bf16.mxu0 0
      %3398 = vmatpush1.bf16.msra.mxu0 0
      %3399 = vmatprep.subr.bf16.mxu0 0
      %3400 = vmatpush1.bf16.msra.mxu0 0
      %3401 = vmatprep.subr.bf16.mxu0 0
      %3402 = vmatpush1.bf16.msra.mxu0 0
      %3403 = vmatprep.subr.bf16.mxu0 0
      %3404 = vmatpush1.bf16.msra.mxu0 0
      %3405 = vmatprep.subr.bf16.mxu0 0
      %3406 = vmatpush1.bf16.msra.mxu0 0
      %3407 = vmatprep.subr.bf16.mxu0 0
      %3408 = vmatpush1.bf16.msra.mxu0 0
      %3409 = vmatprep.mubr.bf16.mxu0 0
      %3410 = vmatmul.mubr.bf16.gmra.mrb[0].mxu0 %v3327
      %v3411 = vpop.f32.mrb[0].mxu0
      %v3412 = vadd.f32 0.0, %v3411
      %v3413 = vpop.f32.mrb[0].mxu0
      %v3414 = vpop.f32.mrb[0].mxu0
      %v3415 = vadd.f32 0.0, %v3414
      %v3416 = vpop.f32.mrb[0].mxu0
      %3417 = vmatprep.mubr.bf16.mxu0 0
      %3418 = vmatmul.mubr.bf16.gmra.mrb[0].mxu0 %v3330
      %v3419 = vpop.f32.mrb[0].mxu0
      %v3420 = vadd.f32 0.0, %v3419
      %v3421 = vpop.f32.mrb[0].mxu0
      %v3422 = vpop.f32.mrb[0].mxu0
      %v3423 = vadd.f32 0.0, %v3422
      %v3424 = vpop.f32.mrb[0].mxu0
      %3425 = vmatprep.mubr.bf16.mxu0 0
      %3426 = vmatmul.mubr.bf16.gmra.mrb[0].mxu0 %v3333
      %v3427 = vpop.f32.mrb[0].mxu0
      %v3428 = vadd.f32 0.0, %v3427
      %v3429 = vpop.f32.mrb[0].mxu0
      %v3430 = vpop.f32.mrb[0].mxu0
      %v3431 = vadd.f32 0.0, %v3430
      %v3432 = vpop.f32.mrb[0].mxu0
      %3433 = vmatprep.mubr.bf16.mxu0 0
      %3434 = vmatmul.mubr.bf16.gmra.mrb[0].mxu0 %v3336
      %v3435 = vpop.f32.mrb[0].mxu0
      %v3436 = vadd.f32 0.0, %v3435
      %v3437 = vpop.f32.mrb[0].mxu0
      %v3438 = vpop.f32.mrb[0].mxu0
      %v3439 = vadd.f32 0.0, %v3438
      %v3440 = vpop.f32.mrb[0].mxu0
      %3441 = vmatprep.mubr.bf16.mxu0 0
      %3442 = vmatmul.mubr.bf16.gmra.mrb[0].mxu0 %v3339
      %v3443 = vpop.f32.mrb[0].mxu0
      %v3444 = vadd.f32 0.0, %v3443
      %v3445 = vpop.f32.mrb[0].mxu0
      %v3446 = vpop.f32.mrb[0].mxu0
      %v3447 = vadd.f32 0.0, %v3446
      %v3448 = vpop.f32.mrb[0].mxu0
      %3449 = vmatprep.mubr.bf16.mxu0 0
      %3450 = vmatmul.mubr.bf16.gmra.mrb[0].mxu0 %v3342
      %v3451 = vpop.f32.mrb[0].mxu0
      %v3452 = vadd.f32 0.0, %v3451
      %v3453 = vpop.f32.mrb[0].mxu0
      %v3454 = vpop.f32.mrb[0].mxu0
      %v3455 = vadd.f32 0.0, %v3454
      %v3456 = vpop.f32.mrb[0].mxu0
      %3457 = vmatprep.mubr.bf16.mxu0 0
      %3458 = vmatmul.mubr.bf16.gmra.mrb[0].mxu0 %v3345
      %v3459 = vpop.f32.mrb[0].mxu0
      %v3460 = vadd.f32 0.0, %v3459
      %v3461 = vpop.f32.mrb[0].mxu0
      %v3462 = vpop.f32.mrb[0].mxu0
      %v3463 = vadd.f32 0.0, %v3462
      %v3464 = vpop.f32.mrb[0].mxu0
      %3465 = vmatprep.mubr.bf16.mxu0 0
      %3466 = vmatmul.mubr.bf16.gmra.mrb[0].mxu0 %v3348
      %v3467 = vpop.f32.mrb[0].mxu0
      %v3468 = vadd.f32 0.0, %v3467
      %v3469 = vpop.f32.mrb[0].mxu0
      %v3470 = vpop.f32.mrb[0].mxu0
      %v3471 = vadd.f32 0.0, %v3470
      %v3472 = vpop.f32.mrb[0].mxu0
      %3473 = vmatprep.mubr.bf16.mxu0 0
      %3474 = vmatmul.mubr.bf16.gmra.mrb[0].mxu0 %v3351
      %v3475 = vpop.f32.mrb[0].mxu0
      %v3476 = vadd.f32 0.0, %v3475
      %v3477 = vpop.f32.mrb[0].mxu0
      %v3478 = vpop.f32.mrb[0].mxu0
      %v3479 = vadd.f32 0.0, %v3478
      %v3480 = vpop.f32.mrb[0].mxu0
      %3481 = vmatprep.mubr.bf16.mxu0 0
      %3482 = vmatmul.mubr.bf16.gmra.mrb[0].mxu0 %v3354
      %v3483 = vpop.f32.mrb[0].mxu0
      %v3484 = vadd.f32 0.0, %v3483
      %v3485 = vpop.f32.mrb[0].mxu0
      %v3486 = vpop.f32.mrb[0].mxu0
      %v3487 = vadd.f32 0.0, %v3486
      %v3488 = vpop.f32.mrb[0].mxu0
      %3489 = vmatprep.mubr.bf16.mxu0 0
      %3490 = vmatmul.mubr.bf16.gmra.mrb[0].mxu0 %v3357
      %v3491 = vpop.f32.mrb[0].mxu0
      %v3492 = vadd.f32 0.0, %v3491
      %v3493 = vpop.f32.mrb[0].mxu0
      %v3494 = vpop.f32.mrb[0].mxu0
      %v3495 = vadd.f32 0.0, %v3494
      %v3496 = vpop.f32.mrb[0].mxu0
      %3497 = vmatprep.mubr.bf16.mxu0 0
      %3498 = vmatmul.mubr.bf16.gmra.mrb[0].mxu0 %v3360
      %v3499 = vpop.f32.mrb[0].mxu0
      %v3500 = vadd.f32 0.0, %v3499
      %v3501 = vpop.f32.mrb[0].mxu0
      %v3502 = vpop.f32.mrb[0].mxu0
      %v3503 = vadd.f32 0.0, %v3502
      %v3504 = vpop.f32.mrb[0].mxu0
      %3505 = vmatprep.mubr.bf16.mxu0 0
      %3506 = vmatmul.mubr.bf16.gmra.mrb[0].mxu0 %v3363
      %v3507 = vpop.f32.mrb[0].mxu0
      %v3508 = vadd.f32 0.0, %v3507
      %v3509 = vpop.f32.mrb[0].mxu0
      %v3510 = vpop.f32.mrb[0].mxu0
      %v3511 = vadd.f32 0.0, %v3510
      %v3512 = vpop.f32.mrb[0].mxu0
      %3513 = vmatprep.mubr.bf16.mxu0 0
      %3514 = vmatmul.mubr.bf16.gmra.mrb[0].mxu0 %v3366
      %v3515 = vpop.f32.mrb[0].mxu0
      %v3516 = vadd.f32 0.0, %v3515
      %v3517 = vpop.f32.mrb[0].mxu0
      %v3518 = vpop.f32.mrb[0].mxu0
      %v3519 = vadd.f32 0.0, %v3518
      %v3520 = vpop.f32.mrb[0].mxu0
      %3521 = vmatprep.mubr.bf16.mxu0 0
      %3522 = vmatmul.mubr.bf16.gmra.mrb[0].mxu0 %v3369
      %v3523 = vpop.f32.mrb[0].mxu0
      %v3524 = vadd.f32 0.0, %v3523
      %v3525 = vpop.f32.mrb[0].mxu0
      %v3526 = vpop.f32.mrb[0].mxu0
      %v3527 = vadd.f32 0.0, %v3526
      %v3528 = vpop.f32.mrb[0].mxu0
      %3529 = vmatprep.mubr.bf16.mxu0 0
      %3530 = vmatmul.mubr.bf16.gmra.mrb[0].mxu0 %v3372
      %v3531 = vpop.f32.mrb[0].mxu0
      %v3532 = vadd.f32 0.0, %v3531
      %v3533 = vpop.f32.mrb[0].mxu0
      %v3534 = vpop.f32.mrb[0].mxu0
      %v3535 = vadd.f32 0.0, %v3534
      %v3536 = vpop.f32.mrb[0].mxu0
      %3537 = vdwg.mxu0
      %v3538 = vadd.f32 %v3176, %v3412
      %v3539 = vadd.f32 %v3177, %v3415
      %v3540 = vadd.f32 %v3178, %v3420
      %v3541 = vadd.f32 %v3179, %v3423
      %v3542 = vadd.f32 %v3180, %v3428
      %v3543 = vadd.f32 %v3181, %v3431
      %v3544 = vadd.f32 %v3182, %v3436
      %v3545 = vadd.f32 %v3183, %v3439
      %v3546 = vadd.f32 %v3184, %v3444
      %v3547 = vadd.f32 %v3185, %v3447
      %v3548 = vadd.f32 %v3186, %v3452
      %v3549 = vadd.f32 %v3187, %v3455
      %v3550 = vadd.f32 %v3188, %v3460
      %v3551 = vadd.f32 %v3189, %v3463
      %v3552 = vadd.f32 %v3190, %v3468
      %v3553 = vadd.f32 %v3191, %v3471
      %v3554 = vadd.f32 %v3192, %v3476
      %v3555 = vadd.f32 %v3193, %v3479
      %v3556 = vadd.f32 %v3194, %v3484
      %v3557 = vadd.f32 %v3195, %v3487
      %v3558 = vadd.f32 %v3196, %v3492
      %v3559 = vadd.f32 %v3197, %v3495
      %v3560 = vadd.f32 %v3198, %v3500
      %v3561 = vadd.f32 %v3199, %v3503
      %v3562 = vadd.f32 %v3200, %v3508
      %v3563 = vadd.f32 %v3201, %v3511
      %v3564 = vadd.f32 %v3202, %v3516
      %v3565 = vadd.f32 %v3203, %v3519
      %v3566 = vadd.f32 %v3204, %v3524
      %v3567 = vadd.f32 %v3205, %v3527
      %v3568 = vadd.f32 %v3206, %v3532
      %v3569 = vadd.f32 %v3207, %v3535
      %v3570 = vld [vmem:[%s3211] sm:$0xf]
      %v3571 = vld [vmem:[%s3211 + $0x4] sm:$0xf]
      %v3572 = vld [vmem:[%s3211 + $0x8] sm:$0x1]
      %v3573 = vld [vmem:[%s3211 + $0xc] sm:$0xf]
      %v3574 = vld [vmem:[%s3211 + $0x10] sm:$0xf]
      %v3575 = vld [vmem:[%s3211 + $0x14] sm:$0x1]
      %v3576 = vld [vmem:[%s3211 + $0x18] sm:$0xf]
      %v3577 = vld [vmem:[%s3211 + $0x1c] sm:$0xf]
      %v3578 = vld [vmem:[%s3211 + $0x20] sm:$0x1]
      %v3579 = vld [vmem:[%s3211 + $0x24] sm:$0xf]
      %v3580 = vld [vmem:[%s3211 + $0x28] sm:$0xf]
      %v3581 = vld [vmem:[%s3211 + $0x2c] sm:$0x1]
      %v3582 = vld [vmem:[%s3211 + $0x30] sm:$0xf]
      %v3583 = vld [vmem:[%s3211 + $0x34] sm:$0xf]
      %v3584 = vld [vmem:[%s3211 + $0x38] sm:$0x1]
      %v3585 = vld [vmem:[%s3211 + $0x3c] sm:$0xf]
      %v3586 = vld [vmem:[%s3211 + $0x40] sm:$0xf]
      %v3587 = vld [vmem:[%s3211 + $0x44] sm:$0x1]
      %v3588 = vld [vmem:[%s3211 + $0x48] sm:$0xf]
      %v3589 = vld [vmem:[%s3211 + $0x4c] sm:$0xf]
      %v3590 = vld [vmem:[%s3211 + $0x50] sm:$0x1]
      %v3591 = vld [vmem:[%s3211 + $0x54] sm:$0xf]
      %v3592 = vld [vmem:[%s3211 + $0x58] sm:$0xf]
      %v3593 = vld [vmem:[%s3211 + $0x5c] sm:$0x1]
      %v3594 = vld [vmem:[%s3211 + $0x60] sm:$0xf]
      %v3595 = vld [vmem:[%s3211 + $0x64] sm:$0xf]
      %v3596 = vld [vmem:[%s3211 + $0x68] sm:$0x1]
      %v3597 = vld [vmem:[%s3211 + $0x6c] sm:$0xf]
      %v3598 = vld [vmem:[%s3211 + $0x70] sm:$0xf]
      %v3599 = vld [vmem:[%s3211 + $0x74] sm:$0x1]
      %v3600 = vld [vmem:[%s3211 + $0x78] sm:$0xf]
      %v3601 = vld [vmem:[%s3211 + $0x7c] sm:$0xf]
      %v3602 = vld [vmem:[%s3211 + $0x80] sm:$0x1]
      %v3603 = vld [vmem:[%s3211 + $0x84] sm:$0xf]
      %v3604 = vld [vmem:[%s3211 + $0x88] sm:$0xf]
      %v3605 = vld [vmem:[%s3211 + $0x8c] sm:$0x1]
      %v3606 = vld [vmem:[%s3211 + $0x90] sm:$0xf]
      %v3607 = vld [vmem:[%s3211 + $0x94] sm:$0xf]
      %v3608 = vld [vmem:[%s3211 + $0x98] sm:$0x1]
      %v3609 = vld [vmem:[%s3211 + $0x9c] sm:$0xf]
      %v3610 = vld [vmem:[%s3211 + $0xa0] sm:$0xf]
      %v3611 = vld [vmem:[%s3211 + $0xa4] sm:$0x1]
      %v3612 = vld [vmem:[%s3211 + $0xa8] sm:$0xf]
      %v3613 = vld [vmem:[%s3211 + $0xac] sm:$0xf]
      %v3614 = vld [vmem:[%s3211 + $0xb0] sm:$0x1]
      %v3615 = vld [vmem:[%s3211 + $0xb4] sm:$0xf]
      %v3616 = vld [vmem:[%s3211 + $0xb8] sm:$0xf]
      %v3617 = vld [vmem:[%s3211 + $0xbc] sm:$0x1]
      %v3619 = vshrl.u32 %v3570, 16
      %v3621 = vrot.slane %v3619, 4
      %v3622 = vshll.u32 %v3570, 16
      %v3624 = vrot.slane %v3622, 5
      %v3625 = vor.u32 %v3621, %v3624
      %v3626 = vrot.slane %v3625, 4
      %v3628 = vshll.u32 %v3571, 16
      %v3630 = vrot.slane %v3628, 5
      %v3631 = vsel %vm252, %v3626, %v3630
      %v3632 = vshrl.u32 %v3571, 16
      %v3634 = vrot.slane %v3632, 4
      %v3635 = vor.u32 %v3634, %v3630
      %v3636 = vrot.slane %v3635, 4
      %v3638 = vshll.u32 %v3572, 16
      %v3640 = vrot.slane %v3638, 5
      %v3641 = vsel %vm252, %v3636, %v3640
      %v3643 = vshrl.u32 %v3573, 16
      %v3645 = vrot.slane %v3643, 4
      %v3646 = vshll.u32 %v3573, 16
      %v3648 = vrot.slane %v3646, 5
      %v3649 = vor.u32 %v3645, %v3648
      %v3650 = vrot.slane %v3649, 4
      %v3652 = vshll.u32 %v3574, 16
      %v3654 = vrot.slane %v3652, 5
      %v3655 = vsel %vm252, %v3650, %v3654
      %v3656 = vshrl.u32 %v3574, 16
      %v3658 = vrot.slane %v3656, 4
      %v3659 = vor.u32 %v3658, %v3654
      %v3660 = vrot.slane %v3659, 4
      %v3662 = vshll.u32 %v3575, 16
      %v3664 = vrot.slane %v3662, 5
      %v3665 = vsel %vm252, %v3660, %v3664
      %v3667 = vshrl.u32 %v3576, 16
      %v3669 = vrot.slane %v3667, 4
      %v3670 = vshll.u32 %v3576, 16
      %v3672 = vrot.slane %v3670, 5
      %v3673 = vor.u32 %v3669, %v3672
      %v3674 = vrot.slane %v3673, 4
      %v3676 = vshll.u32 %v3577, 16
      %v3678 = vrot.slane %v3676, 5
      %v3679 = vsel %vm252, %v3674, %v3678
      %v3680 = vshrl.u32 %v3577, 16
      %v3682 = vrot.slane %v3680, 4
      %v3683 = vor.u32 %v3682, %v3678
      %v3684 = vrot.slane %v3683, 4
      %v3686 = vshll.u32 %v3578, 16
      %v3688 = vrot.slane %v3686, 5
      %v3689 = vsel %vm252, %v3684, %v3688
      %v3691 = vshrl.u32 %v3579, 16
      %v3693 = vrot.slane %v3691, 4
      %v3694 = vshll.u32 %v3579, 16
      %v3696 = vrot.slane %v3694, 5
      %v3697 = vor.u32 %v3693, %v3696
      %v3698 = vrot.slane %v3697, 4
      %v3700 = vshll.u32 %v3580, 16
      %v3702 = vrot.slane %v3700, 5
      %v3703 = vsel %vm252, %v3698, %v3702
      %v3704 = vshrl.u32 %v3580, 16
      %v3706 = vrot.slane %v3704, 4
      %v3707 = vor.u32 %v3706, %v3702
      %v3708 = vrot.slane %v3707, 4
      %v3710 = vshll.u32 %v3581, 16
      %v3712 = vrot.slane %v3710, 5
      %v3713 = vsel %vm252, %v3708, %v3712
      %v3715 = vshrl.u32 %v3582, 16
      %v3717 = vrot.slane %v3715, 4
      %v3718 = vshll.u32 %v3582, 16
      %v3720 = vrot.slane %v3718, 5
      %v3721 = vor.u32 %v3717, %v3720
      %v3722 = vrot.slane %v3721, 4
      %v3724 = vshll.u32 %v3583, 16
      %v3726 = vrot.slane %v3724, 5
      %v3727 = vsel %vm252, %v3722, %v3726
      %v3728 = vshrl.u32 %v3583, 16
      %v3730 = vrot.slane %v3728, 4
      %v3731 = vor.u32 %v3730, %v3726
      %v3732 = vrot.slane %v3731, 4
      %v3734 = vshll.u32 %v3584, 16
      %v3736 = vrot.slane %v3734, 5
      %v3737 = vsel %vm252, %v3732, %v3736
      %v3739 = vshrl.u32 %v3585, 16
      %v3741 = vrot.slane %v3739, 4
      %v3742 = vshll.u32 %v3585, 16
      %v3744 = vrot.slane %v3742, 5
      %v3745 = vor.u32 %v3741, %v3744
      %v3746 = vrot.slane %v3745, 4
      %v3748 = vshll.u32 %v3586, 16
      %v3750 = vrot.slane %v3748, 5
      %v3751 = vsel %vm252, %v3746, %v3750
      %v3752 = vshrl.u32 %v3586, 16
      %v3754 = vrot.slane %v3752, 4
      %v3755 = vor.u32 %v3754, %v3750
      %v3756 = vrot.slane %v3755, 4
      %v3758 = vshll.u32 %v3587, 16
      %v3760 = vrot.slane %v3758, 5
      %v3761 = vsel %vm252, %v3756, %v3760
      %v3763 = vshrl.u32 %v3588, 16
      %v3765 = vrot.slane %v3763, 4
      %v3766 = vshll.u32 %v3588, 16
      %v3768 = vrot.slane %v3766, 5
      %v3769 = vor.u32 %v3765, %v3768
      %v3770 = vrot.slane %v3769, 4
      %v3772 = vshll.u32 %v3589, 16
      %v3774 = vrot.slane %v3772, 5
      %v3775 = vsel %vm252, %v3770, %v3774
      %v3776 = vshrl.u32 %v3589, 16
      %v3778 = vrot.slane %v3776, 4
      %v3779 = vor.u32 %v3778, %v3774
      %v3780 = vrot.slane %v3779, 4
      %v3782 = vshll.u32 %v3590, 16
      %v3784 = vrot.slane %v3782, 5
      %v3785 = vsel %vm252, %v3780, %v3784
      %v3787 = vshrl.u32 %v3591, 16
      %v3789 = vrot.slane %v3787, 4
      %v3790 = vshll.u32 %v3591, 16
      %v3792 = vrot.slane %v3790, 5
      %v3793 = vor.u32 %v3789, %v3792
      %v3794 = vrot.slane %v3793, 4
      %v3796 = vshll.u32 %v3592, 16
      %v3798 = vrot.slane %v3796, 5
      %v3799 = vsel %vm252, %v3794, %v3798
      %v3800 = vshrl.u32 %v3592, 16
      %v3802 = vrot.slane %v3800, 4
      %v3803 = vor.u32 %v3802, %v3798
      %v3804 = vrot.slane %v3803, 4
      %v3806 = vshll.u32 %v3593, 16
      %v3808 = vrot.slane %v3806, 5
      %v3809 = vsel %vm252, %v3804, %v3808
      %v3811 = vshrl.u32 %v3594, 16
      %v3813 = vrot.slane %v3811, 4
      %v3814 = vshll.u32 %v3594, 16
      %v3816 = vrot.slane %v3814, 5
      %v3817 = vor.u32 %v3813, %v3816
      %v3818 = vrot.slane %v3817, 4
      %v3820 = vshll.u32 %v3595, 16
      %v3822 = vrot.slane %v3820, 5
      %v3823 = vsel %vm252, %v3818, %v3822
      %v3824 = vshrl.u32 %v3595, 16
      %v3826 = vrot.slane %v3824, 4
      %v3827 = vor.u32 %v3826, %v3822
      %v3828 = vrot.slane %v3827, 4
      %v3830 = vshll.u32 %v3596, 16
      %v3832 = vrot.slane %v3830, 5
      %v3833 = vsel %vm252, %v3828, %v3832
      %v3835 = vshrl.u32 %v3597, 16
      %v3837 = vrot.slane %v3835, 4
      %v3838 = vshll.u32 %v3597, 16
      %v3840 = vrot.slane %v3838, 5
      %v3841 = vor.u32 %v3837, %v3840
      %v3842 = vrot.slane %v3841, 4
      %v3844 = vshll.u32 %v3598, 16
      %v3846 = vrot.slane %v3844, 5
      %v3847 = vsel %vm252, %v3842, %v3846
      %v3848 = vshrl.u32 %v3598, 16
      %v3850 = vrot.slane %v3848, 4
      %v3851 = vor.u32 %v3850, %v3846
      %v3852 = vrot.slane %v3851, 4
      %v3854 = vshll.u32 %v3599, 16
      %v3856 = vrot.slane %v3854, 5
      %v3857 = vsel %vm252, %v3852, %v3856
      %v3859 = vshrl.u32 %v3600, 16
      %v3861 = vrot.slane %v3859, 4
      %v3862 = vshll.u32 %v3600, 16
      %v3864 = vrot.slane %v3862, 5
      %v3865 = vor.u32 %v3861, %v3864
      %v3866 = vrot.slane %v3865, 4
      %v3868 = vshll.u32 %v3601, 16
      %v3870 = vrot.slane %v3868, 5
      %v3871 = vsel %vm252, %v3866, %v3870
      %v3872 = vshrl.u32 %v3601, 16
      %v3874 = vrot.slane %v3872, 4
      %v3875 = vor.u32 %v3874, %v3870
      %v3876 = vrot.slane %v3875, 4
      %v3878 = vshll.u32 %v3602, 16
      %v3880 = vrot.slane %v3878, 5
      %v3881 = vsel %vm252, %v3876, %v3880
      %v3883 = vshrl.u32 %v3603, 16
      %v3885 = vrot.slane %v3883, 4
      %v3886 = vshll.u32 %v3603, 16
      %v3888 = vrot.slane %v3886, 5
      %v3889 = vor.u32 %v3885, %v3888
      %v3890 = vrot.slane %v3889, 4
      %v3892 = vshll.u32 %v3604, 16
      %v3894 = vrot.slane %v3892, 5
      %v3895 = vsel %vm252, %v3890, %v3894
      %v3896 = vshrl.u32 %v3604, 16
      %v3898 = vrot.slane %v3896, 4
      %v3899 = vor.u32 %v3898, %v3894
      %v3900 = vrot.slane %v3899, 4
      %v3902 = vshll.u32 %v3605, 16
      %v3904 = vrot.slane %v3902, 5
      %v3905 = vsel %vm252, %v3900, %v3904
      %v3907 = vshrl.u32 %v3606, 16
      %v3909 = vrot.slane %v3907, 4
      %v3910 = vshll.u32 %v3606, 16
      %v3912 = vrot.slane %v3910, 5
      %v3913 = vor.u32 %v3909, %v3912
      %v3914 = vrot.slane %v3913, 4
      %v3916 = vshll.u32 %v3607, 16
      %v3918 = vrot.slane %v3916, 5
      %v3919 = vsel %vm252, %v3914, %v3918
      %v3920 = vshrl.u32 %v3607, 16
      %v3922 = vrot.slane %v3920, 4
      %v3923 = vor.u32 %v3922, %v3918
      %v3924 = vrot.slane %v3923, 4
      %v3926 = vshll.u32 %v3608, 16
      %v3928 = vrot.slane %v3926, 5
      %v3929 = vsel %vm252, %v3924, %v3928
      %v3931 = vshrl.u32 %v3609, 16
      %v3933 = vrot.slane %v3931, 4
      %v3934 = vshll.u32 %v3609, 16
      %v3936 = vrot.slane %v3934, 5
      %v3937 = vor.u32 %v3933, %v3936
      %v3938 = vrot.slane %v3937, 4
      %v3940 = vshll.u32 %v3610, 16
      %v3942 = vrot.slane %v3940, 5
      %v3943 = vsel %vm252, %v3938, %v3942
      %v3944 = vshrl.u32 %v3610, 16
      %v3946 = vrot.slane %v3944, 4
      %v3947 = vor.u32 %v3946, %v3942
      %v3948 = vrot.slane %v3947, 4
      %v3950 = vshll.u32 %v3611, 16
      %v3952 = vrot.slane %v3950, 5
      %v3953 = vsel %vm252, %v3948, %v3952
      %v3955 = vshrl.u32 %v3612, 16
      %v3957 = vrot.slane %v3955, 4
      %v3958 = vshll.u32 %v3612, 16
      %v3960 = vrot.slane %v3958, 5
      %v3961 = vor.u32 %v3957, %v3960
      %v3962 = vrot.slane %v3961, 4
      %v3964 = vshll.u32 %v3613, 16
      %v3966 = vrot.slane %v3964, 5
      %v3967 = vsel %vm252, %v3962, %v3966
      %v3968 = vshrl.u32 %v3613, 16
      %v3970 = vrot.slane %v3968, 4
      %v3971 = vor.u32 %v3970, %v3966
      %v3972 = vrot.slane %v3971, 4
      %v3974 = vshll.u32 %v3614, 16
      %v3976 = vrot.slane %v3974, 5
      %v3977 = vsel %vm252, %v3972, %v3976
      %v3979 = vshrl.u32 %v3615, 16
      %v3981 = vrot.slane %v3979, 4
      %v3982 = vshll.u32 %v3615, 16
      %v3984 = vrot.slane %v3982, 5
      %v3985 = vor.u32 %v3981, %v3984
      %v3986 = vrot.slane %v3985, 4
      %v3988 = vshll.u32 %v3616, 16
      %v3990 = vrot.slane %v3988, 5
      %v3991 = vsel %vm252, %v3986, %v3990
      %v3992 = vshrl.u32 %v3616, 16
      %v3994 = vrot.slane %v3992, 4
      %v3995 = vor.u32 %v3994, %v3990
      %v3996 = vrot.slane %v3995, 4
      %v3998 = vshll.u32 %v3617, 16
      %v4000 = vrot.slane %v3998, 5
      %v4001 = vsel %vm252, %v3996, %v4000
      %s4002 = scalar_lea.vmem %s1, 14
      %v4003 = vld [vmem:[%s4002] sm:$0x3]
      %v4004 = vunpack.c.l.b16 %v3631
      %v4005 = vunpack.c.l.b16 %v3641
      %v4006 = vunpack.c.l.b16 %v3655
      %v4007 = vunpack.c.l.b16 %v3665
      %v4008 = vunpack.c.l.b16 %v3679
      %v4009 = vunpack.c.l.b16 %v3689
      %v4010 = vunpack.c.l.b16 %v3703
      %v4011 = vunpack.c.l.b16 %v3713
      %v4012 = vunpack.c.l.b16 %v3727
      %v4013 = vunpack.c.l.b16 %v3737
      %v4014 = vunpack.c.l.b16 %v3751
      %v4015 = vunpack.c.l.b16 %v3761
      %v4016 = vunpack.c.l.b16 %v3775
      %v4017 = vunpack.c.l.b16 %v3785
      %v4018 = vunpack.c.l.b16 %v3799
      %v4019 = vunpack.c.l.b16 %v3809
      %v4020 = vunpack.c.l.b16 %v3823
      %v4021 = vunpack.c.l.b16 %v3833
      %v4022 = vunpack.c.l.b16 %v3847
      %v4023 = vunpack.c.l.b16 %v3857
      %v4024 = vunpack.c.l.b16 %v3871
      %v4025 = vunpack.c.l.b16 %v3881
      %v4026 = vunpack.c.l.b16 %v3895
      %v4027 = vunpack.c.l.b16 %v3905
      %v4028 = vunpack.c.l.b16 %v3919
      %v4029 = vunpack.c.l.b16 %v3929
      %v4030 = vunpack.c.l.b16 %v3943
      %v4031 = vunpack.c.l.b16 %v3953
      %v4032 = vunpack.c.l.b16 %v3967
      %v4033 = vunpack.c.l.b16 %v3977
      %v4034 = vunpack.c.l.b16 %v3991
      %v4035 = vunpack.c.l.b16 %v4001
      %v4036 = vpack.c.b16 %v4005, %v4004
      %v4037 = vpack.c.b16 %v4007, %v4006
      %v4038 = vpack.c.b16 %v4009, %v4008
      %v4039 = vpack.c.b16 %v4011, %v4010
      %v4040 = vpack.c.b16 %v4013, %v4012
      %v4041 = vpack.c.b16 %v4015, %v4014
      %v4042 = vpack.c.b16 %v4017, %v4016
      %v4043 = vpack.c.b16 %v4019, %v4018
      %v4044 = vpack.c.b16 %v4021, %v4020
      %v4045 = vpack.c.b16 %v4023, %v4022
      %v4046 = vpack.c.b16 %v4025, %v4024
      %v4047 = vpack.c.b16 %v4027, %v4026
      %v4048 = vpack.c.b16 %v4029, %v4028
      %v4049 = vpack.c.b16 %v4031, %v4030
      %v4050 = vpack.c.b16 %v4033, %v4032
      %v4051 = vpack.c.b16 %v4035, %v4034
      %v4053 = vsel %vm687, %v4036, 0
      %v4056 = vsel %vm687, %v4037, 0
      %v4059 = vsel %vm687, %v4038, 0
      %v4062 = vsel %vm687, %v4039, 0
      %v4065 = vsel %vm687, %v4040, 0
      %v4068 = vsel %vm687, %v4041, 0
      %v4071 = vsel %vm687, %v4042, 0
      %v4074 = vsel %vm687, %v4043, 0
      %v4077 = vsel %vm687, %v4044, 0
      %v4080 = vsel %vm687, %v4045, 0
      %v4083 = vsel %vm687, %v4046, 0
      %v4086 = vsel %vm687, %v4047, 0
      %v4089 = vsel %vm687, %v4048, 0
      %v4092 = vsel %vm687, %v4049, 0
      %v4095 = vsel %vm687, %v4050, 0
      %v4098 = vsel %vm687, %v4051, 0
      %v4101 = vsel %vm736, %v4003, 0
      %4103 = vmatprep.subr.bf16.mxu0 0
      %4104 = vmatpush1.bf16.msra.mxu0 %v4101
      %4105 = vmatprep.subr.bf16.mxu0 0
      %4106 = vmatpush1.bf16.msra.mxu0 0
      %4107 = vmatprep.subr.bf16.mxu0 0
      %4108 = vmatpush1.bf16.msra.mxu0 0
      %4109 = vmatprep.subr.bf16.mxu0 0
      %4110 = vmatpush1.bf16.msra.mxu0 0
      %4111 = vmatprep.subr.bf16.mxu0 0
      %4112 = vmatpush1.bf16.msra.mxu0 0
      %4113 = vmatprep.subr.bf16.mxu0 0
      %4114 = vmatpush1.bf16.msra.mxu0 0
      %4115 = vmatprep.subr.bf16.mxu0 0
      %4116 = vmatpush1.bf16.msra.mxu0 0
      %4117 = vmatprep.subr.bf16.mxu0 0
      %4118 = vmatpush1.bf16.msra.mxu0 0
      %4119 = vmatprep.subr.bf16.mxu0 0
      %4120 = vmatpush1.bf16.msra.mxu0 0
      %4121 = vmatprep.subr.bf16.mxu0 0
      %4122 = vmatpush1.bf16.msra.mxu0 0
      %4123 = vmatprep.subr.bf16.mxu0 0
      %4124 = vmatpush1.bf16.msra.mxu0 0
      %4125 = vmatprep.subr.bf16.mxu0 0
      %4126 = vmatpush1.bf16.msra.mxu0 0
      %4127 = vmatprep.subr.bf16.mxu0 0
      %4128 = vmatpush1.bf16.msra.mxu0 0
      %4129 = vmatprep.subr.bf16.mxu0 0
      %4130 = vmatpush1.bf16.msra.mxu0 0
      %4131 = vmatprep.subr.bf16.mxu0 0
      %4132 = vmatpush1.bf16.msra.mxu0 0
      %4133 = vmatprep.subr.bf16.mxu0 0
      %4134 = vmatpush1.bf16.msra.mxu0 0
      %4135 = vmatprep.mubr.bf16.mxu0 0
      %4136 = vmatmul.mubr.bf16.gmra.mrb[0].mxu0 %v4053
      %v4137 = vpop.f32.mrb[0].mxu0
      %v4138 = vadd.f32 0.0, %v4137
      %v4139 = vpop.f32.mrb[0].mxu0
      %v4140 = vpop.f32.mrb[0].mxu0
      %v4141 = vadd.f32 0.0, %v4140
      %v4142 = vpop.f32.mrb[0].mxu0
      %4143 = vmatprep.mubr.bf16.mxu0 0
      %4144 = vmatmul.mubr.bf16.gmra.mrb[0].mxu0 %v4056
      %v4145 = vpop.f32.mrb[0].mxu0
      %v4146 = vadd.f32 0.0, %v4145
      %v4147 = vpop.f32.mrb[0].mxu0
      %v4148 = vpop.f32.mrb[0].mxu0
      %v4149 = vadd.f32 0.0, %v4148
      %v4150 = vpop.f32.mrb[0].mxu0
      %4151 = vmatprep.mubr.bf16.mxu0 0
      %4152 = vmatmul.mubr.bf16.gmra.mrb[0].mxu0 %v4059
      %v4153 = vpop.f32.mrb[0].mxu0
      %v4154 = vadd.f32 0.0, %v4153
      %v4155 = vpop.f32.mrb[0].mxu0
      %v4156 = vpop.f32.mrb[0].mxu0
      %v4157 = vadd.f32 0.0, %v4156
      %v4158 = vpop.f32.mrb[0].mxu0
      %4159 = vmatprep.mubr.bf16.mxu0 0
      %4160 = vmatmul.mubr.bf16.gmra.mrb[0].mxu0 %v4062
      %v4161 = vpop.f32.mrb[0].mxu0
      %v4162 = vadd.f32 0.0, %v4161
      %v4163 = vpop.f32.mrb[0].mxu0
      %v4164 = vpop.f32.mrb[0].mxu0
      %v4165 = vadd.f32 0.0, %v4164
      %v4166 = vpop.f32.mrb[0].mxu0
      %4167 = vmatprep.mubr.bf16.mxu0 0
      %4168 = vmatmul.mubr.bf16.gmra.mrb[0].mxu0 %v4065
      %v4169 = vpop.f32.mrb[0].mxu0
      %v4170 = vadd.f32 0.0, %v4169
      %v4171 = vpop.f32.mrb[0].mxu0
      %v4172 = vpop.f32.mrb[0].mxu0
      %v4173 = vadd.f32 0.0, %v4172
      %v4174 = vpop.f32.mrb[0].mxu0
      %4175 = vmatprep.mubr.bf16.mxu0 0
      %4176 = vmatmul.mubr.bf16.gmra.mrb[0].mxu0 %v4068
      %v4177 = vpop.f32.mrb[0].mxu0
      %v4178 = vadd.f32 0.0, %v4177
      %v4179 = vpop.f32.mrb[0].mxu0
      %v4180 = vpop.f32.mrb[0].mxu0
      %v4181 = vadd.f32 0.0, %v4180
      %v4182 = vpop.f32.mrb[0].mxu0
      %4183 = vmatprep.mubr.bf16.mxu0 0
      %4184 = vmatmul.mubr.bf16.gmra.mrb[0].mxu0 %v4071
      %v4185 = vpop.f32.mrb[0].mxu0
      %v4186 = vadd.f32 0.0, %v4185
      %v4187 = vpop.f32.mrb[0].mxu0
      %v4188 = vpop.f32.mrb[0].mxu0
      %v4189 = vadd.f32 0.0, %v4188
      %v4190 = vpop.f32.mrb[0].mxu0
      %4191 = vmatprep.mubr.bf16.mxu0 0
      %4192 = vmatmul.mubr.bf16.gmra.mrb[0].mxu0 %v4074
      %v4193 = vpop.f32.mrb[0].mxu0
      %v4194 = vadd.f32 0.0, %v4193
      %v4195 = vpop.f32.mrb[0].mxu0
      %v4196 = vpop.f32.mrb[0].mxu0
      %v4197 = vadd.f32 0.0, %v4196
      %v4198 = vpop.f32.mrb[0].mxu0
      %4199 = vmatprep.mubr.bf16.mxu0 0
      %4200 = vmatmul.mubr.bf16.gmra.mrb[0].mxu0 %v4077
      %v4201 = vpop.f32.mrb[0].mxu0
      %v4202 = vadd.f32 0.0, %v4201
      %v4203 = vpop.f32.mrb[0].mxu0
      %v4204 = vpop.f32.mrb[0].mxu0
      %v4205 = vadd.f32 0.0, %v4204
      %v4206 = vpop.f32.mrb[0].mxu0
      %4207 = vmatprep.mubr.bf16.mxu0 0
      %4208 = vmatmul.mubr.bf16.gmra.mrb[0].mxu0 %v4080
      %v4209 = vpop.f32.mrb[0].mxu0
      %v4210 = vadd.f32 0.0, %v4209
      %v4211 = vpop.f32.mrb[0].mxu0
      %v4212 = vpop.f32.mrb[0].mxu0
      %v4213 = vadd.f32 0.0, %v4212
      %v4214 = vpop.f32.mrb[0].mxu0
      %4215 = vmatprep.mubr.bf16.mxu0 0
      %4216 = vmatmul.mubr.bf16.gmra.mrb[0].mxu0 %v4083
      %v4217 = vpop.f32.mrb[0].mxu0
      %v4218 = vadd.f32 0.0, %v4217
      %v4219 = vpop.f32.mrb[0].mxu0
      %v4220 = vpop.f32.mrb[0].mxu0
      %v4221 = vadd.f32 0.0, %v4220
      %v4222 = vpop.f32.mrb[0].mxu0
      %4223 = vmatprep.mubr.bf16.mxu0 0
      %4224 = vmatmul.mubr.bf16.gmra.mrb[0].mxu0 %v4086
      %v4225 = vpop.f32.mrb[0].mxu0
      %v4226 = vadd.f32 0.0, %v4225
      %v4227 = vpop.f32.mrb[0].mxu0
      %v4228 = vpop.f32.mrb[0].mxu0
      %v4229 = vadd.f32 0.0, %v4228
      %v4230 = vpop.f32.mrb[0].mxu0
      %4231 = vmatprep.mubr.bf16.mxu0 0
      %4232 = vmatmul.mubr.bf16.gmra.mrb[0].mxu0 %v4089
      %v4233 = vpop.f32.mrb[0].mxu0
      %v4234 = vadd.f32 0.0, %v4233
      %v4235 = vpop.f32.mrb[0].mxu0
      %v4236 = vpop.f32.mrb[0].mxu0
      %v4237 = vadd.f32 0.0, %v4236
      %v4238 = vpop.f32.mrb[0].mxu0
      %4239 = vmatprep.mubr.bf16.mxu0 0
      %4240 = vmatmul.mubr.bf16.gmra.mrb[0].mxu0 %v4092
      %v4241 = vpop.f32.mrb[0].mxu0
      %v4242 = vadd.f32 0.0, %v4241
      %v4243 = vpop.f32.mrb[0].mxu0
      %v4244 = vpop.f32.mrb[0].mxu0
      %v4245 = vadd.f32 0.0, %v4244
      %v4246 = vpop.f32.mrb[0].mxu0
      %4247 = vmatprep.mubr.bf16.mxu0 0
      %4248 = vmatmul.mubr.bf16.gmra.mrb[0].mxu0 %v4095
      %v4249 = vpop.f32.mrb[0].mxu0
      %v4250 = vadd.f32 0.0, %v4249
      %v4251 = vpop.f32.mrb[0].mxu0
      %v4252 = vpop.f32.mrb[0].mxu0
      %v4253 = vadd.f32 0.0, %v4252
      %v4254 = vpop.f32.mrb[0].mxu0
      %4255 = vmatprep.mubr.bf16.mxu0 0
      %4256 = vmatmul.mubr.bf16.gmra.mrb[0].mxu0 %v4098
      %v4257 = vpop.f32.mrb[0].mxu0
      %v4258 = vadd.f32 0.0, %v4257
      %v4259 = vpop.f32.mrb[0].mxu0
      %v4260 = vpop.f32.mrb[0].mxu0
      %v4261 = vadd.f32 0.0, %v4260
      %v4262 = vpop.f32.mrb[0].mxu0
      %4263 = vdwg.mxu0
      %v4264 = vadd.f32 %v3538, %v4138
      %v4265 = vadd.f32 %v3539, %v4141
      %v4266 = vadd.f32 %v3540, %v4146
      %v4267 = vadd.f32 %v3541, %v4149
      %v4268 = vadd.f32 %v3542, %v4154
      %v4269 = vadd.f32 %v3543, %v4157
      %v4270 = vadd.f32 %v3544, %v4162
      %v4271 = vadd.f32 %v3545, %v4165
      %v4272 = vadd.f32 %v3546, %v4170
      %v4273 = vadd.f32 %v3547, %v4173
      %v4274 = vadd.f32 %v3548, %v4178
      %v4275 = vadd.f32 %v3549, %v4181
      %v4276 = vadd.f32 %v3550, %v4186
      %v4277 = vadd.f32 %v3551, %v4189
      %v4278 = vadd.f32 %v3552, %v4194
      %v4279 = vadd.f32 %v3553, %v4197
      %v4280 = vadd.f32 %v3554, %v4202
      %v4281 = vadd.f32 %v3555, %v4205
      %v4282 = vadd.f32 %v3556, %v4210
      %v4283 = vadd.f32 %v3557, %v4213
      %v4284 = vadd.f32 %v3558, %v4218
      %v4285 = vadd.f32 %v3559, %v4221
      %v4286 = vadd.f32 %v3560, %v4226
      %v4287 = vadd.f32 %v3561, %v4229
      %v4288 = vadd.f32 %v3562, %v4234
      %v4289 = vadd.f32 %v3563, %v4237
      %v4290 = vadd.f32 %v3564, %v4242
      %v4291 = vadd.f32 %v3565, %v4245
      %v4292 = vadd.f32 %v3566, %v4250
      %v4293 = vadd.f32 %v3567, %v4253
      %v4294 = vadd.f32 %v3568, %v4258
      %v4295 = vadd.f32 %v3569, %v4261
      %v4296 = vld [vmem:[%s3211] sm:$0xe]
      %v4297 = vld [vmem:[%s3211 + $0xc] sm:$0xe]
      %v4298 = vld [vmem:[%s3211 + $0x18] sm:$0xe]
      %v4299 = vld [vmem:[%s3211 + $0x24] sm:$0xe]
      %v4300 = vld [vmem:[%s3211 + $0x30] sm:$0xe]
      %v4301 = vld [vmem:[%s3211 + $0x3c] sm:$0xe]
      %v4302 = vld [vmem:[%s3211 + $0x48] sm:$0xe]
      %v4303 = vld [vmem:[%s3211 + $0x54] sm:$0xe]
      %v4304 = vld [vmem:[%s3211 + $0x60] sm:$0xe]
      %v4305 = vld [vmem:[%s3211 + $0x6c] sm:$0xe]
      %v4306 = vld [vmem:[%s3211 + $0x78] sm:$0xe]
      %v4307 = vld [vmem:[%s3211 + $0x84] sm:$0xe]
      %v4308 = vld [vmem:[%s3211 + $0x90] sm:$0xe]
      %v4309 = vld [vmem:[%s3211 + $0x9c] sm:$0xe]
      %v4310 = vld [vmem:[%s3211 + $0xa8] sm:$0xe]
      %v4311 = vld [vmem:[%s3211 + $0xb4] sm:$0xe]
      %v4360 = vrot.slane %v4296, 5
      %v4361 = vrot.slane %v4360, 4
      %v4362 = vrot.slane %v3571, 5
      %v4363 = vsel %vm1243, %v4361, %v4362
      %v4364 = vrot.slane %v4362, 4
      %v4365 = vrot.slane %v3572, 5
      %v4366 = vsel %vm1243, %v4364, %v4365
      %v4367 = vrot.slane %v4297, 5
      %v4368 = vrot.slane %v4367, 4
      %v4369 = vrot.slane %v3574, 5
      %v4370 = vsel %vm1243, %v4368, %v4369
      %v4371 = vrot.slane %v4369, 4
      %v4372 = vrot.slane %v3575, 5
      %v4373 = vsel %vm1243, %v4371, %v4372
      %v4374 = vrot.slane %v4298, 5
      %v4375 = vrot.slane %v4374, 4
      %v4376 = vrot.slane %v3577, 5
      %v4377 = vsel %vm1243, %v4375, %v4376
      %v4378 = vrot.slane %v4376, 4
      %v4379 = vrot.slane %v3578, 5
      %v4380 = vsel %vm1243, %v4378, %v4379
      %v4381 = vrot.slane %v4299, 5
      %v4382 = vrot.slane %v4381, 4
      %v4383 = vrot.slane %v3580, 5
      %v4384 = vsel %vm1243, %v4382, %v4383
      %v4385 = vrot.slane %v4383, 4
      %v4386 = vrot.slane %v3581, 5
      %v4387 = vsel %vm1243, %v4385, %v4386
      %v4388 = vrot.slane %v4300, 5
      %v4389 = vrot.slane %v4388, 4
      %v4390 = vrot.slane %v3583, 5
      %v4391 = vsel %vm1243, %v4389, %v4390
      %v4392 = vrot.slane %v4390, 4
      %v4393 = vrot.slane %v3584, 5
      %v4394 = vsel %vm1243, %v4392, %v4393
      %v4395 = vrot.slane %v4301, 5
      %v4396 = vrot.slane %v4395, 4
      %v4397 = vrot.slane %v3586, 5
      %v4398 = vsel %vm1243, %v4396, %v4397
      %v4399 = vrot.slane %v4397, 4
      %v4400 = vrot.slane %v3587, 5
      %v4401 = vsel %vm1243, %v4399, %v4400
      %v4402 = vrot.slane %v4302, 5
      %v4403 = vrot.slane %v4402, 4
      %v4404 = vrot.slane %v3589, 5
      %v4405 = vsel %vm1243, %v4403, %v4404
      %v4406 = vrot.slane %v4404, 4
      %v4407 = vrot.slane %v3590, 5
      %v4408 = vsel %vm1243, %v4406, %v4407
      %v4409 = vrot.slane %v4303, 5
      %v4410 = vrot.slane %v4409, 4
      %v4411 = vrot.slane %v3592, 5
      %v4412 = vsel %vm1243, %v4410, %v4411
      %v4413 = vrot.slane %v4411, 4
      %v4414 = vrot.slane %v3593, 5
      %v4415 = vsel %vm1243, %v4413, %v4414
      %v4416 = vrot.slane %v4304, 5
      %v4417 = vrot.slane %v4416, 4
      %v4418 = vrot.slane %v3595, 5
      %v4419 = vsel %vm1243, %v4417, %v4418
      %v4420 = vrot.slane %v4418, 4
      %v4421 = vrot.slane %v3596, 5
      %v4422 = vsel %vm1243, %v4420, %v4421
      %v4423 = vrot.slane %v4305, 5
      %v4424 = vrot.slane %v4423, 4
      %v4425 = vrot.slane %v3598, 5
      %v4426 = vsel %vm1243, %v4424, %v4425
      %v4427 = vrot.slane %v4425, 4
      %v4428 = vrot.slane %v3599, 5
      %v4429 = vsel %vm1243, %v4427, %v4428
      %v4430 = vrot.slane %v4306, 5
      %v4431 = vrot.slane %v4430, 4
      %v4432 = vrot.slane %v3601, 5
      %v4433 = vsel %vm1243, %v4431, %v4432
      %v4434 = vrot.slane %v4432, 4
      %v4435 = vrot.slane %v3602, 5
      %v4436 = vsel %vm1243, %v4434, %v4435
      %v4437 = vrot.slane %v4307, 5
      %v4438 = vrot.slane %v4437, 4
      %v4439 = vrot.slane %v3604, 5
      %v4440 = vsel %vm1243, %v4438, %v4439
      %v4441 = vrot.slane %v4439, 4
      %v4442 = vrot.slane %v3605, 5
      %v4443 = vsel %vm1243, %v4441, %v4442
      %v4444 = vrot.slane %v4308, 5
      %v4445 = vrot.slane %v4444, 4
      %v4446 = vrot.slane %v3607, 5
      %v4447 = vsel %vm1243, %v4445, %v4446
      %v4448 = vrot.slane %v4446, 4
      %v4449 = vrot.slane %v3608, 5
      %v4450 = vsel %vm1243, %v4448, %v4449
      %v4451 = vrot.slane %v4309, 5
      %v4452 = vrot.slane %v4451, 4
      %v4453 = vrot.slane %v3610, 5
      %v4454 = vsel %vm1243, %v4452, %v4453
      %v4455 = vrot.slane %v4453, 4
      %v4456 = vrot.slane %v3611, 5
      %v4457 = vsel %vm1243, %v4455, %v4456
      %v4458 = vrot.slane %v4310, 5
      %v4459 = vrot.slane %v4458, 4
      %v4460 = vrot.slane %v3613, 5
      %v4461 = vsel %vm1243, %v4459, %v4460
      %v4462 = vrot.slane %v4460, 4
      %v4463 = vrot.slane %v3614, 5
      %v4464 = vsel %vm1243, %v4462, %v4463
      %v4465 = vrot.slane %v4311, 5
      %v4466 = vrot.slane %v4465, 4
      %v4467 = vrot.slane %v3616, 5
      %v4468 = vsel %vm1243, %v4466, %v4467
      %v4469 = vrot.slane %v4467, 4
      %v4470 = vrot.slane %v3617, 5
      %v4471 = vsel %vm1243, %v4469, %v4470
      %s4472 = scalar_lea.vmem %s1, 16
      %v4473 = vld [vmem:[%s4472] sm:$0x3]
      %v4474 = vunpack.c.l.b16 %v4363
      %v4475 = vunpack.c.l.b16 %v4366
      %v4476 = vunpack.c.l.b16 %v4370
      %v4477 = vunpack.c.l.b16 %v4373
      %v4478 = vunpack.c.l.b16 %v4377
      %v4479 = vunpack.c.l.b16 %v4380
      %v4480 = vunpack.c.l.b16 %v4384
      %v4481 = vunpack.c.l.b16 %v4387
      %v4482 = vunpack.c.l.b16 %v4391
      %v4483 = vunpack.c.l.b16 %v4394
      %v4484 = vunpack.c.l.b16 %v4398
      %v4485 = vunpack.c.l.b16 %v4401
      %v4486 = vunpack.c.l.b16 %v4405
      %v4487 = vunpack.c.l.b16 %v4408
      %v4488 = vunpack.c.l.b16 %v4412
      %v4489 = vunpack.c.l.b16 %v4415
      %v4490 = vunpack.c.l.b16 %v4419
      %v4491 = vunpack.c.l.b16 %v4422
      %v4492 = vunpack.c.l.b16 %v4426
      %v4493 = vunpack.c.l.b16 %v4429
      %v4494 = vunpack.c.l.b16 %v4433
      %v4495 = vunpack.c.l.b16 %v4436
      %v4496 = vunpack.c.l.b16 %v4440
      %v4497 = vunpack.c.l.b16 %v4443
      %v4498 = vunpack.c.l.b16 %v4447
      %v4499 = vunpack.c.l.b16 %v4450
      %v4500 = vunpack.c.l.b16 %v4454
      %v4501 = vunpack.c.l.b16 %v4457
      %v4502 = vunpack.c.l.b16 %v4461
      %v4503 = vunpack.c.l.b16 %v4464
      %v4504 = vunpack.c.l.b16 %v4468
      %v4505 = vunpack.c.l.b16 %v4471
      %v4506 = vpack.c.b16 %v4475, %v4474
      %v4507 = vpack.c.b16 %v4477, %v4476
      %v4508 = vpack.c.b16 %v4479, %v4478
      %v4509 = vpack.c.b16 %v4481, %v4480
      %v4510 = vpack.c.b16 %v4483, %v4482
      %v4511 = vpack.c.b16 %v4485, %v4484
      %v4512 = vpack.c.b16 %v4487, %v4486
      %v4513 = vpack.c.b16 %v4489, %v4488
      %v4514 = vpack.c.b16 %v4491, %v4490
      %v4515 = vpack.c.b16 %v4493, %v4492
      %v4516 = vpack.c.b16 %v4495, %v4494
      %v4517 = vpack.c.b16 %v4497, %v4496
      %v4518 = vpack.c.b16 %v4499, %v4498
      %v4519 = vpack.c.b16 %v4501, %v4500
      %v4520 = vpack.c.b16 %v4503, %v4502
      %v4521 = vpack.c.b16 %v4505, %v4504
      %v4523 = vsel %vm687, %v4506, 0
      %v4526 = vsel %vm687, %v4507, 0
      %v4529 = vsel %vm687, %v4508, 0
      %v4532 = vsel %vm687, %v4509, 0
      %v4535 = vsel %vm687, %v4510, 0
      %v4538 = vsel %vm687, %v4511, 0
      %v4541 = vsel %vm687, %v4512, 0
      %v4544 = vsel %vm687, %v4513, 0
      %v4547 = vsel %vm687, %v4514, 0
      %v4550 = vsel %vm687, %v4515, 0
      %v4553 = vsel %vm687, %v4516, 0
      %v4556 = vsel %vm687, %v4517, 0
      %v4559 = vsel %vm687, %v4518, 0
      %v4562 = vsel %vm687, %v4519, 0
      %v4565 = vsel %vm687, %v4520, 0
      %v4568 = vsel %vm687, %v4521, 0
      %v4571 = vsel %vm736, %v4473, 0
      %4573 = vmatprep.subr.bf16.mxu0 0
      %4574 = vmatpush1.bf16.msra.mxu0 %v4571
      %4575 = vmatprep.subr.bf16.mxu0 0
      %4576 = vmatpush1.bf16.msra.mxu0 0
      %4577 = vmatprep.subr.bf16.mxu0 0
      %4578 = vmatpush1.bf16.msra.mxu0 0
      %4579 = vmatprep.subr.bf16.mxu0 0
      %4580 = vmatpush1.bf16.msra.mxu0 0
      %4581 = vmatprep.subr.bf16.mxu0 0
      %4582 = vmatpush1.bf16.msra.mxu0 0
      %4583 = vmatprep.subr.bf16.mxu0 0
      %4584 = vmatpush1.bf16.msra.mxu0 0
      %4585 = vmatprep.subr.bf16.mxu0 0
      %4586 = vmatpush1.bf16.msra.mxu0 0
      %4587 = vmatprep.subr.bf16.mxu0 0
      %4588 = vmatpush1.bf16.msra.mxu0 0
      %4589 = vmatprep.subr.bf16.mxu0 0
      %4590 = vmatpush1.bf16.msra.mxu0 0
      %4591 = vmatprep.subr.bf16.mxu0 0
      %4592 = vmatpush1.bf16.msra.mxu0 0
      %4593 = vmatprep.subr.bf16.mxu0 0
      %4594 = vmatpush1.bf16.msra.mxu0 0
      %4595 = vmatprep.subr.bf16.mxu0 0
      %4596 = vmatpush1.bf16.msra.mxu0 0
      %4597 = vmatprep.subr.bf16.mxu0 0
      %4598 = vmatpush1.bf16.msra.mxu0 0
      %4599 = vmatprep.subr.bf16.mxu0 0
      %4600 = vmatpush1.bf16.msra.mxu0 0
      %4601 = vmatprep.subr.bf16.mxu0 0
      %4602 = vmatpush1.bf16.msra.mxu0 0
      %4603 = vmatprep.subr.bf16.mxu0 0
      %4604 = vmatpush1.bf16.msra.mxu0 0
      %4605 = vmatprep.mubr.bf16.mxu0 0
      %4606 = vmatmul.mubr.bf16.gmra.mrb[0].mxu0 %v4523
      %v4607 = vpop.f32.mrb[0].mxu0
      %v4608 = vadd.f32 0.0, %v4607
      %v4609 = vpop.f32.mrb[0].mxu0
      %v4610 = vpop.f32.mrb[0].mxu0
      %v4611 = vadd.f32 0.0, %v4610
      %v4612 = vpop.f32.mrb[0].mxu0
      %4613 = vmatprep.mubr.bf16.mxu0 0
      %4614 = vmatmul.mubr.bf16.gmra.mrb[0].mxu0 %v4526
      %v4615 = vpop.f32.mrb[0].mxu0
      %v4616 = vadd.f32 0.0, %v4615
      %v4617 = vpop.f32.mrb[0].mxu0
      %v4618 = vpop.f32.mrb[0].mxu0
      %v4619 = vadd.f32 0.0, %v4618
      %v4620 = vpop.f32.mrb[0].mxu0
      %4621 = vmatprep.mubr.bf16.mxu0 0
      %4622 = vmatmul.mubr.bf16.gmra.mrb[0].mxu0 %v4529
      %v4623 = vpop.f32.mrb[0].mxu0
      %v4624 = vadd.f32 0.0, %v4623
      %v4625 = vpop.f32.mrb[0].mxu0
      %v4626 = vpop.f32.mrb[0].mxu0
      %v4627 = vadd.f32 0.0, %v4626
      %v4628 = vpop.f32.mrb[0].mxu0
      %4629 = vmatprep.mubr.bf16.mxu0 0
      %4630 = vmatmul.mubr.bf16.gmra.mrb[0].mxu0 %v4532
      %v4631 = vpop.f32.mrb[0].mxu0
      %v4632 = vadd.f32 0.0, %v4631
      %v4633 = vpop.f32.mrb[0].mxu0
      %v4634 = vpop.f32.mrb[0].mxu0
      %v4635 = vadd.f32 0.0, %v4634
      %v4636 = vpop.f32.mrb[0].mxu0
      %4637 = vmatprep.mubr.bf16.mxu0 0
      %4638 = vmatmul.mubr.bf16.gmra.mrb[0].mxu0 %v4535
      %v4639 = vpop.f32.mrb[0].mxu0
      %v4640 = vadd.f32 0.0, %v4639
      %v4641 = vpop.f32.mrb[0].mxu0
      %v4642 = vpop.f32.mrb[0].mxu0
      %v4643 = vadd.f32 0.0, %v4642
      %v4644 = vpop.f32.mrb[0].mxu0
      %4645 = vmatprep.mubr.bf16.mxu0 0
      %4646 = vmatmul.mubr.bf16.gmra.mrb[0].mxu0 %v4538
      %v4647 = vpop.f32.mrb[0].mxu0
      %v4648 = vadd.f32 0.0, %v4647
      %v4649 = vpop.f32.mrb[0].mxu0
      %v4650 = vpop.f32.mrb[0].mxu0
      %v4651 = vadd.f32 0.0, %v4650
      %v4652 = vpop.f32.mrb[0].mxu0
      %4653 = vmatprep.mubr.bf16.mxu0 0
      %4654 = vmatmul.mubr.bf16.gmra.mrb[0].mxu0 %v4541
      %v4655 = vpop.f32.mrb[0].mxu0
      %v4656 = vadd.f32 0.0, %v4655
      %v4657 = vpop.f32.mrb[0].mxu0
      %v4658 = vpop.f32.mrb[0].mxu0
      %v4659 = vadd.f32 0.0, %v4658
      %v4660 = vpop.f32.mrb[0].mxu0
      %4661 = vmatprep.mubr.bf16.mxu0 0
      %4662 = vmatmul.mubr.bf16.gmra.mrb[0].mxu0 %v4544
      %v4663 = vpop.f32.mrb[0].mxu0
      %v4664 = vadd.f32 0.0, %v4663
      %v4665 = vpop.f32.mrb[0].mxu0
      %v4666 = vpop.f32.mrb[0].mxu0
      %v4667 = vadd.f32 0.0, %v4666
      %v4668 = vpop.f32.mrb[0].mxu0
      %4669 = vmatprep.mubr.bf16.mxu0 0
      %4670 = vmatmul.mubr.bf16.gmra.mrb[0].mxu0 %v4547
      %v4671 = vpop.f32.mrb[0].mxu0
      %v4672 = vadd.f32 0.0, %v4671
      %v4673 = vpop.f32.mrb[0].mxu0
      %v4674 = vpop.f32.mrb[0].mxu0
      %v4675 = vadd.f32 0.0, %v4674
      %v4676 = vpop.f32.mrb[0].mxu0
      %4677 = vmatprep.mubr.bf16.mxu0 0
      %4678 = vmatmul.mubr.bf16.gmra.mrb[0].mxu0 %v4550
      %v4679 = vpop.f32.mrb[0].mxu0
      %v4680 = vadd.f32 0.0, %v4679
      %v4681 = vpop.f32.mrb[0].mxu0
      %v4682 = vpop.f32.mrb[0].mxu0
      %v4683 = vadd.f32 0.0, %v4682
      %v4684 = vpop.f32.mrb[0].mxu0
      %4685 = vmatprep.mubr.bf16.mxu0 0
      %4686 = vmatmul.mubr.bf16.gmra.mrb[0].mxu0 %v4553
      %v4687 = vpop.f32.mrb[0].mxu0
      %v4688 = vadd.f32 0.0, %v4687
      %v4689 = vpop.f32.mrb[0].mxu0
      %v4690 = vpop.f32.mrb[0].mxu0
      %v4691 = vadd.f32 0.0, %v4690
      %v4692 = vpop.f32.mrb[0].mxu0
      %4693 = vmatprep.mubr.bf16.mxu0 0
      %4694 = vmatmul.mubr.bf16.gmra.mrb[0].mxu0 %v4556
      %v4695 = vpop.f32.mrb[0].mxu0
      %v4696 = vadd.f32 0.0, %v4695
      %v4697 = vpop.f32.mrb[0].mxu0
      %v4698 = vpop.f32.mrb[0].mxu0
      %v4699 = vadd.f32 0.0, %v4698
      %v4700 = vpop.f32.mrb[0].mxu0
      %4701 = vmatprep.mubr.bf16.mxu0 0
      %4702 = vmatmul.mubr.bf16.gmra.mrb[0].mxu0 %v4559
      %v4703 = vpop.f32.mrb[0].mxu0
      %v4704 = vadd.f32 0.0, %v4703
      %v4705 = vpop.f32.mrb[0].mxu0
      %v4706 = vpop.f32.mrb[0].mxu0
      %v4707 = vadd.f32 0.0, %v4706
      %v4708 = vpop.f32.mrb[0].mxu0
      %4709 = vmatprep.mubr.bf16.mxu0 0
      %4710 = vmatmul.mubr.bf16.gmra.mrb[0].mxu0 %v4562
      %v4711 = vpop.f32.mrb[0].mxu0
      %v4712 = vadd.f32 0.0, %v4711
      %v4713 = vpop.f32.mrb[0].mxu0
      %v4714 = vpop.f32.mrb[0].mxu0
      %v4715 = vadd.f32 0.0, %v4714
      %v4716 = vpop.f32.mrb[0].mxu0
      %4717 = vmatprep.mubr.bf16.mxu0 0
      %4718 = vmatmul.mubr.bf16.gmra.mrb[0].mxu0 %v4565
      %v4719 = vpop.f32.mrb[0].mxu0
      %v4720 = vadd.f32 0.0, %v4719
      %v4721 = vpop.f32.mrb[0].mxu0
      %v4722 = vpop.f32.mrb[0].mxu0
      %v4723 = vadd.f32 0.0, %v4722
      %v4724 = vpop.f32.mrb[0].mxu0
      %4725 = vmatprep.mubr.bf16.mxu0 0
      %4726 = vmatmul.mubr.bf16.gmra.mrb[0].mxu0 %v4568
      %v4727 = vpop.f32.mrb[0].mxu0
      %v4728 = vadd.f32 0.0, %v4727
      %v4729 = vpop.f32.mrb[0].mxu0
      %v4730 = vpop.f32.mrb[0].mxu0
      %v4731 = vadd.f32 0.0, %v4730
      %v4732 = vpop.f32.mrb[0].mxu0
      %4733 = vdwg.mxu0
      %v4734 = vadd.f32 %v4264, %v4608
      %v4735 = vadd.f32 %v4265, %v4611
      %v4736 = vadd.f32 %v4266, %v4616
      %v4737 = vadd.f32 %v4267, %v4619
      %v4738 = vadd.f32 %v4268, %v4624
      %v4739 = vadd.f32 %v4269, %v4627
      %v4740 = vadd.f32 %v4270, %v4632
      %v4741 = vadd.f32 %v4271, %v4635
      %v4742 = vadd.f32 %v4272, %v4640
      %v4743 = vadd.f32 %v4273, %v4643
      %v4744 = vadd.f32 %v4274, %v4648
      %v4745 = vadd.f32 %v4275, %v4651
      %v4746 = vadd.f32 %v4276, %v4656
      %v4747 = vadd.f32 %v4277, %v4659
      %v4748 = vadd.f32 %v4278, %v4664
      %v4749 = vadd.f32 %v4279, %v4667
      %v4750 = vadd.f32 %v4280, %v4672
      %v4751 = vadd.f32 %v4281, %v4675
      %v4752 = vadd.f32 %v4282, %v4680
      %v4753 = vadd.f32 %v4283, %v4683
      %v4754 = vadd.f32 %v4284, %v4688
      %v4755 = vadd.f32 %v4285, %v4691
      %v4756 = vadd.f32 %v4286, %v4696
      %v4757 = vadd.f32 %v4287, %v4699
      %v4758 = vadd.f32 %v4288, %v4704
      %v4759 = vadd.f32 %v4289, %v4707
      %v4760 = vadd.f32 %v4290, %v4712
      %v4761 = vadd.f32 %v4291, %v4715
      %v4762 = vadd.f32 %v4292, %v4720
      %v4763 = vadd.f32 %v4293, %v4723
      %v4764 = vadd.f32 %v4294, %v4728
      %v4765 = vadd.f32 %v4295, %v4731
      %v4766 = vld [vmem:[%s2] sm:$0x1]
      %v4768 = vlaneseq
      %v4769 = vshrl.u32 %v4768, 7
      %v4770 = vsub.s32 0, %v4769
      %v4771 = vrot.slane %v4766, %v4770
      %v4773 = vadd.f32 %v4734, %v4771
      %v4774 = vadd.f32 %v4735, %v4771
      %v4775 = vadd.f32 %v4736, %v4771
      %v4776 = vadd.f32 %v4737, %v4771
      %v4777 = vadd.f32 %v4738, %v4771
      %v4778 = vadd.f32 %v4739, %v4771
      %v4779 = vadd.f32 %v4740, %v4771
      %v4780 = vadd.f32 %v4741, %v4771
      %v4781 = vadd.f32 %v4742, %v4771
      %v4782 = vadd.f32 %v4743, %v4771
      %v4783 = vadd.f32 %v4744, %v4771
      %v4784 = vadd.f32 %v4745, %v4771
      %v4785 = vadd.f32 %v4746, %v4771
      %v4786 = vadd.f32 %v4747, %v4771
      %v4787 = vadd.f32 %v4748, %v4771
      %v4788 = vadd.f32 %v4749, %v4771
      %v4789 = vadd.f32 %v4750, %v4771
      %v4790 = vadd.f32 %v4751, %v4771
      %v4791 = vadd.f32 %v4752, %v4771
      %v4792 = vadd.f32 %v4753, %v4771
      %v4793 = vadd.f32 %v4754, %v4771
      %v4794 = vadd.f32 %v4755, %v4771
      %v4795 = vadd.f32 %v4756, %v4771
      %v4796 = vadd.f32 %v4757, %v4771
      %v4797 = vadd.f32 %v4758, %v4771
      %v4798 = vadd.f32 %v4759, %v4771
      %v4799 = vadd.f32 %v4760, %v4771
      %v4800 = vadd.f32 %v4761, %v4771
      %v4801 = vadd.f32 %v4762, %v4771
      %v4802 = vadd.f32 %v4763, %v4771
      %v4803 = vadd.f32 %v4764, %v4771
      %v4804 = vadd.f32 %v4765, %v4771
      %v4805 = vxor.u32 %v4773, 2147483648
      %v4806 = vxor.u32 %v4774, 2147483648
      %v4807 = vxor.u32 %v4775, 2147483648
      %v4808 = vxor.u32 %v4776, 2147483648
      %v4809 = vxor.u32 %v4777, 2147483648
      %v4810 = vxor.u32 %v4778, 2147483648
      %v4811 = vxor.u32 %v4779, 2147483648
      %v4812 = vxor.u32 %v4780, 2147483648
      %v4813 = vxor.u32 %v4781, 2147483648
      %v4814 = vxor.u32 %v4782, 2147483648
      %v4815 = vxor.u32 %v4783, 2147483648
      %v4816 = vxor.u32 %v4784, 2147483648
      %v4817 = vxor.u32 %v4785, 2147483648
      %v4818 = vxor.u32 %v4786, 2147483648
      %v4819 = vxor.u32 %v4787, 2147483648
      %v4820 = vxor.u32 %v4788, 2147483648
      %v4821 = vxor.u32 %v4789, 2147483648
      %v4822 = vxor.u32 %v4790, 2147483648
      %v4823 = vxor.u32 %v4791, 2147483648
      %v4824 = vxor.u32 %v4792, 2147483648
      %v4825 = vxor.u32 %v4793, 2147483648
      %v4826 = vxor.u32 %v4794, 2147483648
      %v4827 = vxor.u32 %v4795, 2147483648
      %v4828 = vxor.u32 %v4796, 2147483648
      %v4829 = vxor.u32 %v4797, 2147483648
      %v4830 = vxor.u32 %v4798, 2147483648
      %v4831 = vxor.u32 %v4799, 2147483648
      %v4832 = vxor.u32 %v4800, 2147483648
      %v4833 = vxor.u32 %v4801, 2147483648
      %v4834 = vxor.u32 %v4802, 2147483648
      %v4835 = vxor.u32 %v4803, 2147483648
      %v4836 = vxor.u32 %v4804, 2147483648
      %v4837 = vmul.f32 %v4805, 1.442695
      %v4838 = vpow.pop %v4837
      %v4839 = vmul.f32 %v4806, 1.442695
      %v4840 = vpow.pop %v4839
      %v4841 = vmul.f32 %v4807, 1.442695
      %v4842 = vpow.pop %v4841
      %v4843 = vmul.f32 %v4808, 1.442695
      %v4844 = vpow.pop %v4843
      %v4845 = vmul.f32 %v4809, 1.442695
      %v4846 = vpow.pop %v4845
      %v4847 = vmul.f32 %v4810, 1.442695
      %v4848 = vpow.pop %v4847
      %v4849 = vmul.f32 %v4811, 1.442695
      %v4850 = vpow.pop %v4849
      %v4851 = vmul.f32 %v4812, 1.442695
      %v4852 = vpow.pop %v4851
      %v4853 = vmul.f32 %v4813, 1.442695
      %v4854 = vpow.pop %v4853
      %v4855 = vmul.f32 %v4814, 1.442695
      %v4856 = vpow.pop %v4855
      %v4857 = vmul.f32 %v4815, 1.442695
      %v4858 = vpow.pop %v4857
      %v4859 = vmul.f32 %v4816, 1.442695
      %v4860 = vpow.pop %v4859
      %v4861 = vmul.f32 %v4817, 1.442695
      %v4862 = vpow.pop %v4861
      %v4863 = vmul.f32 %v4818, 1.442695
      %v4864 = vpow.pop %v4863
      %v4865 = vmul.f32 %v4819, 1.442695
      %v4866 = vpow.pop %v4865
      %v4867 = vmul.f32 %v4820, 1.442695
      %v4868 = vpow.pop %v4867
      %v4869 = vmul.f32 %v4821, 1.442695
      %v4870 = vpow.pop %v4869
      %v4871 = vmul.f32 %v4822, 1.442695
      %v4872 = vpow.pop %v4871
      %v4873 = vmul.f32 %v4823, 1.442695
      %v4874 = vpow.pop %v4873
      %v4875 = vmul.f32 %v4824, 1.442695
      %v4876 = vpow.pop %v4875
      %v4877 = vmul.f32 %v4825, 1.442695
      %v4878 = vpow.pop %v4877
      %v4879 = vmul.f32 %v4826, 1.442695
      %v4880 = vpow.pop %v4879
      %v4881 = vmul.f32 %v4827, 1.442695
      %v4882 = vpow.pop %v4881
      %v4883 = vmul.f32 %v4828, 1.442695
      %v4884 = vpow.pop %v4883
      %v4885 = vmul.f32 %v4829, 1.442695
      %v4886 = vpow.pop %v4885
      %v4887 = vmul.f32 %v4830, 1.442695
      %v4888 = vpow.pop %v4887
      %v4889 = vmul.f32 %v4831, 1.442695
      %v4890 = vpow.pop %v4889
      %v4891 = vmul.f32 %v4832, 1.442695
      %v4892 = vpow.pop %v4891
      %v4893 = vmul.f32 %v4833, 1.442695
      %v4894 = vpow.pop %v4893
      %v4895 = vmul.f32 %v4834, 1.442695
      %v4896 = vpow.pop %v4895
      %v4897 = vmul.f32 %v4835, 1.442695
      %v4898 = vpow.pop %v4897
      %v4899 = vmul.f32 %v4836, 1.442695
      %v4900 = vpow.pop %v4899
      %v4901 = vadd.f32 %v4838, 1.0
      %v4902 = vadd.f32 %v4840, 1.0
      %v4903 = vadd.f32 %v4842, 1.0
      %v4904 = vadd.f32 %v4844, 1.0
      %v4905 = vadd.f32 %v4846, 1.0
      %v4906 = vadd.f32 %v4848, 1.0
      %v4907 = vadd.f32 %v4850, 1.0
      %v4908 = vadd.f32 %v4852, 1.0
      %v4909 = vadd.f32 %v4854, 1.0
      %v4910 = vadd.f32 %v4856, 1.0
      %v4911 = vadd.f32 %v4858, 1.0
      %v4912 = vadd.f32 %v4860, 1.0
      %v4913 = vadd.f32 %v4862, 1.0
      %v4914 = vadd.f32 %v4864, 1.0
      %v4915 = vadd.f32 %v4866, 1.0
      %v4916 = vadd.f32 %v4868, 1.0
      %v4917 = vadd.f32 %v4870, 1.0
      %v4918 = vadd.f32 %v4872, 1.0
      %v4919 = vadd.f32 %v4874, 1.0
      %v4920 = vadd.f32 %v4876, 1.0
      %v4921 = vadd.f32 %v4878, 1.0
      %v4922 = vadd.f32 %v4880, 1.0
      %v4923 = vadd.f32 %v4882, 1.0
      %v4924 = vadd.f32 %v4884, 1.0
      %v4925 = vadd.f32 %v4886, 1.0
      %v4926 = vadd.f32 %v4888, 1.0
      %v4927 = vadd.f32 %v4890, 1.0
      %v4928 = vadd.f32 %v4892, 1.0
      %v4929 = vadd.f32 %v4894, 1.0
      %v4930 = vadd.f32 %v4896, 1.0
      %v4931 = vadd.f32 %v4898, 1.0
      %v4932 = vadd.f32 %v4900, 1.0
      %v4933 = vrcp.pop %v4901
      %v4934 = vmul.f32 1.0, %v4933
      %v4935 = vrcp.pop %v4902
      %v4936 = vmul.f32 1.0, %v4935
      %v4937 = vrcp.pop %v4903
      %v4938 = vmul.f32 1.0, %v4937
      %v4939 = vrcp.pop %v4904
      %v4940 = vmul.f32 1.0, %v4939
      %v4941 = vrcp.pop %v4905
      %v4942 = vmul.f32 1.0, %v4941
      %v4943 = vrcp.pop %v4906
      %v4944 = vmul.f32 1.0, %v4943
      %v4945 = vrcp.pop %v4907
      %v4946 = vmul.f32 1.0, %v4945
      %v4947 = vrcp.pop %v4908
      %v4948 = vmul.f32 1.0, %v4947
      %v4949 = vrcp.pop %v4909
      %v4950 = vmul.f32 1.0, %v4949
      %v4951 = vrcp.pop %v4910
      %v4952 = vmul.f32 1.0, %v4951
      %v4953 = vrcp.pop %v4911
      %v4954 = vmul.f32 1.0, %v4953
      %v4955 = vrcp.pop %v4912
      %v4956 = vmul.f32 1.0, %v4955
      %v4957 = vrcp.pop %v4913
      %v4958 = vmul.f32 1.0, %v4957
      %v4959 = vrcp.pop %v4914
      %v4960 = vmul.f32 1.0, %v4959
      %v4961 = vrcp.pop %v4915
      %v4962 = vmul.f32 1.0, %v4961
      %v4963 = vrcp.pop %v4916
      %v4964 = vmul.f32 1.0, %v4963
      %v4965 = vrcp.pop %v4917
      %v4966 = vmul.f32 1.0, %v4965
      %v4967 = vrcp.pop %v4918
      %v4968 = vmul.f32 1.0, %v4967
      %v4969 = vrcp.pop %v4919
      %v4970 = vmul.f32 1.0, %v4969
      %v4971 = vrcp.pop %v4920
      %v4972 = vmul.f32 1.0, %v4971
      %v4973 = vrcp.pop %v4921
      %v4974 = vmul.f32 1.0, %v4973
      %v4975 = vrcp.pop %v4922
      %v4976 = vmul.f32 1.0, %v4975
      %v4977 = vrcp.pop %v4923
      %v4978 = vmul.f32 1.0, %v4977
      %v4979 = vrcp.pop %v4924
      %v4980 = vmul.f32 1.0, %v4979
      %v4981 = vrcp.pop %v4925
      %v4982 = vmul.f32 1.0, %v4981
      %v4983 = vrcp.pop %v4926
      %v4984 = vmul.f32 1.0, %v4983
      %v4985 = vrcp.pop %v4927
      %v4986 = vmul.f32 1.0, %v4985
      %v4987 = vrcp.pop %v4928
      %v4988 = vmul.f32 1.0, %v4987
      %v4989 = vrcp.pop %v4929
      %v4990 = vmul.f32 1.0, %v4989
      %v4991 = vrcp.pop %v4930
      %v4992 = vmul.f32 1.0, %v4991
      %v4993 = vrcp.pop %v4931
      %v4994 = vmul.f32 1.0, %v4993
      %v4995 = vrcp.pop %v4932
      %v4996 = vmul.f32 1.0, %v4995
      %v4997 = vmul.f32 %v4773, %v4934
      %v4998 = vmul.f32 %v4774, %v4936
      %v4999 = vmul.f32 %v4775, %v4938
      %v5000 = vmul.f32 %v4776, %v4940
      %v5001 = vmul.f32 %v4777, %v4942
      %v5002 = vmul.f32 %v4778, %v4944
      %v5003 = vmul.f32 %v4779, %v4946
      %v5004 = vmul.f32 %v4780, %v4948
      %v5005 = vmul.f32 %v4781, %v4950
      %v5006 = vmul.f32 %v4782, %v4952
      %v5007 = vmul.f32 %v4783, %v4954
      %v5008 = vmul.f32 %v4784, %v4956
      %v5009 = vmul.f32 %v4785, %v4958
      %v5010 = vmul.f32 %v4786, %v4960
      %v5011 = vmul.f32 %v4787, %v4962
      %v5012 = vmul.f32 %v4788, %v4964
      %v5013 = vmul.f32 %v4789, %v4966
      %v5014 = vmul.f32 %v4790, %v4968
      %v5015 = vmul.f32 %v4791, %v4970
      %v5016 = vmul.f32 %v4792, %v4972
      %v5017 = vmul.f32 %v4793, %v4974
      %v5018 = vmul.f32 %v4794, %v4976
      %v5019 = vmul.f32 %v4795, %v4978
      %v5020 = vmul.f32 %v4796, %v4980
      %v5021 = vmul.f32 %v4797, %v4982
      %v5022 = vmul.f32 %v4798, %v4984
      %v5023 = vmul.f32 %v4799, %v4986
      %v5024 = vmul.f32 %v4800, %v4988
      %v5025 = vmul.f32 %v4801, %v4990
      %v5026 = vmul.f32 %v4802, %v4992
      %v5027 = vmul.f32 %v4803, %v4994
      %v5028 = vmul.f32 %v4804, %v4996
      %5029 = vst [vmem:[%s194] sm:$0xff] %v4997
      %5030 = vst [vmem:[%s194 + $0x8] sm:$0xff] %v4998
      %5031 = vst [vmem:[%s194 + $0x10] sm:$0xff] %v4999
      %5032 = vst [vmem:[%s194 + $0x18] sm:$0xff] %v5000
      %5033 = vst [vmem:[%s194 + $0x20] sm:$0xff] %v5001
      %5034 = vst [vmem:[%s194 + $0x28] sm:$0xff] %v5002
      %5035 = vst [vmem:[%s194 + $0x30] sm:$0xff] %v5003
      %5036 = vst [vmem:[%s194 + $0x38] sm:$0xff] %v5004
      %5037 = vst [vmem:[%s194 + $0x40] sm:$0xff] %v5005
      %5038 = vst [vmem:[%s194 + $0x48] sm:$0xff] %v5006
      %5039 = vst [vmem:[%s194 + $0x50] sm:$0xff] %v5007
      %5040 = vst [vmem:[%s194 + $0x58] sm:$0xff] %v5008
      %5041 = vst [vmem:[%s194 + $0x60] sm:$0xff] %v5009
      %5042 = vst [vmem:[%s194 + $0x68] sm:$0xff] %v5010
      %5043 = vst [vmem:[%s194 + $0x70] sm:$0xff] %v5011
      %5044 = vst [vmem:[%s194 + $0x78] sm:$0xff] %v5012
      %5045 = vst [vmem:[%s194 + $0x80] sm:$0xff] %v5013
      %5046 = vst [vmem:[%s194 + $0x88] sm:$0xff] %v5014
      %5047 = vst [vmem:[%s194 + $0x90] sm:$0xff] %v5015
      %5048 = vst [vmem:[%s194 + $0x98] sm:$0xff] %v5016
      %5049 = vst [vmem:[%s194 + $0xa0] sm:$0xff] %v5017
      %5050 = vst [vmem:[%s194 + $0xa8] sm:$0xff] %v5018
      %5051 = vst [vmem:[%s194 + $0xb0] sm:$0xff] %v5019
      %5052 = vst [vmem:[%s194 + $0xb8] sm:$0xff] %v5020
      %5053 = vst [vmem:[%s194 + $0xc0] sm:$0xff] %v5021
      %5054 = vst [vmem:[%s194 + $0xc8] sm:$0xff] %v5022
      %5055 = vst [vmem:[%s194 + $0xd0] sm:$0xff] %v5023
      %5056 = vst [vmem:[%s194 + $0xd8] sm:$0xff] %v5024
      %5057 = vst [vmem:[%s194 + $0xe0] sm:$0xff] %v5025
      %5058 = vst [vmem:[%s194 + $0xe8] sm:$0xff] %v5026
      %5059 = vst [vmem:[%s194 + $0xf0] sm:$0xff] %v5027
      %5060 = vst [vmem:[%s194 + $0xf8] sm:$0xff] %v5028
      %s5061 = smul.u32 16, %s19
      %p5062 = scmp.lt.s32.totalorder %s18, 1
      %s5063 = scalar_select %p5062, %s18, 1
      %p5064 = scmp.lt.s32.totalorder %s5061, 15
      %s5065 = scalar_select %p5064, %s5061, 15
      %s5066 = smul.addr %s5065, 2
      %s5067 = smul.addr %s5063, 32
      %s5068 = sadd.s32 %s5066, %s5067
      %s5069 = smul.addr %s5068, 8
      %s5070 = scalar_lea.vmem %s3, %s5069
      // Predicated region
      $region33: #{base_conv_forward.1} parent=31 // pred_check
        %p5071 = pneg %p114
      $region34: #{base_conv_forward.1} parent=31 // pred_check_branch
        %5073 = sbr.rel (%p5071) target = $region36
      $region35: #{base_conv_forward.1} parent=31 // pred_region
        %s5074 = smul.u32 16, %s19
      $region36: #{base_conv_forward.1} parent=31 // pred_fallthru
        _
    $region32: #{base_conv_forward.1} parent=5 // pred_fallthru
      _
    %p5075 = scmp.le.s32.totalorder 2, %s9
    // Predicated region
    $region37: #{base_conv_forward.1} parent=5 // pred_check
      %p5076 = pneg %p5075
    $region38: #{base_conv_forward.1} parent=5 // pred_check_branch
      %5078 = sbr.rel (%p5076) target = $region40
    $region39: #{base_conv_forward.1} parent=5 // pred_region
      %s5079 = ssub.s32 %s9, 2
      // Predicated region
      $region41: #{base_conv_forward.1} parent=39 // pred_check
        %p5080 = pneg %p120
      $region42: #{base_conv_forward.1} parent=39 // pred_check_branch
        %5082 = sbr.rel (%p5080) target = $region44
      $region43: #{base_conv_forward.1} parent=39 // pred_region
        %s5083 = smul.u32 16, %s21
        %p5084 = scmp.lt.s32.totalorder %s20, 1
        %s5085 = scalar_select %p5084, %s20, 1
        %p5086 = scmp.lt.s32.totalorder %s5083, 15
        %s5087 = scalar_select %p5086, %s5083, 15
        %s5088 = smul.addr %s5087, 2
        %s5089 = smul.addr %s5085, 32
        %s5090 = sadd.s32 %s5088, %s5089
        %s5091 = smul.addr %s5090, 8
        %s5092 = scalar_lea.vmem %s3, %s5091
      $region44: #{base_conv_forward.1} parent=39 // pred_fallthru
        _
    $region40: #{base_conv_forward.1} parent=5 // pred_fallthru
      _
  $region6: #{base_conv_forward.1} parent=0 // loop_footer
    %s13 = sadd.s32 1, %s9
  $region7: #{base_conv_forward.1} parent=0 // loop_footer_branch
    %8 = sbr.rel target = $region3
  $region8: #{base_conv_forward.1} parent=0 // loop_exit
    _

</llo_original>
